<compile_context>
chip_gen: v7x
topology: tpu7x:2x2x1
jax: 0.10.0
libtpu: 0.0.40
codegen_flags: <defaults>
</compile_context>

<pallas_src>
import math
import functools

import jax
import jax.numpy as jnp
from jax.experimental import pallas as pl
from jax.experimental.pallas import tpu as pltpu


# --------------------------------------------------------------------------------------
# Pallas kernel: in-kernel sinusoidal time embedding + (implicit concat) in-layer
# (+ folded emb layer) + tanh + out-layer.  One grid step = one (TB, :) batch row-tile.
# --------------------------------------------------------------------------------------
def dnn_kernel(
    t_ref,       # (TB, 1)     f32   timesteps
    noise_ref,   # (TB, D)     f32
    con_ref,     # (TB, D)     f32
    w1n_ref,     # (D, H)      bf16  -- W_in slice applied to noise_emb
    w1c_ref,     # (D, H)      bf16  -- W_in slice applied to con_emb
    wefc_ref,    # (E//2, H)   f32   -- (W_emb @ W_in[time slice])[:half]   (cos rows)
    wefs_ref,    # (E//2, H)   f32   -- (W_emb @ W_in[time slice])[half:2h] (sin rows)
    b1_ref,      # (1, H)      f32   -- b_in + b_emb @ W_in[time slice]
    w2_ref,      # (H, Dout)   bf16
    b2_ref,      # (1, Dout)   f32
    out_ref,     # (TB, Dout)  bf16
):
    half = wefc_ref.shape[0]
    cdt = w1n_ref.dtype

    # --- sinusoidal timestep embedding, computed on the EUP (exp / sin / cos) ---------
    # freqs = exp(-log(10000) * arange(half) / half)
    k = jax.lax.broadcasted_iota(jnp.int32, (1, half), 1).astype(jnp.float32)
    freqs = jnp.exp((-math.log(10000.0) / half) * k)               # (1, half)
    args = t_ref[...] * freqs                                      # (TB, half)
    cos_a = jnp.cos(args)
    sin_a = jnp.sin(args)

    # --- h = cat([noise, emb_layer(temb), con]) @ W_in + b_in ------------------------
    # Concat fused away; activation-free emb_layer folded into wefc/wefs/b1.
    # noise/con arrive in f32 and are cast to bf16 here (VPU slot, no extra HBM pass).
    h = (
        jnp.dot(noise_ref[...].astype(cdt), w1n_ref[...], preferred_element_type=jnp.float32)
        + jnp.dot(con_ref[...].astype(cdt), w1c_ref[...], preferred_element_type=jnp.float32)
        + jnp.dot(cos_a, wefc_ref[...], preferred_element_type=jnp.float32)
        + jnp.dot(sin_a, wefs_ref[...], preferred_element_type=jnp.float32)
        + b1_ref[...]
    )
    h = jnp.tanh(h)  # act == 'tanh'; keep elementwise math in f32 (v5e has no bf16 VPU/EUP).

    # --- final out_layer: no activation on the last layer ----------------------------
    out_ref[...] = (
        jnp.dot(h.astype(w2_ref.dtype), w2_ref[...], preferred_element_type=jnp.float32)
        + b2_ref[...]
    ).astype(out_ref.dtype)


# --------------------------------------------------------------------------------------
# One-time parameter preparation: split W_in, fold the emb layer (kept in f32), cast the
# large weights to bf16.
# --------------------------------------------------------------------------------------
def prepare_params(params, noise_dim, emb_size, compute_dtype=jnp.bfloat16):
    D, E = noise_dim, emb_size
    half = E // 2
    w1 = params["w1"]                      # (2D + E, H), f32
    w1n = w1[:D]                           # noise_emb part
    w1e = w1[D:D + E]                      # time-embedding part
    w1c = w1[D + E:]                       # con_emb part
    # emb_layer has no activation, so fold it:
    #   (temb @ W_emb + b_emb) @ w1e == temb @ (W_emb @ w1e) + (b_emb @ w1e)
    w_ef = params["w_emb"] @ w1e                    # (E, H), f32 (tiny -> keep full precision)
    b1_f = params["b1"] + params["b_emb"] @ w1e     # (1, H)
    return {
        "w1n": w1n.astype(compute_dtype),
        "w1c": w1c.astype(compute_dtype),
        "w_ef_cos": w_ef[:half],                    # rows hit by cos(args)
        "w_ef_sin": w_ef[half:2 * half],            # rows hit by sin(args)
        "b1": b1_f.astype(jnp.float32),
        "w2": params["w2"].astype(compute_dtype),
        "b2": params["b2"].astype(jnp.float32),
    }


def _pick_tiling(B, block_b):
    """Choose batch tile TB and padded batch B_pad (padding only as a last resort)."""
    cap = max(8, min(block_b, B))
    # Exactly two equal tiles when they fit: the "parallel" grid axis then feeds both
    # v7x TensorCores; on v5e/v6e (1 TC) this costs only one extra ~0.35us grid step.
    if B % 16 == 0 and B // 2 <= cap:
        return B // 2, B
    # Single tile covering the whole batch (block == full dim, so no 8-row rule).
    if B <= block_b:
        return B, B
    # Large batch: biggest multiple-of-8 tile <= block_b that divides B (no padding).
    for tb in range(cap - cap % 8, 7, -8):
        if B % tb == 0:
            return tb, B
    # Fallback (e.g. prime B > block_b): pad.  Rare; costs extra HBM passes.
    tb = block_b - block_b % 8
    return tb, ((B + tb - 1) // tb) * tb


# --------------------------------------------------------------------------------------
# Wrapper: batch-tiled pallas_call with VMEM-resident weights.  Intended to be jit-ted.
# --------------------------------------------------------------------------------------
def dnn_forward(timesteps, noise_emb, con_emb, prep, *, block_b=2048,
                out_dtype=jnp.bfloat16):
    B, D = noise_emb.shape
    H = prep["b1"].shape[-1]
    Dout = prep["b2"].shape[-1]
    half = prep["w_ef_cos"].shape[0]
    E = 2 * half

    t2d = timesteps.astype(jnp.float32).reshape(B, 1)

    TB, B_pad = _pick_tiling(B, block_b)
    if B_pad != B:  # last-resort padding path only
        pad = ((0, B_pad - B), (0, 0))
        t2d = jnp.pad(t2d, pad)
        noise_emb = jnp.pad(noise_emb, pad)
        con_emb = jnp.pad(con_emb, pad)

    grid = (B_pad // TB,)

    def act_spec(width):
        return pl.BlockSpec((TB, width), lambda i: (i, 0))

    def resident_spec(shape):
        # Constant index map -> block DMA'd once, kept VMEM-resident across grid steps.
        return pl.BlockSpec(shape, lambda i: (0, 0))

    wdt = jnp.dtype(prep["w1n"].dtype).itemsize
    odt = jnp.dtype(out_dtype).itemsize
    flops = 2 * B_pad * ((2 * D + E) * H + H * Dout)
    bytes_accessed = (
        B_pad * (2 * D + 1) * 4                  # f32 activation + timestep reads
        + B_pad * Dout * odt                     # output writes
        + (2 * D * H + H * Dout) * wdt           # bf16 weights (once)
        + (E * H + H + Dout) * 4                 # folded time weights + biases (once)
    )

    out = pl.pallas_call(
        dnn_kernel,
        out_shape=jax.ShapeDtypeStruct((B_pad, Dout), out_dtype),
        grid=grid,
        in_specs=[
            act_spec(1),                  # timesteps tile
            act_spec(D),                  # noise_emb tile (f32)
            act_spec(D),                  # con_emb tile (f32)
            resident_spec((D, H)),        # W_in (noise slice)
            resident_spec((D, H)),        # W_in (con slice)
            resident_spec((half, H)),     # folded time weight, cos rows
            resident_spec((half, H)),     # folded time weight, sin rows
            resident_spec((1, H)),        # fused b_in
            resident_spec((H, Dout)),     # W_out
            resident_spec((1, Dout)),     # b_out
        ],
        out_specs=act_spec(Dout),
        compiler_params=pltpu.CompilerParams(
            dimension_semantics=("parallel",),   # batch tiles shard across TCs (v7x megacore)
        ),
        cost_estimate=pl.CostEstimate(
            flops=flops,
            transcendentals=B_pad * (H + E),     # tanh + sin/cos
            bytes_accessed=bytes_accessed,
        ),
    )(
        t2d, noise_emb, con_emb,
        prep["w1n"], prep["w1c"], prep["w_ef_cos"], prep["w_ef_sin"],
        prep["b1"], prep["w2"], prep["b2"],
    )

    return out[:B] if B_pad != B else out


# --------------------------------------------------------------------------------------
# Deterministic parameter init (matches the module's init_weights statistics).
# --------------------------------------------------------------------------------------
def init_params(key, in_dims, out_dims, emb_size):
    # in_dims = [D, H], out_dims = [H, D]  (out_dims[0] == in_dims[-1] asserted in module)
    D, H = in_dims
    Dout = out_dims[-1]
    d_in1 = 2 * D + emb_size  # concat width

    def linear(key, fan_in, fan_out):
        kw, kb = jax.random.split(key)
        std = math.sqrt(2.0 / (fan_in + fan_out))
        w = std * jax.random.normal(kw, (fan_in, fan_out), dtype=jnp.float32)
        b = 0.001 * jax.random.normal(kb, (1, fan_out), dtype=jnp.float32)
        return w, b

    k_emb, k1, k2 = jax.random.split(key, 3)
    w_emb, b_emb = linear(k_emb, emb_size, emb_size)
    w1, b1 = linear(k1, d_in1, H)
    w2, b2 = linear(k2, H, Dout)
    return {"w_emb": w_emb, "b_emb": b_emb, "w1": w1, "b1": b1, "w2": w2, "b2": b2}


# --------------------------------------------------------------------------------------
# Pure-JAX f32 reference (unfused, matches the PyTorch forward).
# --------------------------------------------------------------------------------------
def timestep_embedding_ref(timesteps, dim, max_period=10000):
    half = dim // 2
    freqs = jnp.exp(
        -math.log(max_period) * jnp.arange(0, half, dtype=jnp.float32) / half
    )
    args = timesteps[:, None].astype(jnp.float32) * freqs[None]
    embedding = jnp.concatenate([jnp.cos(args), jnp.sin(args)], axis=-1)
    if dim % 2:
        embedding = jnp.concatenate(
            [embedding, jnp.zeros_like(embedding[:, :1])], axis=-1
        )
    return embedding


def dnn_reference(noise_emb, con_emb, timesteps, params, emb_size):
    time_emb = timestep_embedding_ref(timesteps, emb_size)
    emb = time_emb @ params["w_emb"] + params["b_emb"]
    all_emb = jnp.concatenate([noise_emb, emb, con_emb], axis=-1)
    all_emb = jnp.tanh(all_emb @ params["w1"] + params["b1"])
    return all_emb @ params["w2"] + params["b2"]


if __name__ == "__main__":
    # Shapes consistent with the module's forward:
    #   noise_emb, con_emb: (B, D); timesteps: (B,); hidden H; emb_size E.
    # B=256 exercises the two-equal-tile path (TB=128, 2 "parallel" grid steps).
    B, D, H, E = 256, 128, 64, 16
    in_dims = [D, H]
    out_dims = [H, D]

    key = jax.random.PRNGKey(0)
    k_noise, k_con, k_t, k_params = jax.random.split(key, 4)

    noise_emb = jax.random.normal(k_noise, (B, D), dtype=jnp.float32)
    con_emb = jax.random.normal(k_con, (B, D), dtype=jnp.float32)
    timesteps = jax.random.randint(k_t, (B,), 0, 1000).astype(jnp.float32)

    params = init_params(k_params, in_dims, out_dims, E)
    prep = prepare_params(params, D, E)           # one-time split/fold/cast

    fwd = jax.jit(dnn_forward, static_argnames=("block_b", "out_dtype"))
    out = fwd(timesteps, noise_emb, con_emb, prep)
    out = jax.block_until_ready(out)

    ref = dnn_reference(noise_emb, con_emb, timesteps, params, E)
    assert out.shape == (B, D), out.shape
    out_f32 = out.astype(jnp.float32)
    # bf16 matmul operands / bf16 output + emb-layer folding => small drift vs f32 ref.
    max_err = float(jnp.max(jnp.abs(out_f32 - ref)))
    assert jnp.allclose(out_f32, ref, atol=5e-2, rtol=5e-2), f"mismatch vs reference: {max_err}"

    print("KERNEL_OK")
</pallas_src>

<mosaic_0001>
module attributes {stable_mosaic.version = 11 : i64} {
  func.func @dnn_kernel(%arg0: i32, %arg1: memref<128x1xf32, #tpu.memory_space<vmem>>, %arg2: memref<128x128xf32, #tpu.memory_space<vmem>>, %arg3: memref<128x128xf32, #tpu.memory_space<vmem>>, %arg4: memref<128x64xbf16, #tpu.memory_space<vmem>>, %arg5: memref<128x64xbf16, #tpu.memory_space<vmem>>, %arg6: memref<8x64xf32, #tpu.memory_space<vmem>>, %arg7: memref<8x64xf32, #tpu.memory_space<vmem>>, %arg8: memref<1x64xf32, #tpu.memory_space<vmem>>, %arg9: memref<64x128xbf16, #tpu.memory_space<vmem>>, %arg10: memref<1x128xf32, #tpu.memory_space<vmem>>, %arg11: memref<128x128xbf16, #tpu.memory_space<vmem>>) attributes {dimension_semantics = [#tpu.dimension_semantics<parallel>], iteration_bounds = array<i64: 2>, scalar_prefetch = 0 : i64, scratch_operands = 0 : i64, tpu.core_type = #tpu.core_type<tc>, window_params = [{transform_indices = @transform_0, window_bounds = array<i64: 128, 1>}, {transform_indices = @transform_1, window_bounds = array<i64: 128, 128>}, {transform_indices = @transform_2, window_bounds = array<i64: 128, 128>}, {pipeline_mode = #tpu.pipeline_mode<synchronous>, transform_indices = @transform_3, window_bounds = array<i64: 128, 64>}, {pipeline_mode = #tpu.pipeline_mode<synchronous>, transform_indices = @transform_4, window_bounds = array<i64: 128, 64>}, {pipeline_mode = #tpu.pipeline_mode<synchronous>, transform_indices = @transform_5, window_bounds = array<i64: 8, 64>}, {pipeline_mode = #tpu.pipeline_mode<synchronous>, transform_indices = @transform_6, window_bounds = array<i64: 8, 64>}, {pipeline_mode = #tpu.pipeline_mode<synchronous>, transform_indices = @transform_7, window_bounds = array<i64: 1, 64>}, {pipeline_mode = #tpu.pipeline_mode<synchronous>, transform_indices = @transform_8, window_bounds = array<i64: 64, 128>}, {pipeline_mode = #tpu.pipeline_mode<synchronous>, transform_indices = @transform_9, window_bounds = array<i64: 1, 128>}, {transform_indices = @transform_10, window_bounds = array<i64: 128, 128>}]} {
    %0 = tpu.iota {dimensions = array<i32: 1>} : vector<1x8xi32>
    %1 = arith.sitofp %0 : vector<1x8xi32> to vector<1x8xf32>
    %cst = arith.constant -1.15129256 : f32
    %2 = vector.broadcast %cst : f32 to vector<1x8xf32>
    %3 = arith.mulf %2, %1 : vector<1x8xf32>
    %4 = math.exp %3 : vector<1x8xf32>
    %c0 = arith.constant 0 : index
    %c0_0 = arith.constant 0 : index
    %5 = vector.load %arg1[%c0, %c0_0] : memref<128x1xf32, #tpu.memory_space<vmem>>, vector<128x1xf32>
    %6 = vector.broadcast %5 : vector<128x1xf32> to vector<128x8xf32>
    %7 = vector.broadcast %4 : vector<1x8xf32> to vector<128x8xf32>
    %8 = arith.mulf %6, %7 : vector<128x8xf32>
    %9 = math.cos %8 : vector<128x8xf32>
    %10 = math.sin %8 : vector<128x8xf32>
    %c0_1 = arith.constant 0 : index
    %c0_2 = arith.constant 0 : index
    %11 = vector.load %arg2[%c0_1, %c0_2] : memref<128x128xf32, #tpu.memory_space<vmem>>, vector<128x128xf32>
    %12 = arith.truncf %11 : vector<128x128xf32> to vector<128x128xbf16>
    %c0_3 = arith.constant 0 : index
    %c0_4 = arith.constant 0 : index
    %13 = vector.load %arg4[%c0_3, %c0_4] : memref<128x64xbf16, #tpu.memory_space<vmem>>, vector<128x64xbf16>
    %cst_5 = arith.constant dense<0.000000e+00> : vector<128x64xf32>
    %14 = tpu.matmul %12, %13, %cst_5 {dimension_numbers = #tpu.dot_dimension_numbers<[1], [0], [0], [1], [0, 0, 1, 1], [], []>} : vector<128x128xbf16>, vector<128x64xbf16>, vector<128x64xf32> -> vector<128x64xf32>
    %c0_6 = arith.constant 0 : index
    %c0_7 = arith.constant 0 : index
    %15 = vector.load %arg3[%c0_6, %c0_7] : memref<128x128xf32, #tpu.memory_space<vmem>>, vector<128x128xf32>
    %16 = arith.truncf %15 : vector<128x128xf32> to vector<128x128xbf16>
    %c0_8 = arith.constant 0 : index
    %c0_9 = arith.constant 0 : index
    %17 = vector.load %arg5[%c0_8, %c0_9] : memref<128x64xbf16, #tpu.memory_space<vmem>>, vector<128x64xbf16>
    %cst_10 = arith.constant dense<0.000000e+00> : vector<128x64xf32>
    %18 = tpu.matmul %16, %17, %cst_10 {dimension_numbers = #tpu.dot_dimension_numbers<[1], [0], [0], [1], [0, 0, 1, 1], [], []>} : vector<128x128xbf16>, vector<128x64xbf16>, vector<128x64xf32> -> vector<128x64xf32>
    %19 = arith.addf %14, %18 : vector<128x64xf32>
    %c0_11 = arith.constant 0 : index
    %c0_12 = arith.constant 0 : index
    %20 = vector.load %arg6[%c0_11, %c0_12] : memref<8x64xf32, #tpu.memory_space<vmem>>, vector<8x64xf32>
    %cst_13 = arith.constant dense<0.000000e+00> : vector<128x64xf32>
    %21 = tpu.matmul %9, %20, %cst_13 {dimension_numbers = #tpu.dot_dimension_numbers<[1], [0], [0], [1], [0, 0, 1, 1], [], []>} : vector<128x8xf32>, vector<8x64xf32>, vector<128x64xf32> -> vector<128x64xf32>
    %22 = arith.addf %19, %21 : vector<128x64xf32>
    %c0_14 = arith.constant 0 : index
    %c0_15 = arith.constant 0 : index
    %23 = vector.load %arg7[%c0_14, %c0_15] : memref<8x64xf32, #tpu.memory_space<vmem>>, vector<8x64xf32>
    %cst_16 = arith.constant dense<0.000000e+00> : vector<128x64xf32>
    %24 = tpu.matmul %10, %23, %cst_16 {dimension_numbers = #tpu.dot_dimension_numbers<[1], [0], [0], [1], [0, 0, 1, 1], [], []>} : vector<128x8xf32>, vector<8x64xf32>, vector<128x64xf32> -> vector<128x64xf32>
    %25 = arith.addf %22, %24 : vector<128x64xf32>
    %c0_17 = arith.constant 0 : index
    %c0_18 = arith.constant 0 : index
    %26 = vector.load %arg8[%c0_17, %c0_18] : memref<1x64xf32, #tpu.memory_space<vmem>>, vector<1x64xf32>
    %27 = vector.broadcast %26 : vector<1x64xf32> to vector<128x64xf32>
    %28 = arith.addf %25, %27 : vector<128x64xf32>
    %29 = math.tanh %28 : vector<128x64xf32>
    %30 = arith.truncf %29 : vector<128x64xf32> to vector<128x64xbf16>
    %c0_19 = arith.constant 0 : index
    %c0_20 = arith.constant 0 : index
    %31 = vector.load %arg9[%c0_19, %c0_20] : memref<64x128xbf16, #tpu.memory_space<vmem>>, vector<64x128xbf16>
    %cst_21 = arith.constant dense<0.000000e+00> : vector<128x128xf32>
    %32 = tpu.matmul %30, %31, %cst_21 {dimension_numbers = #tpu.dot_dimension_numbers<[1], [0], [0], [1], [0, 0, 1, 1], [], []>} : vector<128x64xbf16>, vector<64x128xbf16>, vector<128x128xf32> -> vector<128x128xf32>
    %c0_22 = arith.constant 0 : index
    %c0_23 = arith.constant 0 : index
    %33 = vector.load %arg10[%c0_22, %c0_23] : memref<1x128xf32, #tpu.memory_space<vmem>>, vector<1x128xf32>
    %34 = vector.broadcast %33 : vector<1x128xf32> to vector<128x128xf32>
    %35 = arith.addf %32, %34 : vector<128x128xf32>
    %36 = arith.truncf %35 : vector<128x128xf32> to vector<128x128xbf16>
    %c0_24 = arith.constant 0 : index
    %c0_25 = arith.constant 0 : index
    %37 = vector.load %arg11[%c0_24, %c0_25] : memref<128x128xbf16, #tpu.memory_space<vmem>>, vector<128x128xbf16>
    tpu.vector_store %arg11[%c0_24, %c0_25], %36 {strides = array<i32>} : memref<128x128xbf16, #tpu.memory_space<vmem>>, vector<128x128xbf16>,
    return
  }
  func.func @transform_0(%arg0: i32) -> (i32, i32) {
    %c0_i32 = arith.constant 0 : i32
    %c0_i32_0 = arith.constant 0 : i32
    return %arg0, %c0_i32 : i32, i32
  }
  func.func @transform_1(%arg0: i32) -> (i32, i32) {
    %c0_i32 = arith.constant 0 : i32
    %c0_i32_0 = arith.constant 0 : i32
    return %arg0, %c0_i32 : i32, i32
  }
  func.func @transform_2(%arg0: i32) -> (i32, i32) {
    %c0_i32 = arith.constant 0 : i32
    %c0_i32_0 = arith.constant 0 : i32
    return %arg0, %c0_i32 : i32, i32
  }
  func.func @transform_3(%arg0: i32) -> (i32, i32) {
    %c0_i32 = arith.constant 0 : i32
    %c0_i32_0 = arith.constant 0 : i32
    %c0_i32_1 = arith.constant 0 : i32
    return %c0_i32, %c0_i32_0 : i32, i32
  }
  func.func @transform_4(%arg0: i32) -> (i32, i32) {
    %c0_i32 = arith.constant 0 : i32
    %c0_i32_0 = arith.constant 0 : i32
    %c0_i32_1 = arith.constant 0 : i32
    return %c0_i32, %c0_i32_0 : i32, i32
  }
  func.func @transform_5(%arg0: i32) -> (i32, i32) {
    %c0_i32 = arith.constant 0 : i32
    %c0_i32_0 = arith.constant 0 : i32
    %c0_i32_1 = arith.constant 0 : i32
    return %c0_i32, %c0_i32_0 : i32, i32
  }
  func.func @transform_6(%arg0: i32) -> (i32, i32) {
    %c0_i32 = arith.constant 0 : i32
    %c0_i32_0 = arith.constant 0 : i32
    %c0_i32_1 = arith.constant 0 : i32
    return %c0_i32, %c0_i32_0 : i32, i32
  }
  func.func @transform_7(%arg0: i32) -> (i32, i32) {
    %c0_i32 = arith.constant 0 : i32
    %c0_i32_0 = arith.constant 0 : i32
    %c0_i32_1 = arith.constant 0 : i32
    return %c0_i32, %c0_i32_0 : i32, i32
  }
  func.func @transform_8(%arg0: i32) -> (i32, i32) {
    %c0_i32 = arith.constant 0 : i32
    %c0_i32_0 = arith.constant 0 : i32
    %c0_i32_1 = arith.constant 0 : i32
    return %c0_i32, %c0_i32_0 : i32, i32
  }
  func.func @transform_9(%arg0: i32) -> (i32, i32) {
    %c0_i32 = arith.constant 0 : i32
    %c0_i32_0 = arith.constant 0 : i32
    %c0_i32_1 = arith.constant 0 : i32
    return %c0_i32, %c0_i32_0 : i32, i32
  }
  func.func @transform_10(%arg0: i32) -> (i32, i32) {
    %c0_i32 = arith.constant 0 : i32
    %c0_i32_0 = arith.constant 0 : i32
    return %arg0, %c0_i32 : i32, i32
  }
}

</mosaic_0001>

<llo_original>
// kernel: dnn_forward.1
$region0: #{dnn_forward.1}
  #allocation0 [shape = 'u32[]', space=smem, size = 0x4, offset = 0x4, fixed_abs, tag = 'smem constant byte address 0x4 - core index']
  #allocation1 [shape = 'u32[144,128]{1,0:T(1,128)}', space=vmem, size = 0x12000, scoped, tag = 'internal scratch']
  %s0 = inlined_call_operand.vmem [shape: f32[256,1], index: 0, kind: input, shape index: {}]
  %s1 = inlined_call_operand.vmem [shape: f32[256,128], index: 1, kind: input, shape index: {}]
  %s2 = inlined_call_operand.hbm [shape: f32[256,128], index: 2, kind: input, shape index: {}]
  %s3 = inlined_call_operand.vmem [shape: bf16[128,64], index: 3, kind: input, shape index: {}]
  %s4 = inlined_call_operand.vmem [shape: bf16[128,64], index: 4, kind: input, shape index: {}]
  %s5 = inlined_call_operand.vmem [shape: f32[8,64], index: 5, kind: input, shape index: {}]
  %s6 = inlined_call_operand.vmem [shape: f32[8,64], index: 6, kind: input, shape index: {}]
  %s7 = inlined_call_operand.vmem [shape: f32[1,64], index: 7, kind: input, shape index: {}]
  %s8 = inlined_call_operand.vmem [shape: bf16[64,128], index: 8, kind: input, shape index: {}]
  %s9 = inlined_call_operand.vmem [shape: f32[1,128], index: 9, kind: input, shape index: {}]
  %s10 = inlined_call_operand.hbm [shape: bf16[256,128], index: 10, kind: output, shape index: {}]
  %s11 = sld [smem:[#allocation0]]
  $region77: #{dnn_forward.1} parent=0
    _
  %s13 = ssub.s32 1, %s11
  %s14 = scalar_select 0, %s13, %s11
  $region1: #{dnn_forward.1} parent=0
    #allocation2 [shape = 'u8[131072]{0}', space=vmem, size = 0x20000, scoped, tag = 'input window, operand 2']
    #allocation3 [shape = 's32[2]{0}', space=sflag, size = 0x8, scoped, tag = 'scoped memory for dnn_forward.1']
    #allocation4 [shape = 's32[2]{0}', space=sflag, size = 0x8, scoped, tag = 'scoped memory for dnn_forward.1']
    #allocation5 [shape = 'u8[65536]{0}', space=vmem, size = 0x10000, scoped, tag = 'output window, operand 0']
    %15 = vsyncpa [#allocation3], 0
    %s16 = scalar_lea.sflag [#allocation3], 1
    %17 = vsyncpa %s16, 0
    %18 = vsyncpa [#allocation4], 0
    %s19 = scalar_lea.sflag [#allocation4], 1
    %20 = vsyncpa %s19, 0
    loop: start=0, step=1, limit=4
    $region2: #{dnn_forward.1} parent=1 // loop_pre_header
      _
    $region3: #{dnn_forward.1} parent=1 // loop_header
      %s22 = sphi 0, %s26
      %p23 = scmp.ge.s32.totalorder %s22, 4
      %s32 = sphi 0, %s34
      %s35 = sphi 0, %s32
      %s36 = sphi 0, %s35
      %s52 = sphi 0, %s36
      %s58 = sphi 0, %s60
      %s61 = sphi 0, %s58
      %s62 = sphi 0, %s61
      %s78 = sphi 0, %s62
      %s84 = sphi 0, %s86
      %s87 = sphi 0, %s84
      %s88 = sphi 0, %s87
      %s104 = sphi 0, %s88
      %s108 = sphi 0, %s108
      %s110 = sphi 0, %s108
      %s111 = sphi 0, %s110
      %s125 = sphi 0, %s111
      %s129 = sphi 0, %s129
      %s131 = sphi 0, %s129
      %s132 = sphi 0, %s131
      %s146 = sphi 0, %s132
      %s150 = sphi 0, %s150
      %s152 = sphi 0, %s150
      %s153 = sphi 0, %s152
      %s167 = sphi 0, %s153
      %s171 = sphi 0, %s171
      %s173 = sphi 0, %s171
      %s174 = sphi 0, %s173
      %s188 = sphi 0, %s174
      %s192 = sphi 0, %s192
      %s194 = sphi 0, %s192
      %s195 = sphi 0, %s194
      %s209 = sphi 0, %s195
      %s213 = sphi 0, %s213
      %s215 = sphi 0, %s213
      %s216 = sphi 0, %s215
      %s230 = sphi 0, %s216
      %s234 = sphi 0, %s234
      %s236 = sphi 0, %s234
      %s237 = sphi 0, %s236
      %s251 = sphi 0, %s237
      %s257 = sphi 0, %s259
      %s260 = sphi 0, %s257
      %s261 = sphi 0, %s260
      %s277 = sphi 0, %s261
    $region4: #{dnn_forward.1} parent=1 // loop_header_branch
      %25 = sbr.rel (%p23) target = $region8
    $region5: #{dnn_forward.1} parent=1 // loop_body
      %s27 = ssub.s32 %s22, 1
      %s28 = ssub.s32 %s22, 2
      %s29 = sadd.s32 %s22, 1
      %s30 = ssub.s32 %s22, %s29
      %p31 = scmp.eq.s32.totalorder %s30, 0
      %s33 = sadd.s32 %s32, 1
      %s34 = scalar_select %p31, %s32, %s33
      %p37 = pneg %p31
      %p38 = scmp.eq.s32.totalorder %s22, 1
      %p39 = por %p37, %p38
      %p40 = scmp.ne.s32.totalorder %s32, %s35
      %p41 = scmp.eq.s32.totalorder %s22, 0
      %p42 = por %p40, %p41
      %p43 = scmp.ne.s32.totalorder %s32, %s35
      %p44 = scmp.eq.s32.totalorder %s27, 1
      %p45 = por %p43, %p44
      %p46 = scmp.ne.s32.totalorder %s35, %s36
      %p47 = scmp.eq.s32.totalorder %s27, 0
      %p48 = por %p46, %p47
      %p49 = scmp.ne.s32.totalorder %s35, %s36
      %p50 = scmp.eq.s32.totalorder %s28, 1
      %p51 = por %p49, %p50
      %p53 = scmp.ne.s32.totalorder %s36, %s52
      %p54 = scmp.eq.s32.totalorder %s28, 0
      %p55 = por %p53, %p54
      %s56 = ssub.s32 %s22, %s29
      %p57 = scmp.eq.s32.totalorder %s56, 0
      %s59 = sadd.s32 %s58, 1
      %s60 = scalar_select %p57, %s58, %s59
      %p63 = pneg %p57
      %p64 = scmp.eq.s32.totalorder %s22, 1
      %p65 = por %p63, %p64
      %p66 = scmp.ne.s32.totalorder %s58, %s61
      %p67 = scmp.eq.s32.totalorder %s22, 0
      %p68 = por %p66, %p67
      %p69 = scmp.ne.s32.totalorder %s58, %s61
      %p70 = scmp.eq.s32.totalorder %s27, 1
      %p71 = por %p69, %p70
      %p72 = scmp.ne.s32.totalorder %s61, %s62
      %p73 = scmp.eq.s32.totalorder %s27, 0
      %p74 = por %p72, %p73
      %p75 = scmp.ne.s32.totalorder %s61, %s62
      %p76 = scmp.eq.s32.totalorder %s28, 1
      %p77 = por %p75, %p76
      %p79 = scmp.ne.s32.totalorder %s62, %s78
      %p80 = scmp.eq.s32.totalorder %s28, 0
      %p81 = por %p79, %p80
      %s82 = ssub.s32 %s22, %s29
      %p83 = scmp.eq.s32.totalorder %s82, 0
      %s85 = sadd.s32 %s84, 1
      %s86 = scalar_select %p83, %s84, %s85
      %p89 = pneg %p83
      %p90 = scmp.eq.s32.totalorder %s22, 1
      %p91 = por %p89, %p90
      %p92 = scmp.ne.s32.totalorder %s84, %s87
      %p93 = scmp.eq.s32.totalorder %s22, 0
      %p94 = por %p92, %p93
      %p95 = scmp.ne.s32.totalorder %s84, %s87
      %p96 = scmp.eq.s32.totalorder %s27, 1
      %p97 = por %p95, %p96
      %p98 = scmp.ne.s32.totalorder %s87, %s88
      %p99 = scmp.eq.s32.totalorder %s27, 0
      %p100 = por %p98, %p99
      %p101 = scmp.ne.s32.totalorder %s87, %s88
      %p102 = scmp.eq.s32.totalorder %s28, 1
      %p103 = por %p101, %p102
      %p105 = scmp.ne.s32.totalorder %s88, %s104
      %p106 = scmp.eq.s32.totalorder %s28, 0
      %p107 = por %p105, %p106
      %s109 = sadd.s32 %s108, 1
      %p112 = scmp.eq.s32.totalorder %s22, 1
      %p113 = scmp.ne.s32.totalorder %s108, %s110
      %p114 = scmp.eq.s32.totalorder %s22, 0
      %p115 = por %p113, %p114
      %p116 = scmp.ne.s32.totalorder %s108, %s110
      %p117 = scmp.eq.s32.totalorder %s27, 1
      %p118 = por %p116, %p117
      %p119 = scmp.ne.s32.totalorder %s110, %s111
      %p120 = scmp.eq.s32.totalorder %s27, 0
      %p121 = por %p119, %p120
      %p122 = scmp.ne.s32.totalorder %s110, %s111
      %p123 = scmp.eq.s32.totalorder %s28, 1
      %p124 = por %p122, %p123
      %p126 = scmp.ne.s32.totalorder %s111, %s125
      %p127 = scmp.eq.s32.totalorder %s28, 0
      %p128 = por %p126, %p127
      %s130 = sadd.s32 %s129, 1
      %p133 = scmp.eq.s32.totalorder %s22, 1
      %p134 = scmp.ne.s32.totalorder %s129, %s131
      %p135 = scmp.eq.s32.totalorder %s22, 0
      %p136 = por %p134, %p135
      %p137 = scmp.ne.s32.totalorder %s129, %s131
      %p138 = scmp.eq.s32.totalorder %s27, 1
      %p139 = por %p137, %p138
      %p140 = scmp.ne.s32.totalorder %s131, %s132
      %p141 = scmp.eq.s32.totalorder %s27, 0
      %p142 = por %p140, %p141
      %p143 = scmp.ne.s32.totalorder %s131, %s132
      %p144 = scmp.eq.s32.totalorder %s28, 1
      %p145 = por %p143, %p144
      %p147 = scmp.ne.s32.totalorder %s132, %s146
      %p148 = scmp.eq.s32.totalorder %s28, 0
      %p149 = por %p147, %p148
      %s151 = sadd.s32 %s150, 1
      %p154 = scmp.eq.s32.totalorder %s22, 1
      %p155 = scmp.ne.s32.totalorder %s150, %s152
      %p156 = scmp.eq.s32.totalorder %s22, 0
      %p157 = por %p155, %p156
      %p158 = scmp.ne.s32.totalorder %s150, %s152
      %p159 = scmp.eq.s32.totalorder %s27, 1
      %p160 = por %p158, %p159
      %p161 = scmp.ne.s32.totalorder %s152, %s153
      %p162 = scmp.eq.s32.totalorder %s27, 0
      %p163 = por %p161, %p162
      %p164 = scmp.ne.s32.totalorder %s152, %s153
      %p165 = scmp.eq.s32.totalorder %s28, 1
      %p166 = por %p164, %p165
      %p168 = scmp.ne.s32.totalorder %s153, %s167
      %p169 = scmp.eq.s32.totalorder %s28, 0
      %p170 = por %p168, %p169
      %s172 = sadd.s32 %s171, 1
      %p175 = scmp.eq.s32.totalorder %s22, 1
      %p176 = scmp.ne.s32.totalorder %s171, %s173
      %p177 = scmp.eq.s32.totalorder %s22, 0
      %p178 = por %p176, %p177
      %p179 = scmp.ne.s32.totalorder %s171, %s173
      %p180 = scmp.eq.s32.totalorder %s27, 1
      %p181 = por %p179, %p180
      %p182 = scmp.ne.s32.totalorder %s173, %s174
      %p183 = scmp.eq.s32.totalorder %s27, 0
      %p184 = por %p182, %p183
      %p185 = scmp.ne.s32.totalorder %s173, %s174
      %p186 = scmp.eq.s32.totalorder %s28, 1
      %p187 = por %p185, %p186
      %p189 = scmp.ne.s32.totalorder %s174, %s188
      %p190 = scmp.eq.s32.totalorder %s28, 0
      %p191 = por %p189, %p190
      %s193 = sadd.s32 %s192, 1
      %p196 = scmp.eq.s32.totalorder %s22, 1
      %p197 = scmp.ne.s32.totalorder %s192, %s194
      %p198 = scmp.eq.s32.totalorder %s22, 0
      %p199 = por %p197, %p198
      %p200 = scmp.ne.s32.totalorder %s192, %s194
      %p201 = scmp.eq.s32.totalorder %s27, 1
      %p202 = por %p200, %p201
      %p203 = scmp.ne.s32.totalorder %s194, %s195
      %p204 = scmp.eq.s32.totalorder %s27, 0
      %p205 = por %p203, %p204
      %p206 = scmp.ne.s32.totalorder %s194, %s195
      %p207 = scmp.eq.s32.totalorder %s28, 1
      %p208 = por %p206, %p207
      %p210 = scmp.ne.s32.totalorder %s195, %s209
      %p211 = scmp.eq.s32.totalorder %s28, 0
      %p212 = por %p210, %p211
      %s214 = sadd.s32 %s213, 1
      %p217 = scmp.eq.s32.totalorder %s22, 1
      %p218 = scmp.ne.s32.totalorder %s213, %s215
      %p219 = scmp.eq.s32.totalorder %s22, 0
      %p220 = por %p218, %p219
      %p221 = scmp.ne.s32.totalorder %s213, %s215
      %p222 = scmp.eq.s32.totalorder %s27, 1
      %p223 = por %p221, %p222
      %p224 = scmp.ne.s32.totalorder %s215, %s216
      %p225 = scmp.eq.s32.totalorder %s27, 0
      %p226 = por %p224, %p225
      %p227 = scmp.ne.s32.totalorder %s215, %s216
      %p228 = scmp.eq.s32.totalorder %s28, 1
      %p229 = por %p227, %p228
      %p231 = scmp.ne.s32.totalorder %s216, %s230
      %p232 = scmp.eq.s32.totalorder %s28, 0
      %p233 = por %p231, %p232
      %s235 = sadd.s32 %s234, 1
      %p238 = scmp.eq.s32.totalorder %s22, 1
      %p239 = scmp.ne.s32.totalorder %s234, %s236
      %p240 = scmp.eq.s32.totalorder %s22, 0
      %p241 = por %p239, %p240
      %p242 = scmp.ne.s32.totalorder %s234, %s236
      %p243 = scmp.eq.s32.totalorder %s27, 1
      %p244 = por %p242, %p243
      %p245 = scmp.ne.s32.totalorder %s236, %s237
      %p246 = scmp.eq.s32.totalorder %s27, 0
      %p247 = por %p245, %p246
      %p248 = scmp.ne.s32.totalorder %s236, %s237
      %p249 = scmp.eq.s32.totalorder %s28, 1
      %p250 = por %p248, %p249
      %p252 = scmp.ne.s32.totalorder %s237, %s251
      %p253 = scmp.eq.s32.totalorder %s28, 0
      %p254 = por %p252, %p253
      %s255 = ssub.s32 %s22, %s29
      %p256 = scmp.eq.s32.totalorder %s255, 0
      %s258 = sadd.s32 %s257, 1
      %s259 = scalar_select %p256, %s257, %s258
      %p262 = pneg %p256
      %p263 = scmp.eq.s32.totalorder %s22, 1
      %p264 = por %p262, %p263
      %p265 = scmp.ne.s32.totalorder %s257, %s260
      %p266 = scmp.eq.s32.totalorder %s22, 0
      %p267 = por %p265, %p266
      %p268 = scmp.ne.s32.totalorder %s257, %s260
      %p269 = scmp.eq.s32.totalorder %s27, 1
      %p270 = por %p268, %p269
      %p271 = scmp.ne.s32.totalorder %s260, %s261
      %p272 = scmp.eq.s32.totalorder %s27, 0
      %p273 = por %p271, %p272
      %p274 = scmp.ne.s32.totalorder %s260, %s261
      %p275 = scmp.eq.s32.totalorder %s28, 1
      %p276 = por %p274, %p275
      %p278 = scmp.ne.s32.totalorder %s261, %s277
      %p279 = scmp.eq.s32.totalorder %s28, 0
      %p280 = por %p278, %p279
      %p281 = scmp.le.s32.totalorder 1, %s22
      %p282 = scmp.lt.s32.totalorder %s22, 3
      %p283 = pnand %p281, %p282
      %p284 = pneg %p283
      // Predicated region
      $region9: #{dnn_forward.1} parent=5 // pred_check
        _
      $region10: #{dnn_forward.1} parent=5 // pred_check_branch
        %286 = sbr.rel (%p283) target = $region12
      $region11: #{dnn_forward.1} parent=5 // pred_region
        %s287 = ssub.s32 %s22, 1
        // Predicated region
        $region13: #{dnn_forward.1} parent=11 // pred_check
          %p288 = pneg %p121
        $region14: #{dnn_forward.1} parent=11 // pred_check_branch
          %290 = sbr.rel (%p288) target = $region16
        $region15: #{dnn_forward.1} parent=11 // pred_region
          _
        $region16: #{dnn_forward.1} parent=11 // pred_fallthru
          _
        // Predicated region
        $region17: #{dnn_forward.1} parent=11 // pred_check
          %p291 = pneg %p142
        $region18: #{dnn_forward.1} parent=11 // pred_check_branch
          %293 = sbr.rel (%p291) target = $region20
        $region19: #{dnn_forward.1} parent=11 // pred_region
          _
        $region20: #{dnn_forward.1} parent=11 // pred_fallthru
          _
        // Predicated region
        $region21: #{dnn_forward.1} parent=11 // pred_check
          %p294 = pneg %p163
        $region22: #{dnn_forward.1} parent=11 // pred_check_branch
          %296 = sbr.rel (%p294) target = $region24
        $region23: #{dnn_forward.1} parent=11 // pred_region
          _
        $region24: #{dnn_forward.1} parent=11 // pred_fallthru
          _
        // Predicated region
        $region25: #{dnn_forward.1} parent=11 // pred_check
          %p297 = pneg %p184
        $region26: #{dnn_forward.1} parent=11 // pred_check_branch
          %299 = sbr.rel (%p297) target = $region28
        $region27: #{dnn_forward.1} parent=11 // pred_region
          _
        $region28: #{dnn_forward.1} parent=11 // pred_fallthru
          _
        // Predicated region
        $region29: #{dnn_forward.1} parent=11 // pred_check
          %p300 = pneg %p205
        $region30: #{dnn_forward.1} parent=11 // pred_check_branch
          %302 = sbr.rel (%p300) target = $region32
        $region31: #{dnn_forward.1} parent=11 // pred_region
          _
        $region32: #{dnn_forward.1} parent=11 // pred_fallthru
          _
        // Predicated region
        $region33: #{dnn_forward.1} parent=11 // pred_check
          %p303 = pneg %p226
        $region34: #{dnn_forward.1} parent=11 // pred_check_branch
          %305 = sbr.rel (%p303) target = $region36
        $region35: #{dnn_forward.1} parent=11 // pred_region
          _
        $region36: #{dnn_forward.1} parent=11 // pred_fallthru
          _
        // Predicated region
        $region37: #{dnn_forward.1} parent=11 // pred_check
          %p306 = pneg %p247
        $region38: #{dnn_forward.1} parent=11 // pred_check_branch
          %308 = sbr.rel (%p306) target = $region40
        $region39: #{dnn_forward.1} parent=11 // pred_region
          _
        $region40: #{dnn_forward.1} parent=11 // pred_fallthru
          _
      $region12: #{dnn_forward.1} parent=5 // pred_fallthru
        _
      %p309 = scmp.lt.s32.totalorder %s22, 2
      // Predicated region
      $region41: #{dnn_forward.1} parent=5 // pred_check
        %p310 = pneg %p309
      $region42: #{dnn_forward.1} parent=5 // pred_check_branch
        %312 = sbr.rel (%p310) target = $region44
      $region43: #{dnn_forward.1} parent=5 // pred_region
        // Predicated region
        $region45: #{dnn_forward.1} parent=43 // pred_check
          %p313 = pneg %p42
        $region46: #{dnn_forward.1} parent=43 // pred_check_branch
          %315 = sbr.rel (%p313) target = $region48
        $region47: #{dnn_forward.1} parent=43 // pred_region
          %s316 = smul.u32 16, %s22
          %p317 = scmp.lt.s32.totalorder %s316, 31
          %s318 = scalar_select %p317, %s316, 31
          %s319 = smul.addr %s318, 8
          %s320 = scalar_lea.vmem %s0, %s319
          %s321 = smul.u32 16, %s22
        $region48: #{dnn_forward.1} parent=43 // pred_fallthru
          _
        // Predicated region
        $region49: #{dnn_forward.1} parent=43 // pred_check
          %p322 = pneg %p68
        $region50: #{dnn_forward.1} parent=43 // pred_check_branch
          %324 = sbr.rel (%p322) target = $region52
        $region51: #{dnn_forward.1} parent=43 // pred_region
          %s325 = smul.u32 16, %s22
          %p326 = scmp.lt.s32.totalorder %s325, 31
          %s327 = scalar_select %p326, %s325, 31
          %s328 = smul.addr %s327, 8
          %s329 = scalar_lea.vmem %s1, %s328
          %s330 = smul.u32 16, %s22
        $region52: #{dnn_forward.1} parent=43 // pred_fallthru
          _
        // Predicated region
        $region53: #{dnn_forward.1} parent=43 // pred_check
          %p331 = pneg %p94
        $region54: #{dnn_forward.1} parent=43 // pred_check_branch
          %333 = sbr.rel (%p331) target = $region56
        $region55: #{dnn_forward.1} parent=43 // pred_region
          %s334 = sand.u32 %s84, 1
          %s335 = scalar_lea.sflag [#allocation3], %s334
          %s336 = sand.u32 %s84, 1
          %s337 = smul.addr %s336, 128
          %s338 = scalar_lea.vmem [#allocation2], %s337
          %s339 = smul.u32 16, %s22
          %s341 = ssub.s32 2048, 2048
          %342 = vsyncadd %s335, %s341
          %s343 = smul.addr %s339, 128
          %s344 = scalar_lea.hbm %s2, %s343
          %s345 = sshll.u32 %s338, 4
          %s346 = int_to_ptr.vmem [resolvable:$true] %s345
          %351 = dma.hbm_to_vmem [thread:$0]  %s344, 2048, %s346, %s335, 128, 128, 8
        $region56: #{dnn_forward.1} parent=43 // pred_fallthru
          _
      $region44: #{dnn_forward.1} parent=5 // pred_fallthru
        _
      %p352 = scmp.le.s32.totalorder 1, %s22
      %p353 = scmp.lt.s32.totalorder %s22, 3
      %p354 = pnand %p352, %p353
      %p355 = pneg %p354
      // Predicated region
      $region57: #{dnn_forward.1} parent=5 // pred_check
        _
      $region58: #{dnn_forward.1} parent=5 // pred_check_branch
        %357 = sbr.rel (%p354) target = $region60
      $region59: #{dnn_forward.1} parent=5 // pred_region
        %s358 = ssub.s32 %s22, 1
        %s359 = sand.u32 %s87, 1
        %s360 = scalar_lea.sflag [#allocation3], %s359
        %s361 = sand.u32 %s87, 1
        %s362 = smul.addr %s361, 128
        %s363 = scalar_lea.vmem [#allocation2], %s362
        // Predicated region
        $region61: #{dnn_forward.1} parent=59 // pred_check
          %p364 = pneg %p100
        $region62: #{dnn_forward.1} parent=59 // pred_check_branch
          %366 = sbr.rel (%p364) target = $region64
        $region63: #{dnn_forward.1} parent=59 // pred_region
          %367 = dma.done %s360, 2048
        $region64: #{dnn_forward.1} parent=59 // pred_fallthru
          _
        %s368 = smul.u32 16, %s27
        %p369 = scmp.lt.s32.totalorder %s368, 31
        %s370 = scalar_select %p369, %s368, 31
        %s371 = smul.addr %s370, 8
        %s372 = scalar_lea.vmem %s0, %s371
        %p373 = pneg %p48
        %p374 = pneg %p45
        %s375 = smul.u32 16, %s27
        %p376 = scmp.lt.s32.totalorder %s375, 31
        %s377 = scalar_select %p376, %s375, 31
        %s378 = smul.addr %s377, 8
        %s379 = scalar_lea.vmem %s1, %s378
        %p380 = pneg %p74
        %p381 = pneg %p71
        %s382 = sand.u32 %s87, 1
        %s383 = scalar_lea.sflag [#allocation3], %s382
        %s384 = sand.u32 %s87, 1
        %s385 = smul.addr %s384, 128
        %s386 = scalar_lea.vmem [#allocation2], %s385
        %p387 = pneg %p100
        %p388 = pneg %p97
        %p389 = pneg %p121
        %p390 = pneg %p118
        %p391 = pneg %p142
        %p392 = pneg %p139
        %p393 = pneg %p163
        %p394 = pneg %p160
        %p395 = pneg %p184
        %p396 = pneg %p181
        %p397 = pneg %p205
        %p398 = pneg %p202
        %p399 = pneg %p226
        %p400 = pneg %p223
        %p401 = pneg %p247
        %p402 = pneg %p244
        %p403 = pneg %p273
        %p404 = pneg %p270
        %s405 = sand.u32 %s260, 1
        %s406 = scalar_lea.sflag [#allocation4], %s405
        %s407 = sand.u32 %s260, 1
        %s408 = smul.addr %s407, 64
        %s409 = scalar_lea.vmem [#allocation5], %s408
        %s410 = smul.u32 16, %s27
        %p411 = scmp.lt.s32.totalorder %s410, 31
        %s412 = scalar_select %p411, %s410, 31
        %s413 = smul.addr %s412, 8
        %s414 = scalar_lea.vmem %s0, %s413
        %s415 = smul.u32 16, %s27
        %s416 = smul.u32 16, %s27
        %p417 = scmp.lt.s32.totalorder %s416, 31
        %s418 = scalar_select %p417, %s416, 31
        %s419 = smul.addr %s418, 8
        %s420 = scalar_lea.vmem %s1, %s419
        %s421 = smul.u32 16, %s27
        %s422 = smul.u32 16, %s27
        %s423 = smul.u32 16, %s27
        %v425 = vlaneseq
        %v426 = vand.u32 %v425, 127
        %v427 = vcvt.s32.f32 %v426
        %v428 = vmul.f32 %v427, -1.1512926
        %v429 = vmul.f32 %v428, 1.442695
        %v430 = vpow.pop %v429
        %v431 = vld [vmem:[%s414] sm:$0xff]
        %v432 = vld [vmem:[%s414 + $0x8] sm:$0xff]
        %v433 = vld [vmem:[%s414 + $0x10] sm:$0xff]
        %v434 = vld [vmem:[%s414 + $0x18] sm:$0xff]
        %v435 = vld [vmem:[%s414 + $0x20] sm:$0xff]
        %v436 = vld [vmem:[%s414 + $0x28] sm:$0xff]
        %v437 = vld [vmem:[%s414 + $0x30] sm:$0xff]
        %v438 = vld [vmem:[%s414 + $0x38] sm:$0xff]
        %v439 = vld [vmem:[%s414 + $0x40] sm:$0xff]
        %v440 = vld [vmem:[%s414 + $0x48] sm:$0xff]
        %v441 = vld [vmem:[%s414 + $0x50] sm:$0xff]
        %v442 = vld [vmem:[%s414 + $0x58] sm:$0xff]
        %v443 = vld [vmem:[%s414 + $0x60] sm:$0xff]
        %v444 = vld [vmem:[%s414 + $0x68] sm:$0xff]
        %v445 = vld [vmem:[%s414 + $0x70] sm:$0xff]
        %v446 = vld [vmem:[%s414 + $0x78] sm:$0xff]
        %448 = vset.pattern.permute.xlu0 0
        %449 = vperm.xlu0 %448, %v431
        %v450 = vpop.permute.xlu0 %449
        %453 = vset.pattern.permute.xlu0 0
        %454 = vperm.xlu0 %453, %v432
        %v455 = vpop.permute.xlu0 %454
        %458 = vset.pattern.permute.xlu0 0
        %459 = vperm.xlu0 %458, %v433
        %v460 = vpop.permute.xlu0 %459
        %463 = vset.pattern.permute.xlu0 0
        %464 = vperm.xlu0 %463, %v434
        %v465 = vpop.permute.xlu0 %464
        %468 = vset.pattern.permute.xlu0 0
        %469 = vperm.xlu0 %468, %v435
        %v470 = vpop.permute.xlu0 %469
        %473 = vset.pattern.permute.xlu0 0
        %474 = vperm.xlu0 %473, %v436
        %v475 = vpop.permute.xlu0 %474
        %478 = vset.pattern.permute.xlu0 0
        %479 = vperm.xlu0 %478, %v437
        %v480 = vpop.permute.xlu0 %479
        %483 = vset.pattern.permute.xlu0 0
        %484 = vperm.xlu0 %483, %v438
        %v485 = vpop.permute.xlu0 %484
        %488 = vset.pattern.permute.xlu0 0
        %489 = vperm.xlu0 %488, %v439
        %v490 = vpop.permute.xlu0 %489
        %493 = vset.pattern.permute.xlu0 0
        %494 = vperm.xlu0 %493, %v440
        %v495 = vpop.permute.xlu0 %494
        %498 = vset.pattern.permute.xlu0 0
        %499 = vperm.xlu0 %498, %v441
        %v500 = vpop.permute.xlu0 %499
        %503 = vset.pattern.permute.xlu0 0
        %504 = vperm.xlu0 %503, %v442
        %v505 = vpop.permute.xlu0 %504
        %508 = vset.pattern.permute.xlu0 0
        %509 = vperm.xlu0 %508, %v443
        %v510 = vpop.permute.xlu0 %509
        %513 = vset.pattern.permute.xlu0 0
        %514 = vperm.xlu0 %513, %v444
        %v515 = vpop.permute.xlu0 %514
        %518 = vset.pattern.permute.xlu0 0
        %519 = vperm.xlu0 %518, %v445
        %v520 = vpop.permute.xlu0 %519
        %523 = vset.pattern.permute.xlu0 0
        %524 = vperm.xlu0 %523, %v446
        %v525 = vpop.permute.xlu0 %524
        %v527 = vmul.f32 %v450, %v430
        %v528 = vmul.f32 %v455, %v430
        %v529 = vmul.f32 %v460, %v430
        %v530 = vmul.f32 %v465, %v430
        %v531 = vmul.f32 %v470, %v430
        %v532 = vmul.f32 %v475, %v430
        %v533 = vmul.f32 %v480, %v430
        %v534 = vmul.f32 %v485, %v430
        %v535 = vmul.f32 %v490, %v430
        %v536 = vmul.f32 %v495, %v430
        %v537 = vmul.f32 %v500, %v430
        %v538 = vmul.f32 %v505, %v430
        %v539 = vmul.f32 %v510, %v430
        %v540 = vmul.f32 %v515, %v430
        %v541 = vmul.f32 %v520, %v430
        %v542 = vmul.f32 %v525, %v430
        %v543 = vand.u32 2147483647, %v527
        %vm544 = vcmp.le.f32.partialorder %v543, 0.7853982
        %vm545 = vcmp.lt.s32.totalorder %v527, 0
        %v546 = vand.u32 %v527, 2139095040
        %v547 = vshrl.u32 %v546, 23
        %v548 = vsub.s32 %v547, 127
        %v549 = vand.u32 2147483647, %v527
        %v550 = vand.u32 %v549, 8388607
        %v551 = vor.u32 %v550, 8388608
        %v552 = vsub.s32 0, %v551
        %v553 = vadd.s32 %v548, 1
        %vm554 = vcmp.gt.s32.totalorder %v553, 0
        %v555 = vsel %vm554, %v553, 0
        %v556 = vshrl.u32 %v555, 5
        %v557 = vand.u32 %v555, 31
        %v558 = vsub.s32 32, %v557
        %v559 = vshrl.u32 683565275, %v558
        %v560 = vshll.u32 683565275, %v557
        %v561 = vshrl.u32 2475754826, %v558
        %v562 = vor.u32 %v560, %v561
        %v563 = vshll.u32 2475754826, %v557
        %v564 = vshrl.u32 2131351028, %v558
        %v565 = vor.u32 %v563, %v564
        %v566 = vshll.u32 2131351028, %v557
        %v567 = vshrl.u32 2102212464, %v558
        %v568 = vor.u32 %v566, %v567
        %v569 = vshll.u32 2102212464, %v557
        %v570 = vshrl.u32 920167782, %v558
        %v571 = vor.u32 %v569, %v570
        %v572 = vshll.u32 920167782, %v557
        %v573 = vshrl.u32 1326507024, %v558
        %v574 = vor.u32 %v572, %v573
        %vm575 = vcmp.lt.s32.totalorder %v556, 1
        %vm576 = vcmp.lt.s32.totalorder %v556, 2
        %vm577 = vcmp.lt.s32.totalorder %v556, 3
        %vm578 = vcmp.lt.s32.totalorder %v556, 4
        %v579 = vsel %vm575, %v559, %v562
        %v580 = vsel %vm578, %v568, 2102212464
        %v581 = vsel %vm577, %v565, %v580
        %v582 = vsel %vm576, %v579, %v581
        %v583 = vsel %vm575, %v562, %v565
        %v584 = vsel %vm578, %v571, 920167782
        %v585 = vsel %vm577, %v568, %v584
        %v586 = vsel %vm576, %v583, %v585
        %v587 = vsel %vm575, %v565, %v568
        %v588 = vsel %vm578, %v574, 1326507024
        %v589 = vsel %vm577, %v571, %v588
        %v590 = vsel %vm576, %v587, %v589
        %v591 = vshll.u32 %v551, 8
        %v592 = vmul.u32.u64.compose %v591, %v590
        %v593 = vextract.low.u32 %v592
        %v594 = vextract.high.u32 %v592
        %v595 = vmul.u32.u64.compose %v591, %v586
        %v596 = vextract.low.u32 %v595
        %v597 = vextract.high.u32 %v595
        %v598 = vmul.u32 %v591, %v582
        %v599 = vadd.s32 %v594, %v596
        %vm600 = vc.u32 %v594, %v596
        %v601 = vadd.s32 %v597, 1
        %v602 = vsel %vm600, %v601, %v597
        %v603 = vadd.s32 %v598, %v602
        %v604 = vadd.s32 %v603, 536870912
        %v605 = vshrl.u32 %v604, 30
        %v606 = vshll.u32 %v605, 30
        %v607 = vsub.s32 %v603, %v606
        %vm608 = vcmp.lt.s32.totalorder %v607, 0
        %v609 = vsub.s32 0, %v607
        %v610 = vsel %vm608, %v609, %v607
        %v611 = vclz %v610
        %v612 = vsub.s32 %v611, 2
        %vm613 = vcmp.gt.s32.totalorder 0, %v612
        %v614 = vsel %vm613, 0, %v612
        %v615 = vsub.s32 32, %v614
        %v616 = vshll.u32 %v607, %v614
        %v617 = vshrl.u32 %v599, %v615
        %v618 = vor.u32 %v616, %v617
        %v619 = vsub.s32 4294967266, %v614
        %v620 = vadd.s32 %v619, 127
        %v621 = vshll.u32 %v620, 23
        %v622 = vor.u32 4788187, %v621
        %v623 = vand.u32 2147483647, %v622
        %v625 = vcvt.s32.f32 %v618
        %v626 = vmul.f32 %v625, %v623
        %v627 = vxor.u32 %v626, 2147483648
        %v628 = vsel %vm545, %v627, %v626
        %v629 = vsub.s32 4, %v605
        %v630 = vsel %vm545, %v629, %v605
        %v631 = vsel %vm544, %v527, %v628
        %v632 = vsel %vm544, 0, %v630
        %v633 = vcosq.f32.pop %v631
        %v634 = vsinq.f32.pop %v631
        %vm635 = vweird.f32 %v527
        %v636 = vand.u32 %v632, 3
        %vm637 = vcmp.lt.s32.totalorder %v636, 2
        %vm638 = vcmp.eq.s32.totalorder %v636, 0
        %v639 = vxor.u32 %v634, 2147483648
        %v640 = vsel %vm638, %v633, %v639
        %vm641 = vcmp.eq.s32.totalorder %v636, 2
        %v642 = vxor.u32 %v633, 2147483648
        %v643 = vsel %vm641, %v642, %v634
        %v644 = vsel %vm637, %v640, %v643
        %v645 = vsel %vm635, nan, %v644
        %v646 = vand.u32 2147483647, %v528
        %vm647 = vcmp.le.f32.partialorder %v646, 0.7853982
        %vm648 = vcmp.lt.s32.totalorder %v528, 0
        %v649 = vand.u32 %v528, 2139095040
        %v650 = vshrl.u32 %v649, 23
        %v651 = vsub.s32 %v650, 127
        %v652 = vand.u32 2147483647, %v528
        %v653 = vand.u32 %v652, 8388607
        %v654 = vor.u32 %v653, 8388608
        %v655 = vsub.s32 0, %v654
        %v656 = vadd.s32 %v651, 1
        %vm657 = vcmp.gt.s32.totalorder %v656, 0
        %v658 = vsel %vm657, %v656, 0
        %v659 = vshrl.u32 %v658, 5
        %v660 = vand.u32 %v658, 31
        %v661 = vsub.s32 32, %v660
        %v662 = vshrl.u32 683565275, %v661
        %v663 = vshll.u32 683565275, %v660
        %v664 = vshrl.u32 2475754826, %v661
        %v665 = vor.u32 %v663, %v664
        %v666 = vshll.u32 2475754826, %v660
        %v667 = vshrl.u32 2131351028, %v661
        %v668 = vor.u32 %v666, %v667
        %v669 = vshll.u32 2131351028, %v660
        %v670 = vshrl.u32 2102212464, %v661
        %v671 = vor.u32 %v669, %v670
        %v672 = vshll.u32 2102212464, %v660
        %v673 = vshrl.u32 920167782, %v661
        %v674 = vor.u32 %v672, %v673
        %v675 = vshll.u32 920167782, %v660
        %v676 = vshrl.u32 1326507024, %v661
        %v677 = vor.u32 %v675, %v676
        %vm678 = vcmp.lt.s32.totalorder %v659, 1
        %vm679 = vcmp.lt.s32.totalorder %v659, 2
        %vm680 = vcmp.lt.s32.totalorder %v659, 3
        %vm681 = vcmp.lt.s32.totalorder %v659, 4
        %v682 = vsel %vm678, %v662, %v665
        %v683 = vsel %vm681, %v671, 2102212464
        %v684 = vsel %vm680, %v668, %v683
        %v685 = vsel %vm679, %v682, %v684
        %v686 = vsel %vm678, %v665, %v668
        %v687 = vsel %vm681, %v674, 920167782
        %v688 = vsel %vm680, %v671, %v687
        %v689 = vsel %vm679, %v686, %v688
        %v690 = vsel %vm678, %v668, %v671
        %v691 = vsel %vm681, %v677, 1326507024
        %v692 = vsel %vm680, %v674, %v691
        %v693 = vsel %vm679, %v690, %v692
        %v694 = vshll.u32 %v654, 8
        %v695 = vmul.u32.u64.compose %v694, %v693
        %v696 = vextract.low.u32 %v695
        %v697 = vextract.high.u32 %v695
        %v698 = vmul.u32.u64.compose %v694, %v689
        %v699 = vextract.low.u32 %v698
        %v700 = vextract.high.u32 %v698
        %v701 = vmul.u32 %v694, %v685
        %v702 = vadd.s32 %v697, %v699
        %vm703 = vc.u32 %v697, %v699
        %v704 = vadd.s32 %v700, 1
        %v705 = vsel %vm703, %v704, %v700
        %v706 = vadd.s32 %v701, %v705
        %v707 = vadd.s32 %v706, 536870912
        %v708 = vshrl.u32 %v707, 30
        %v709 = vshll.u32 %v708, 30
        %v710 = vsub.s32 %v706, %v709
        %vm711 = vcmp.lt.s32.totalorder %v710, 0
        %v712 = vsub.s32 0, %v710
        %v713 = vsel %vm711, %v712, %v710
        %v714 = vclz %v713
        %v715 = vsub.s32 %v714, 2
        %vm716 = vcmp.gt.s32.totalorder 0, %v715
        %v717 = vsel %vm716, 0, %v715
        %v718 = vsub.s32 32, %v717
        %v719 = vshll.u32 %v710, %v717
        %v720 = vshrl.u32 %v702, %v718
        %v721 = vor.u32 %v719, %v720
        %v722 = vsub.s32 4294967266, %v717
        %v723 = vadd.s32 %v722, 127
        %v724 = vshll.u32 %v723, 23
        %v725 = vor.u32 4788187, %v724
        %v726 = vand.u32 2147483647, %v725
        %v728 = vcvt.s32.f32 %v721
        %v729 = vmul.f32 %v728, %v726
        %v730 = vxor.u32 %v729, 2147483648
        %v731 = vsel %vm648, %v730, %v729
        %v732 = vsub.s32 4, %v708
        %v733 = vsel %vm648, %v732, %v708
        %v734 = vsel %vm647, %v528, %v731
        %v735 = vsel %vm647, 0, %v733
        %v736 = vcosq.f32.pop %v734
        %v737 = vsinq.f32.pop %v734
        %vm738 = vweird.f32 %v528
        %v739 = vand.u32 %v735, 3
        %vm740 = vcmp.lt.s32.totalorder %v739, 2
        %vm741 = vcmp.eq.s32.totalorder %v739, 0
        %v742 = vxor.u32 %v737, 2147483648
        %v743 = vsel %vm741, %v736, %v742
        %vm744 = vcmp.eq.s32.totalorder %v739, 2
        %v745 = vxor.u32 %v736, 2147483648
        %v746 = vsel %vm744, %v745, %v737
        %v747 = vsel %vm740, %v743, %v746
        %v748 = vsel %vm738, nan, %v747
        %v749 = vand.u32 2147483647, %v529
        %vm750 = vcmp.le.f32.partialorder %v749, 0.7853982
        %vm751 = vcmp.lt.s32.totalorder %v529, 0
        %v752 = vand.u32 %v529, 2139095040
        %v753 = vshrl.u32 %v752, 23
        %v754 = vsub.s32 %v753, 127
        %v755 = vand.u32 2147483647, %v529
        %v756 = vand.u32 %v755, 8388607
        %v757 = vor.u32 %v756, 8388608
        %v758 = vsub.s32 0, %v757
        %v759 = vadd.s32 %v754, 1
        %vm760 = vcmp.gt.s32.totalorder %v759, 0
        %v761 = vsel %vm760, %v759, 0
        %v762 = vshrl.u32 %v761, 5
        %v763 = vand.u32 %v761, 31
        %v764 = vsub.s32 32, %v763
        %v765 = vshrl.u32 683565275, %v764
        %v766 = vshll.u32 683565275, %v763
        %v767 = vshrl.u32 2475754826, %v764
        %v768 = vor.u32 %v766, %v767
        %v769 = vshll.u32 2475754826, %v763
        %v770 = vshrl.u32 2131351028, %v764
        %v771 = vor.u32 %v769, %v770
        %v772 = vshll.u32 2131351028, %v763
        %v773 = vshrl.u32 2102212464, %v764
        %v774 = vor.u32 %v772, %v773
        %v775 = vshll.u32 2102212464, %v763
        %v776 = vshrl.u32 920167782, %v764
        %v777 = vor.u32 %v775, %v776
        %v778 = vshll.u32 920167782, %v763
        %v779 = vshrl.u32 1326507024, %v764
        %v780 = vor.u32 %v778, %v779
        %vm781 = vcmp.lt.s32.totalorder %v762, 1
        %vm782 = vcmp.lt.s32.totalorder %v762, 2
        %vm783 = vcmp.lt.s32.totalorder %v762, 3
        %vm784 = vcmp.lt.s32.totalorder %v762, 4
        %v785 = vsel %vm781, %v765, %v768
        %v786 = vsel %vm784, %v774, 2102212464
        %v787 = vsel %vm783, %v771, %v786
        %v788 = vsel %vm782, %v785, %v787
        %v789 = vsel %vm781, %v768, %v771
        %v790 = vsel %vm784, %v777, 920167782
        %v791 = vsel %vm783, %v774, %v790
        %v792 = vsel %vm782, %v789, %v791
        %v793 = vsel %vm781, %v771, %v774
        %v794 = vsel %vm784, %v780, 1326507024
        %v795 = vsel %vm783, %v777, %v794
        %v796 = vsel %vm782, %v793, %v795
        %v797 = vshll.u32 %v757, 8
        %v798 = vmul.u32.u64.compose %v797, %v796
        %v799 = vextract.low.u32 %v798
        %v800 = vextract.high.u32 %v798
        %v801 = vmul.u32.u64.compose %v797, %v792
        %v802 = vextract.low.u32 %v801
        %v803 = vextract.high.u32 %v801
        %v804 = vmul.u32 %v797, %v788
        %v805 = vadd.s32 %v800, %v802
        %vm806 = vc.u32 %v800, %v802
        %v807 = vadd.s32 %v803, 1
        %v808 = vsel %vm806, %v807, %v803
        %v809 = vadd.s32 %v804, %v808
        %v810 = vadd.s32 %v809, 536870912
        %v811 = vshrl.u32 %v810, 30
        %v812 = vshll.u32 %v811, 30
        %v813 = vsub.s32 %v809, %v812
        %vm814 = vcmp.lt.s32.totalorder %v813, 0
        %v815 = vsub.s32 0, %v813
        %v816 = vsel %vm814, %v815, %v813
        %v817 = vclz %v816
        %v818 = vsub.s32 %v817, 2
        %vm819 = vcmp.gt.s32.totalorder 0, %v818
        %v820 = vsel %vm819, 0, %v818
        %v821 = vsub.s32 32, %v820
        %v822 = vshll.u32 %v813, %v820
        %v823 = vshrl.u32 %v805, %v821
        %v824 = vor.u32 %v822, %v823
        %v825 = vsub.s32 4294967266, %v820
        %v826 = vadd.s32 %v825, 127
        %v827 = vshll.u32 %v826, 23
        %v828 = vor.u32 4788187, %v827
        %v829 = vand.u32 2147483647, %v828
        %v831 = vcvt.s32.f32 %v824
        %v832 = vmul.f32 %v831, %v829
        %v833 = vxor.u32 %v832, 2147483648
        %v834 = vsel %vm751, %v833, %v832
        %v835 = vsub.s32 4, %v811
        %v836 = vsel %vm751, %v835, %v811
        %v837 = vsel %vm750, %v529, %v834
        %v838 = vsel %vm750, 0, %v836
        %v839 = vcosq.f32.pop %v837
        %v840 = vsinq.f32.pop %v837
        %vm841 = vweird.f32 %v529
        %v842 = vand.u32 %v838, 3
        %vm843 = vcmp.lt.s32.totalorder %v842, 2
        %vm844 = vcmp.eq.s32.totalorder %v842, 0
        %v845 = vxor.u32 %v840, 2147483648
        %v846 = vsel %vm844, %v839, %v845
        %vm847 = vcmp.eq.s32.totalorder %v842, 2
        %v848 = vxor.u32 %v839, 2147483648
        %v849 = vsel %vm847, %v848, %v840
        %v850 = vsel %vm843, %v846, %v849
        %v851 = vsel %vm841, nan, %v850
        %v852 = vand.u32 2147483647, %v530
        %vm853 = vcmp.le.f32.partialorder %v852, 0.7853982
        %vm854 = vcmp.lt.s32.totalorder %v530, 0
        %v855 = vand.u32 %v530, 2139095040
        %v856 = vshrl.u32 %v855, 23
        %v857 = vsub.s32 %v856, 127
        %v858 = vand.u32 2147483647, %v530
        %v859 = vand.u32 %v858, 8388607
        %v860 = vor.u32 %v859, 8388608
        %v861 = vsub.s32 0, %v860
        %v862 = vadd.s32 %v857, 1
        %vm863 = vcmp.gt.s32.totalorder %v862, 0
        %v864 = vsel %vm863, %v862, 0
        %v865 = vshrl.u32 %v864, 5
        %v866 = vand.u32 %v864, 31
        %v867 = vsub.s32 32, %v866
        %v868 = vshrl.u32 683565275, %v867
        %v869 = vshll.u32 683565275, %v866
        %v870 = vshrl.u32 2475754826, %v867
        %v871 = vor.u32 %v869, %v870
        %v872 = vshll.u32 2475754826, %v866
        %v873 = vshrl.u32 2131351028, %v867
        %v874 = vor.u32 %v872, %v873
        %v875 = vshll.u32 2131351028, %v866
        %v876 = vshrl.u32 2102212464, %v867
        %v877 = vor.u32 %v875, %v876
        %v878 = vshll.u32 2102212464, %v866
        %v879 = vshrl.u32 920167782, %v867
        %v880 = vor.u32 %v878, %v879
        %v881 = vshll.u32 920167782, %v866
        %v882 = vshrl.u32 1326507024, %v867
        %v883 = vor.u32 %v881, %v882
        %vm884 = vcmp.lt.s32.totalorder %v865, 1
        %vm885 = vcmp.lt.s32.totalorder %v865, 2
        %vm886 = vcmp.lt.s32.totalorder %v865, 3
        %vm887 = vcmp.lt.s32.totalorder %v865, 4
        %v888 = vsel %vm884, %v868, %v871
        %v889 = vsel %vm887, %v877, 2102212464
        %v890 = vsel %vm886, %v874, %v889
        %v891 = vsel %vm885, %v888, %v890
        %v892 = vsel %vm884, %v871, %v874
        %v893 = vsel %vm887, %v880, 920167782
        %v894 = vsel %vm886, %v877, %v893
        %v895 = vsel %vm885, %v892, %v894
        %v896 = vsel %vm884, %v874, %v877
        %v897 = vsel %vm887, %v883, 1326507024
        %v898 = vsel %vm886, %v880, %v897
        %v899 = vsel %vm885, %v896, %v898
        %v900 = vshll.u32 %v860, 8
        %v901 = vmul.u32.u64.compose %v900, %v899
        %v902 = vextract.low.u32 %v901
        %v903 = vextract.high.u32 %v901
        %v904 = vmul.u32.u64.compose %v900, %v895
        %v905 = vextract.low.u32 %v904
        %v906 = vextract.high.u32 %v904
        %v907 = vmul.u32 %v900, %v891
        %v908 = vadd.s32 %v903, %v905
        %vm909 = vc.u32 %v903, %v905
        %v910 = vadd.s32 %v906, 1
        %v911 = vsel %vm909, %v910, %v906
        %v912 = vadd.s32 %v907, %v911
        %v913 = vadd.s32 %v912, 536870912
        %v914 = vshrl.u32 %v913, 30
        %v915 = vshll.u32 %v914, 30
        %v916 = vsub.s32 %v912, %v915
        %vm917 = vcmp.lt.s32.totalorder %v916, 0
        %v918 = vsub.s32 0, %v916
        %v919 = vsel %vm917, %v918, %v916
        %v920 = vclz %v919
        %v921 = vsub.s32 %v920, 2
        %vm922 = vcmp.gt.s32.totalorder 0, %v921
        %v923 = vsel %vm922, 0, %v921
        %v924 = vsub.s32 32, %v923
        %v925 = vshll.u32 %v916, %v923
        %v926 = vshrl.u32 %v908, %v924
        %v927 = vor.u32 %v925, %v926
        %v928 = vsub.s32 4294967266, %v923
        %v929 = vadd.s32 %v928, 127
        %v930 = vshll.u32 %v929, 23
        %v931 = vor.u32 4788187, %v930
        %v932 = vand.u32 2147483647, %v931
        %v934 = vcvt.s32.f32 %v927
        %v935 = vmul.f32 %v934, %v932
        %v936 = vxor.u32 %v935, 2147483648
        %v937 = vsel %vm854, %v936, %v935
        %v938 = vsub.s32 4, %v914
        %v939 = vsel %vm854, %v938, %v914
        %v940 = vsel %vm853, %v530, %v937
        %v941 = vsel %vm853, 0, %v939
        %v942 = vcosq.f32.pop %v940
        %v943 = vsinq.f32.pop %v940
        %vm944 = vweird.f32 %v530
        %v945 = vand.u32 %v941, 3
        %vm946 = vcmp.lt.s32.totalorder %v945, 2
        %vm947 = vcmp.eq.s32.totalorder %v945, 0
        %v948 = vxor.u32 %v943, 2147483648
        %v949 = vsel %vm947, %v942, %v948
        %vm950 = vcmp.eq.s32.totalorder %v945, 2
        %v951 = vxor.u32 %v942, 2147483648
        %v952 = vsel %vm950, %v951, %v943
        %v953 = vsel %vm946, %v949, %v952
        %v954 = vsel %vm944, nan, %v953
        %v955 = vand.u32 2147483647, %v531
        %vm956 = vcmp.le.f32.partialorder %v955, 0.7853982
        %vm957 = vcmp.lt.s32.totalorder %v531, 0
        %v958 = vand.u32 %v531, 2139095040
        %v959 = vshrl.u32 %v958, 23
        %v960 = vsub.s32 %v959, 127
        %v961 = vand.u32 2147483647, %v531
        %v962 = vand.u32 %v961, 8388607
        %v963 = vor.u32 %v962, 8388608
        %v964 = vsub.s32 0, %v963
        %v965 = vadd.s32 %v960, 1
        %vm966 = vcmp.gt.s32.totalorder %v965, 0
        %v967 = vsel %vm966, %v965, 0
        %v968 = vshrl.u32 %v967, 5
        %v969 = vand.u32 %v967, 31
        %v970 = vsub.s32 32, %v969
        %v971 = vshrl.u32 683565275, %v970
        %v972 = vshll.u32 683565275, %v969
        %v973 = vshrl.u32 2475754826, %v970
        %v974 = vor.u32 %v972, %v973
        %v975 = vshll.u32 2475754826, %v969
        %v976 = vshrl.u32 2131351028, %v970
        %v977 = vor.u32 %v975, %v976
        %v978 = vshll.u32 2131351028, %v969
        %v979 = vshrl.u32 2102212464, %v970
        %v980 = vor.u32 %v978, %v979
        %v981 = vshll.u32 2102212464, %v969
        %v982 = vshrl.u32 920167782, %v970
        %v983 = vor.u32 %v981, %v982
        %v984 = vshll.u32 920167782, %v969
        %v985 = vshrl.u32 1326507024, %v970
        %v986 = vor.u32 %v984, %v985
        %vm987 = vcmp.lt.s32.totalorder %v968, 1
        %vm988 = vcmp.lt.s32.totalorder %v968, 2
        %vm989 = vcmp.lt.s32.totalorder %v968, 3
        %vm990 = vcmp.lt.s32.totalorder %v968, 4
        %v991 = vsel %vm987, %v971, %v974
        %v992 = vsel %vm990, %v980, 2102212464
        %v993 = vsel %vm989, %v977, %v992
        %v994 = vsel %vm988, %v991, %v993
        %v995 = vsel %vm987, %v974, %v977
        %v996 = vsel %vm990, %v983, 920167782
        %v997 = vsel %vm989, %v980, %v996
        %v998 = vsel %vm988, %v995, %v997
        %v999 = vsel %vm987, %v977, %v980
        %v1000 = vsel %vm990, %v986, 1326507024
        %v1001 = vsel %vm989, %v983, %v1000
        %v1002 = vsel %vm988, %v999, %v1001
        %v1003 = vshll.u32 %v963, 8
        %v1004 = vmul.u32.u64.compose %v1003, %v1002
        %v1005 = vextract.low.u32 %v1004
        %v1006 = vextract.high.u32 %v1004
        %v1007 = vmul.u32.u64.compose %v1003, %v998
        %v1008 = vextract.low.u32 %v1007
        %v1009 = vextract.high.u32 %v1007
        %v1010 = vmul.u32 %v1003, %v994
        %v1011 = vadd.s32 %v1006, %v1008
        %vm1012 = vc.u32 %v1006, %v1008
        %v1013 = vadd.s32 %v1009, 1
        %v1014 = vsel %vm1012, %v1013, %v1009
        %v1015 = vadd.s32 %v1010, %v1014
        %v1016 = vadd.s32 %v1015, 536870912
        %v1017 = vshrl.u32 %v1016, 30
        %v1018 = vshll.u32 %v1017, 30
        %v1019 = vsub.s32 %v1015, %v1018
        %vm1020 = vcmp.lt.s32.totalorder %v1019, 0
        %v1021 = vsub.s32 0, %v1019
        %v1022 = vsel %vm1020, %v1021, %v1019
        %v1023 = vclz %v1022
        %v1024 = vsub.s32 %v1023, 2
        %vm1025 = vcmp.gt.s32.totalorder 0, %v1024
        %v1026 = vsel %vm1025, 0, %v1024
        %v1027 = vsub.s32 32, %v1026
        %v1028 = vshll.u32 %v1019, %v1026
        %v1029 = vshrl.u32 %v1011, %v1027
        %v1030 = vor.u32 %v1028, %v1029
        %v1031 = vsub.s32 4294967266, %v1026
        %v1032 = vadd.s32 %v1031, 127
        %v1033 = vshll.u32 %v1032, 23
        %v1034 = vor.u32 4788187, %v1033
        %v1035 = vand.u32 2147483647, %v1034
        %v1037 = vcvt.s32.f32 %v1030
        %v1038 = vmul.f32 %v1037, %v1035
        %v1039 = vxor.u32 %v1038, 2147483648
        %v1040 = vsel %vm957, %v1039, %v1038
        %v1041 = vsub.s32 4, %v1017
        %v1042 = vsel %vm957, %v1041, %v1017
        %v1043 = vsel %vm956, %v531, %v1040
        %v1044 = vsel %vm956, 0, %v1042
        %v1045 = vcosq.f32.pop %v1043
        %v1046 = vsinq.f32.pop %v1043
        %vm1047 = vweird.f32 %v531
        %v1048 = vand.u32 %v1044, 3
        %vm1049 = vcmp.lt.s32.totalorder %v1048, 2
        %vm1050 = vcmp.eq.s32.totalorder %v1048, 0
        %v1051 = vxor.u32 %v1046, 2147483648
        %v1052 = vsel %vm1050, %v1045, %v1051
        %vm1053 = vcmp.eq.s32.totalorder %v1048, 2
        %v1054 = vxor.u32 %v1045, 2147483648
        %v1055 = vsel %vm1053, %v1054, %v1046
        %v1056 = vsel %vm1049, %v1052, %v1055
        %v1057 = vsel %vm1047, nan, %v1056
        %v1058 = vand.u32 2147483647, %v532
        %vm1059 = vcmp.le.f32.partialorder %v1058, 0.7853982
        %vm1060 = vcmp.lt.s32.totalorder %v532, 0
        %v1061 = vand.u32 %v532, 2139095040
        %v1062 = vshrl.u32 %v1061, 23
        %v1063 = vsub.s32 %v1062, 127
        %v1064 = vand.u32 2147483647, %v532
        %v1065 = vand.u32 %v1064, 8388607
        %v1066 = vor.u32 %v1065, 8388608
        %v1067 = vsub.s32 0, %v1066
        %v1068 = vadd.s32 %v1063, 1
        %vm1069 = vcmp.gt.s32.totalorder %v1068, 0
        %v1070 = vsel %vm1069, %v1068, 0
        %v1071 = vshrl.u32 %v1070, 5
        %v1072 = vand.u32 %v1070, 31
        %v1073 = vsub.s32 32, %v1072
        %v1074 = vshrl.u32 683565275, %v1073
        %v1075 = vshll.u32 683565275, %v1072
        %v1076 = vshrl.u32 2475754826, %v1073
        %v1077 = vor.u32 %v1075, %v1076
        %v1078 = vshll.u32 2475754826, %v1072
        %v1079 = vshrl.u32 2131351028, %v1073
        %v1080 = vor.u32 %v1078, %v1079
        %v1081 = vshll.u32 2131351028, %v1072
        %v1082 = vshrl.u32 2102212464, %v1073
        %v1083 = vor.u32 %v1081, %v1082
        %v1084 = vshll.u32 2102212464, %v1072
        %v1085 = vshrl.u32 920167782, %v1073
        %v1086 = vor.u32 %v1084, %v1085
        %v1087 = vshll.u32 920167782, %v1072
        %v1088 = vshrl.u32 1326507024, %v1073
        %v1089 = vor.u32 %v1087, %v1088
        %vm1090 = vcmp.lt.s32.totalorder %v1071, 1
        %vm1091 = vcmp.lt.s32.totalorder %v1071, 2
        %vm1092 = vcmp.lt.s32.totalorder %v1071, 3
        %vm1093 = vcmp.lt.s32.totalorder %v1071, 4
        %v1094 = vsel %vm1090, %v1074, %v1077
        %v1095 = vsel %vm1093, %v1083, 2102212464
        %v1096 = vsel %vm1092, %v1080, %v1095
        %v1097 = vsel %vm1091, %v1094, %v1096
        %v1098 = vsel %vm1090, %v1077, %v1080
        %v1099 = vsel %vm1093, %v1086, 920167782
        %v1100 = vsel %vm1092, %v1083, %v1099
        %v1101 = vsel %vm1091, %v1098, %v1100
        %v1102 = vsel %vm1090, %v1080, %v1083
        %v1103 = vsel %vm1093, %v1089, 1326507024
        %v1104 = vsel %vm1092, %v1086, %v1103
        %v1105 = vsel %vm1091, %v1102, %v1104
        %v1106 = vshll.u32 %v1066, 8
        %v1107 = vmul.u32.u64.compose %v1106, %v1105
        %v1108 = vextract.low.u32 %v1107
        %v1109 = vextract.high.u32 %v1107
        %v1110 = vmul.u32.u64.compose %v1106, %v1101
        %v1111 = vextract.low.u32 %v1110
        %v1112 = vextract.high.u32 %v1110
        %v1113 = vmul.u32 %v1106, %v1097
        %v1114 = vadd.s32 %v1109, %v1111
        %vm1115 = vc.u32 %v1109, %v1111
        %v1116 = vadd.s32 %v1112, 1
        %v1117 = vsel %vm1115, %v1116, %v1112
        %v1118 = vadd.s32 %v1113, %v1117
        %v1119 = vadd.s32 %v1118, 536870912
        %v1120 = vshrl.u32 %v1119, 30
        %v1121 = vshll.u32 %v1120, 30
        %v1122 = vsub.s32 %v1118, %v1121
        %vm1123 = vcmp.lt.s32.totalorder %v1122, 0
        %v1124 = vsub.s32 0, %v1122
        %v1125 = vsel %vm1123, %v1124, %v1122
        %v1126 = vclz %v1125
        %v1127 = vsub.s32 %v1126, 2
        %vm1128 = vcmp.gt.s32.totalorder 0, %v1127
        %v1129 = vsel %vm1128, 0, %v1127
        %v1130 = vsub.s32 32, %v1129
        %v1131 = vshll.u32 %v1122, %v1129
        %v1132 = vshrl.u32 %v1114, %v1130
        %v1133 = vor.u32 %v1131, %v1132
        %v1134 = vsub.s32 4294967266, %v1129
        %v1135 = vadd.s32 %v1134, 127
        %v1136 = vshll.u32 %v1135, 23
        %v1137 = vor.u32 4788187, %v1136
        %v1138 = vand.u32 2147483647, %v1137
        %v1140 = vcvt.s32.f32 %v1133
        %v1141 = vmul.f32 %v1140, %v1138
        %v1142 = vxor.u32 %v1141, 2147483648
        %v1143 = vsel %vm1060, %v1142, %v1141
        %v1144 = vsub.s32 4, %v1120
        %v1145 = vsel %vm1060, %v1144, %v1120
        %v1146 = vsel %vm1059, %v532, %v1143
        %v1147 = vsel %vm1059, 0, %v1145
        %v1148 = vcosq.f32.pop %v1146
        %v1149 = vsinq.f32.pop %v1146
        %vm1150 = vweird.f32 %v532
        %v1151 = vand.u32 %v1147, 3
        %vm1152 = vcmp.lt.s32.totalorder %v1151, 2
        %vm1153 = vcmp.eq.s32.totalorder %v1151, 0
        %v1154 = vxor.u32 %v1149, 2147483648
        %v1155 = vsel %vm1153, %v1148, %v1154
        %vm1156 = vcmp.eq.s32.totalorder %v1151, 2
        %v1157 = vxor.u32 %v1148, 2147483648
        %v1158 = vsel %vm1156, %v1157, %v1149
        %v1159 = vsel %vm1152, %v1155, %v1158
        %v1160 = vsel %vm1150, nan, %v1159
        %v1161 = vand.u32 2147483647, %v533
        %vm1162 = vcmp.le.f32.partialorder %v1161, 0.7853982
        %vm1163 = vcmp.lt.s32.totalorder %v533, 0
        %v1164 = vand.u32 %v533, 2139095040
        %v1165 = vshrl.u32 %v1164, 23
        %v1166 = vsub.s32 %v1165, 127
        %v1167 = vand.u32 2147483647, %v533
        %v1168 = vand.u32 %v1167, 8388607
        %v1169 = vor.u32 %v1168, 8388608
        %v1170 = vsub.s32 0, %v1169
        %v1171 = vadd.s32 %v1166, 1
        %vm1172 = vcmp.gt.s32.totalorder %v1171, 0
        %v1173 = vsel %vm1172, %v1171, 0
        %v1174 = vshrl.u32 %v1173, 5
        %v1175 = vand.u32 %v1173, 31
        %v1176 = vsub.s32 32, %v1175
        %v1177 = vshrl.u32 683565275, %v1176
        %v1178 = vshll.u32 683565275, %v1175
        %v1179 = vshrl.u32 2475754826, %v1176
        %v1180 = vor.u32 %v1178, %v1179
        %v1181 = vshll.u32 2475754826, %v1175
        %v1182 = vshrl.u32 2131351028, %v1176
        %v1183 = vor.u32 %v1181, %v1182
        %v1184 = vshll.u32 2131351028, %v1175
        %v1185 = vshrl.u32 2102212464, %v1176
        %v1186 = vor.u32 %v1184, %v1185
        %v1187 = vshll.u32 2102212464, %v1175
        %v1188 = vshrl.u32 920167782, %v1176
        %v1189 = vor.u32 %v1187, %v1188
        %v1190 = vshll.u32 920167782, %v1175
        %v1191 = vshrl.u32 1326507024, %v1176
        %v1192 = vor.u32 %v1190, %v1191
        %vm1193 = vcmp.lt.s32.totalorder %v1174, 1
        %vm1194 = vcmp.lt.s32.totalorder %v1174, 2
        %vm1195 = vcmp.lt.s32.totalorder %v1174, 3
        %vm1196 = vcmp.lt.s32.totalorder %v1174, 4
        %v1197 = vsel %vm1193, %v1177, %v1180
        %v1198 = vsel %vm1196, %v1186, 2102212464
        %v1199 = vsel %vm1195, %v1183, %v1198
        %v1200 = vsel %vm1194, %v1197, %v1199
        %v1201 = vsel %vm1193, %v1180, %v1183
        %v1202 = vsel %vm1196, %v1189, 920167782
        %v1203 = vsel %vm1195, %v1186, %v1202
        %v1204 = vsel %vm1194, %v1201, %v1203
        %v1205 = vsel %vm1193, %v1183, %v1186
        %v1206 = vsel %vm1196, %v1192, 1326507024
        %v1207 = vsel %vm1195, %v1189, %v1206
        %v1208 = vsel %vm1194, %v1205, %v1207
        %v1209 = vshll.u32 %v1169, 8
        %v1210 = vmul.u32.u64.compose %v1209, %v1208
        %v1211 = vextract.low.u32 %v1210
        %v1212 = vextract.high.u32 %v1210
        %v1213 = vmul.u32.u64.compose %v1209, %v1204
        %v1214 = vextract.low.u32 %v1213
        %v1215 = vextract.high.u32 %v1213
        %v1216 = vmul.u32 %v1209, %v1200
        %v1217 = vadd.s32 %v1212, %v1214
        %vm1218 = vc.u32 %v1212, %v1214
        %v1219 = vadd.s32 %v1215, 1
        %v1220 = vsel %vm1218, %v1219, %v1215
        %v1221 = vadd.s32 %v1216, %v1220
        %v1222 = vadd.s32 %v1221, 536870912
        %v1223 = vshrl.u32 %v1222, 30
        %v1224 = vshll.u32 %v1223, 30
        %v1225 = vsub.s32 %v1221, %v1224
        %vm1226 = vcmp.lt.s32.totalorder %v1225, 0
        %v1227 = vsub.s32 0, %v1225
        %v1228 = vsel %vm1226, %v1227, %v1225
        %v1229 = vclz %v1228
        %v1230 = vsub.s32 %v1229, 2
        %vm1231 = vcmp.gt.s32.totalorder 0, %v1230
        %v1232 = vsel %vm1231, 0, %v1230
        %v1233 = vsub.s32 32, %v1232
        %v1234 = vshll.u32 %v1225, %v1232
        %v1235 = vshrl.u32 %v1217, %v1233
        %v1236 = vor.u32 %v1234, %v1235
        %v1237 = vsub.s32 4294967266, %v1232
        %v1238 = vadd.s32 %v1237, 127
        %v1239 = vshll.u32 %v1238, 23
        %v1240 = vor.u32 4788187, %v1239
        %v1241 = vand.u32 2147483647, %v1240
        %v1243 = vcvt.s32.f32 %v1236
        %v1244 = vmul.f32 %v1243, %v1241
        %v1245 = vxor.u32 %v1244, 2147483648
        %v1246 = vsel %vm1163, %v1245, %v1244
        %v1247 = vsub.s32 4, %v1223
        %v1248 = vsel %vm1163, %v1247, %v1223
        %v1249 = vsel %vm1162, %v533, %v1246
        %v1250 = vsel %vm1162, 0, %v1248
        %v1251 = vcosq.f32.pop %v1249
        %v1252 = vsinq.f32.pop %v1249
        %vm1253 = vweird.f32 %v533
        %v1254 = vand.u32 %v1250, 3
        %vm1255 = vcmp.lt.s32.totalorder %v1254, 2
        %vm1256 = vcmp.eq.s32.totalorder %v1254, 0
        %v1257 = vxor.u32 %v1252, 2147483648
        %v1258 = vsel %vm1256, %v1251, %v1257
        %vm1259 = vcmp.eq.s32.totalorder %v1254, 2
        %v1260 = vxor.u32 %v1251, 2147483648
        %v1261 = vsel %vm1259, %v1260, %v1252
        %v1262 = vsel %vm1255, %v1258, %v1261
        %v1263 = vsel %vm1253, nan, %v1262
        %v1264 = vand.u32 2147483647, %v534
        %vm1265 = vcmp.le.f32.partialorder %v1264, 0.7853982
        %vm1266 = vcmp.lt.s32.totalorder %v534, 0
        %v1267 = vand.u32 %v534, 2139095040
        %v1268 = vshrl.u32 %v1267, 23
        %v1269 = vsub.s32 %v1268, 127
        %v1270 = vand.u32 2147483647, %v534
        %v1271 = vand.u32 %v1270, 8388607
        %v1272 = vor.u32 %v1271, 8388608
        %v1273 = vsub.s32 0, %v1272
        %v1274 = vadd.s32 %v1269, 1
        %vm1275 = vcmp.gt.s32.totalorder %v1274, 0
        %v1276 = vsel %vm1275, %v1274, 0
        %v1277 = vshrl.u32 %v1276, 5
        %v1278 = vand.u32 %v1276, 31
        %v1279 = vsub.s32 32, %v1278
        %v1280 = vshrl.u32 683565275, %v1279
        %v1281 = vshll.u32 683565275, %v1278
        %v1282 = vshrl.u32 2475754826, %v1279
        %v1283 = vor.u32 %v1281, %v1282
        %v1284 = vshll.u32 2475754826, %v1278
        %v1285 = vshrl.u32 2131351028, %v1279
        %v1286 = vor.u32 %v1284, %v1285
        %v1287 = vshll.u32 2131351028, %v1278
        %v1288 = vshrl.u32 2102212464, %v1279
        %v1289 = vor.u32 %v1287, %v1288
        %v1290 = vshll.u32 2102212464, %v1278
        %v1291 = vshrl.u32 920167782, %v1279
        %v1292 = vor.u32 %v1290, %v1291
        %v1293 = vshll.u32 920167782, %v1278
        %v1294 = vshrl.u32 1326507024, %v1279
        %v1295 = vor.u32 %v1293, %v1294
        %vm1296 = vcmp.lt.s32.totalorder %v1277, 1
        %vm1297 = vcmp.lt.s32.totalorder %v1277, 2
        %vm1298 = vcmp.lt.s32.totalorder %v1277, 3
        %vm1299 = vcmp.lt.s32.totalorder %v1277, 4
        %v1300 = vsel %vm1296, %v1280, %v1283
        %v1301 = vsel %vm1299, %v1289, 2102212464
        %v1302 = vsel %vm1298, %v1286, %v1301
        %v1303 = vsel %vm1297, %v1300, %v1302
        %v1304 = vsel %vm1296, %v1283, %v1286
        %v1305 = vsel %vm1299, %v1292, 920167782
        %v1306 = vsel %vm1298, %v1289, %v1305
        %v1307 = vsel %vm1297, %v1304, %v1306
        %v1308 = vsel %vm1296, %v1286, %v1289
        %v1309 = vsel %vm1299, %v1295, 1326507024
        %v1310 = vsel %vm1298, %v1292, %v1309
        %v1311 = vsel %vm1297, %v1308, %v1310
        %v1312 = vshll.u32 %v1272, 8
        %v1313 = vmul.u32.u64.compose %v1312, %v1311
        %v1314 = vextract.low.u32 %v1313
        %v1315 = vextract.high.u32 %v1313
        %v1316 = vmul.u32.u64.compose %v1312, %v1307
        %v1317 = vextract.low.u32 %v1316
        %v1318 = vextract.high.u32 %v1316
        %v1319 = vmul.u32 %v1312, %v1303
        %v1320 = vadd.s32 %v1315, %v1317
        %vm1321 = vc.u32 %v1315, %v1317
        %v1322 = vadd.s32 %v1318, 1
        %v1323 = vsel %vm1321, %v1322, %v1318
        %v1324 = vadd.s32 %v1319, %v1323
        %v1325 = vadd.s32 %v1324, 536870912
        %v1326 = vshrl.u32 %v1325, 30
        %v1327 = vshll.u32 %v1326, 30
        %v1328 = vsub.s32 %v1324, %v1327
        %vm1329 = vcmp.lt.s32.totalorder %v1328, 0
        %v1330 = vsub.s32 0, %v1328
        %v1331 = vsel %vm1329, %v1330, %v1328
        %v1332 = vclz %v1331
        %v1333 = vsub.s32 %v1332, 2
        %vm1334 = vcmp.gt.s32.totalorder 0, %v1333
        %v1335 = vsel %vm1334, 0, %v1333
        %v1336 = vsub.s32 32, %v1335
        %v1337 = vshll.u32 %v1328, %v1335
        %v1338 = vshrl.u32 %v1320, %v1336
        %v1339 = vor.u32 %v1337, %v1338
        %v1340 = vsub.s32 4294967266, %v1335
        %v1341 = vadd.s32 %v1340, 127
        %v1342 = vshll.u32 %v1341, 23
        %v1343 = vor.u32 4788187, %v1342
        %v1344 = vand.u32 2147483647, %v1343
        %v1346 = vcvt.s32.f32 %v1339
        %v1347 = vmul.f32 %v1346, %v1344
        %v1348 = vxor.u32 %v1347, 2147483648
        %v1349 = vsel %vm1266, %v1348, %v1347
        %v1350 = vsub.s32 4, %v1326
        %v1351 = vsel %vm1266, %v1350, %v1326
        %v1352 = vsel %vm1265, %v534, %v1349
        %v1353 = vsel %vm1265, 0, %v1351
        %v1354 = vcosq.f32.pop %v1352
        %v1355 = vsinq.f32.pop %v1352
        %vm1356 = vweird.f32 %v534
        %v1357 = vand.u32 %v1353, 3
        %vm1358 = vcmp.lt.s32.totalorder %v1357, 2
        %vm1359 = vcmp.eq.s32.totalorder %v1357, 0
        %v1360 = vxor.u32 %v1355, 2147483648
        %v1361 = vsel %vm1359, %v1354, %v1360
        %vm1362 = vcmp.eq.s32.totalorder %v1357, 2
        %v1363 = vxor.u32 %v1354, 2147483648
        %v1364 = vsel %vm1362, %v1363, %v1355
        %v1365 = vsel %vm1358, %v1361, %v1364
        %v1366 = vsel %vm1356, nan, %v1365
        %v1367 = vand.u32 2147483647, %v535
        %vm1368 = vcmp.le.f32.partialorder %v1367, 0.7853982
        %vm1369 = vcmp.lt.s32.totalorder %v535, 0
        %v1370 = vand.u32 %v535, 2139095040
        %v1371 = vshrl.u32 %v1370, 23
        %v1372 = vsub.s32 %v1371, 127
        %v1373 = vand.u32 2147483647, %v535
        %v1374 = vand.u32 %v1373, 8388607
        %v1375 = vor.u32 %v1374, 8388608
        %v1376 = vsub.s32 0, %v1375
        %v1377 = vadd.s32 %v1372, 1
        %vm1378 = vcmp.gt.s32.totalorder %v1377, 0
        %v1379 = vsel %vm1378, %v1377, 0
        %v1380 = vshrl.u32 %v1379, 5
        %v1381 = vand.u32 %v1379, 31
        %v1382 = vsub.s32 32, %v1381
        %v1383 = vshrl.u32 683565275, %v1382
        %v1384 = vshll.u32 683565275, %v1381
        %v1385 = vshrl.u32 2475754826, %v1382
        %v1386 = vor.u32 %v1384, %v1385
        %v1387 = vshll.u32 2475754826, %v1381
        %v1388 = vshrl.u32 2131351028, %v1382
        %v1389 = vor.u32 %v1387, %v1388
        %v1390 = vshll.u32 2131351028, %v1381
        %v1391 = vshrl.u32 2102212464, %v1382
        %v1392 = vor.u32 %v1390, %v1391
        %v1393 = vshll.u32 2102212464, %v1381
        %v1394 = vshrl.u32 920167782, %v1382
        %v1395 = vor.u32 %v1393, %v1394
        %v1396 = vshll.u32 920167782, %v1381
        %v1397 = vshrl.u32 1326507024, %v1382
        %v1398 = vor.u32 %v1396, %v1397
        %vm1399 = vcmp.lt.s32.totalorder %v1380, 1
        %vm1400 = vcmp.lt.s32.totalorder %v1380, 2
        %vm1401 = vcmp.lt.s32.totalorder %v1380, 3
        %vm1402 = vcmp.lt.s32.totalorder %v1380, 4
        %v1403 = vsel %vm1399, %v1383, %v1386
        %v1404 = vsel %vm1402, %v1392, 2102212464
        %v1405 = vsel %vm1401, %v1389, %v1404
        %v1406 = vsel %vm1400, %v1403, %v1405
        %v1407 = vsel %vm1399, %v1386, %v1389
        %v1408 = vsel %vm1402, %v1395, 920167782
        %v1409 = vsel %vm1401, %v1392, %v1408
        %v1410 = vsel %vm1400, %v1407, %v1409
        %v1411 = vsel %vm1399, %v1389, %v1392
        %v1412 = vsel %vm1402, %v1398, 1326507024
        %v1413 = vsel %vm1401, %v1395, %v1412
        %v1414 = vsel %vm1400, %v1411, %v1413
        %v1415 = vshll.u32 %v1375, 8
        %v1416 = vmul.u32.u64.compose %v1415, %v1414
        %v1417 = vextract.low.u32 %v1416
        %v1418 = vextract.high.u32 %v1416
        %v1419 = vmul.u32.u64.compose %v1415, %v1410
        %v1420 = vextract.low.u32 %v1419
        %v1421 = vextract.high.u32 %v1419
        %v1422 = vmul.u32 %v1415, %v1406
        %v1423 = vadd.s32 %v1418, %v1420
        %vm1424 = vc.u32 %v1418, %v1420
        %v1425 = vadd.s32 %v1421, 1
        %v1426 = vsel %vm1424, %v1425, %v1421
        %v1427 = vadd.s32 %v1422, %v1426
        %v1428 = vadd.s32 %v1427, 536870912
        %v1429 = vshrl.u32 %v1428, 30
        %v1430 = vshll.u32 %v1429, 30
        %v1431 = vsub.s32 %v1427, %v1430
        %vm1432 = vcmp.lt.s32.totalorder %v1431, 0
        %v1433 = vsub.s32 0, %v1431
        %v1434 = vsel %vm1432, %v1433, %v1431
        %v1435 = vclz %v1434
        %v1436 = vsub.s32 %v1435, 2
        %vm1437 = vcmp.gt.s32.totalorder 0, %v1436
        %v1438 = vsel %vm1437, 0, %v1436
        %v1439 = vsub.s32 32, %v1438
        %v1440 = vshll.u32 %v1431, %v1438
        %v1441 = vshrl.u32 %v1423, %v1439
        %v1442 = vor.u32 %v1440, %v1441
        %v1443 = vsub.s32 4294967266, %v1438
        %v1444 = vadd.s32 %v1443, 127
        %v1445 = vshll.u32 %v1444, 23
        %v1446 = vor.u32 4788187, %v1445
        %v1447 = vand.u32 2147483647, %v1446
        %v1449 = vcvt.s32.f32 %v1442
        %v1450 = vmul.f32 %v1449, %v1447
        %v1451 = vxor.u32 %v1450, 2147483648
        %v1452 = vsel %vm1369, %v1451, %v1450
        %v1453 = vsub.s32 4, %v1429
        %v1454 = vsel %vm1369, %v1453, %v1429
        %v1455 = vsel %vm1368, %v535, %v1452
        %v1456 = vsel %vm1368, 0, %v1454
        %v1457 = vcosq.f32.pop %v1455
        %v1458 = vsinq.f32.pop %v1455
        %vm1459 = vweird.f32 %v535
        %v1460 = vand.u32 %v1456, 3
        %vm1461 = vcmp.lt.s32.totalorder %v1460, 2
        %vm1462 = vcmp.eq.s32.totalorder %v1460, 0
        %v1463 = vxor.u32 %v1458, 2147483648
        %v1464 = vsel %vm1462, %v1457, %v1463
        %vm1465 = vcmp.eq.s32.totalorder %v1460, 2
        %v1466 = vxor.u32 %v1457, 2147483648
        %v1467 = vsel %vm1465, %v1466, %v1458
        %v1468 = vsel %vm1461, %v1464, %v1467
        %v1469 = vsel %vm1459, nan, %v1468
        %v1470 = vand.u32 2147483647, %v536
        %vm1471 = vcmp.le.f32.partialorder %v1470, 0.7853982
        %vm1472 = vcmp.lt.s32.totalorder %v536, 0
        %v1473 = vand.u32 %v536, 2139095040
        %v1474 = vshrl.u32 %v1473, 23
        %v1475 = vsub.s32 %v1474, 127
        %v1476 = vand.u32 2147483647, %v536
        %v1477 = vand.u32 %v1476, 8388607
        %v1478 = vor.u32 %v1477, 8388608
        %v1479 = vsub.s32 0, %v1478
        %v1480 = vadd.s32 %v1475, 1
        %vm1481 = vcmp.gt.s32.totalorder %v1480, 0
        %v1482 = vsel %vm1481, %v1480, 0
        %v1483 = vshrl.u32 %v1482, 5
        %v1484 = vand.u32 %v1482, 31
        %v1485 = vsub.s32 32, %v1484
        %v1486 = vshrl.u32 683565275, %v1485
        %v1487 = vshll.u32 683565275, %v1484
        %v1488 = vshrl.u32 2475754826, %v1485
        %v1489 = vor.u32 %v1487, %v1488
        %v1490 = vshll.u32 2475754826, %v1484
        %v1491 = vshrl.u32 2131351028, %v1485
        %v1492 = vor.u32 %v1490, %v1491
        %v1493 = vshll.u32 2131351028, %v1484
        %v1494 = vshrl.u32 2102212464, %v1485
        %v1495 = vor.u32 %v1493, %v1494
        %v1496 = vshll.u32 2102212464, %v1484
        %v1497 = vshrl.u32 920167782, %v1485
        %v1498 = vor.u32 %v1496, %v1497
        %v1499 = vshll.u32 920167782, %v1484
        %v1500 = vshrl.u32 1326507024, %v1485
        %v1501 = vor.u32 %v1499, %v1500
        %vm1502 = vcmp.lt.s32.totalorder %v1483, 1
        %vm1503 = vcmp.lt.s32.totalorder %v1483, 2
        %vm1504 = vcmp.lt.s32.totalorder %v1483, 3
        %vm1505 = vcmp.lt.s32.totalorder %v1483, 4
        %v1506 = vsel %vm1502, %v1486, %v1489
        %v1507 = vsel %vm1505, %v1495, 2102212464
        %v1508 = vsel %vm1504, %v1492, %v1507
        %v1509 = vsel %vm1503, %v1506, %v1508
        %v1510 = vsel %vm1502, %v1489, %v1492
        %v1511 = vsel %vm1505, %v1498, 920167782
        %v1512 = vsel %vm1504, %v1495, %v1511
        %v1513 = vsel %vm1503, %v1510, %v1512
        %v1514 = vsel %vm1502, %v1492, %v1495
        %v1515 = vsel %vm1505, %v1501, 1326507024
        %v1516 = vsel %vm1504, %v1498, %v1515
        %v1517 = vsel %vm1503, %v1514, %v1516
        %v1518 = vshll.u32 %v1478, 8
        %v1519 = vmul.u32.u64.compose %v1518, %v1517
        %v1520 = vextract.low.u32 %v1519
        %v1521 = vextract.high.u32 %v1519
        %v1522 = vmul.u32.u64.compose %v1518, %v1513
        %v1523 = vextract.low.u32 %v1522
        %v1524 = vextract.high.u32 %v1522
        %v1525 = vmul.u32 %v1518, %v1509
        %v1526 = vadd.s32 %v1521, %v1523
        %vm1527 = vc.u32 %v1521, %v1523
        %v1528 = vadd.s32 %v1524, 1
        %v1529 = vsel %vm1527, %v1528, %v1524
        %v1530 = vadd.s32 %v1525, %v1529
        %v1531 = vadd.s32 %v1530, 536870912
        %v1532 = vshrl.u32 %v1531, 30
        %v1533 = vshll.u32 %v1532, 30
        %v1534 = vsub.s32 %v1530, %v1533
        %vm1535 = vcmp.lt.s32.totalorder %v1534, 0
        %v1536 = vsub.s32 0, %v1534
        %v1537 = vsel %vm1535, %v1536, %v1534
        %v1538 = vclz %v1537
        %v1539 = vsub.s32 %v1538, 2
        %vm1540 = vcmp.gt.s32.totalorder 0, %v1539
        %v1541 = vsel %vm1540, 0, %v1539
        %v1542 = vsub.s32 32, %v1541
        %v1543 = vshll.u32 %v1534, %v1541
        %v1544 = vshrl.u32 %v1526, %v1542
        %v1545 = vor.u32 %v1543, %v1544
        %v1546 = vsub.s32 4294967266, %v1541
        %v1547 = vadd.s32 %v1546, 127
        %v1548 = vshll.u32 %v1547, 23
        %v1549 = vor.u32 4788187, %v1548
        %v1550 = vand.u32 2147483647, %v1549
        %v1552 = vcvt.s32.f32 %v1545
        %v1553 = vmul.f32 %v1552, %v1550
        %v1554 = vxor.u32 %v1553, 2147483648
        %v1555 = vsel %vm1472, %v1554, %v1553
        %v1556 = vsub.s32 4, %v1532
        %v1557 = vsel %vm1472, %v1556, %v1532
        %v1558 = vsel %vm1471, %v536, %v1555
        %v1559 = vsel %vm1471, 0, %v1557
        %v1560 = vcosq.f32.pop %v1558
        %v1561 = vsinq.f32.pop %v1558
        %vm1562 = vweird.f32 %v536
        %v1563 = vand.u32 %v1559, 3
        %vm1564 = vcmp.lt.s32.totalorder %v1563, 2
        %vm1565 = vcmp.eq.s32.totalorder %v1563, 0
        %v1566 = vxor.u32 %v1561, 2147483648
        %v1567 = vsel %vm1565, %v1560, %v1566
        %vm1568 = vcmp.eq.s32.totalorder %v1563, 2
        %v1569 = vxor.u32 %v1560, 2147483648
        %v1570 = vsel %vm1568, %v1569, %v1561
        %v1571 = vsel %vm1564, %v1567, %v1570
        %v1572 = vsel %vm1562, nan, %v1571
        %v1573 = vand.u32 2147483647, %v537
        %vm1574 = vcmp.le.f32.partialorder %v1573, 0.7853982
        %vm1575 = vcmp.lt.s32.totalorder %v537, 0
        %v1576 = vand.u32 %v537, 2139095040
        %v1577 = vshrl.u32 %v1576, 23
        %v1578 = vsub.s32 %v1577, 127
        %v1579 = vand.u32 2147483647, %v537
        %v1580 = vand.u32 %v1579, 8388607
        %v1581 = vor.u32 %v1580, 8388608
        %v1582 = vsub.s32 0, %v1581
        %v1583 = vadd.s32 %v1578, 1
        %vm1584 = vcmp.gt.s32.totalorder %v1583, 0
        %v1585 = vsel %vm1584, %v1583, 0
        %v1586 = vshrl.u32 %v1585, 5
        %v1587 = vand.u32 %v1585, 31
        %v1588 = vsub.s32 32, %v1587
        %v1589 = vshrl.u32 683565275, %v1588
        %v1590 = vshll.u32 683565275, %v1587
        %v1591 = vshrl.u32 2475754826, %v1588
        %v1592 = vor.u32 %v1590, %v1591
        %v1593 = vshll.u32 2475754826, %v1587
        %v1594 = vshrl.u32 2131351028, %v1588
        %v1595 = vor.u32 %v1593, %v1594
        %v1596 = vshll.u32 2131351028, %v1587
        %v1597 = vshrl.u32 2102212464, %v1588
        %v1598 = vor.u32 %v1596, %v1597
        %v1599 = vshll.u32 2102212464, %v1587
        %v1600 = vshrl.u32 920167782, %v1588
        %v1601 = vor.u32 %v1599, %v1600
        %v1602 = vshll.u32 920167782, %v1587
        %v1603 = vshrl.u32 1326507024, %v1588
        %v1604 = vor.u32 %v1602, %v1603
        %vm1605 = vcmp.lt.s32.totalorder %v1586, 1
        %vm1606 = vcmp.lt.s32.totalorder %v1586, 2
        %vm1607 = vcmp.lt.s32.totalorder %v1586, 3
        %vm1608 = vcmp.lt.s32.totalorder %v1586, 4
        %v1609 = vsel %vm1605, %v1589, %v1592
        %v1610 = vsel %vm1608, %v1598, 2102212464
        %v1611 = vsel %vm1607, %v1595, %v1610
        %v1612 = vsel %vm1606, %v1609, %v1611
        %v1613 = vsel %vm1605, %v1592, %v1595
        %v1614 = vsel %vm1608, %v1601, 920167782
        %v1615 = vsel %vm1607, %v1598, %v1614
        %v1616 = vsel %vm1606, %v1613, %v1615
        %v1617 = vsel %vm1605, %v1595, %v1598
        %v1618 = vsel %vm1608, %v1604, 1326507024
        %v1619 = vsel %vm1607, %v1601, %v1618
        %v1620 = vsel %vm1606, %v1617, %v1619
        %v1621 = vshll.u32 %v1581, 8
        %v1622 = vmul.u32.u64.compose %v1621, %v1620
        %v1623 = vextract.low.u32 %v1622
        %v1624 = vextract.high.u32 %v1622
        %v1625 = vmul.u32.u64.compose %v1621, %v1616
        %v1626 = vextract.low.u32 %v1625
        %v1627 = vextract.high.u32 %v1625
        %v1628 = vmul.u32 %v1621, %v1612
        %v1629 = vadd.s32 %v1624, %v1626
        %vm1630 = vc.u32 %v1624, %v1626
        %v1631 = vadd.s32 %v1627, 1
        %v1632 = vsel %vm1630, %v1631, %v1627
        %v1633 = vadd.s32 %v1628, %v1632
        %v1634 = vadd.s32 %v1633, 536870912
        %v1635 = vshrl.u32 %v1634, 30
        %v1636 = vshll.u32 %v1635, 30
        %v1637 = vsub.s32 %v1633, %v1636
        %vm1638 = vcmp.lt.s32.totalorder %v1637, 0
        %v1639 = vsub.s32 0, %v1637
        %v1640 = vsel %vm1638, %v1639, %v1637
        %v1641 = vclz %v1640
        %v1642 = vsub.s32 %v1641, 2
        %vm1643 = vcmp.gt.s32.totalorder 0, %v1642
        %v1644 = vsel %vm1643, 0, %v1642
        %v1645 = vsub.s32 32, %v1644
        %v1646 = vshll.u32 %v1637, %v1644
        %v1647 = vshrl.u32 %v1629, %v1645
        %v1648 = vor.u32 %v1646, %v1647
        %v1649 = vsub.s32 4294967266, %v1644
        %v1650 = vadd.s32 %v1649, 127
        %v1651 = vshll.u32 %v1650, 23
        %v1652 = vor.u32 4788187, %v1651
        %v1653 = vand.u32 2147483647, %v1652
        %v1655 = vcvt.s32.f32 %v1648
        %v1656 = vmul.f32 %v1655, %v1653
        %v1657 = vxor.u32 %v1656, 2147483648
        %v1658 = vsel %vm1575, %v1657, %v1656
        %v1659 = vsub.s32 4, %v1635
        %v1660 = vsel %vm1575, %v1659, %v1635
        %v1661 = vsel %vm1574, %v537, %v1658
        %v1662 = vsel %vm1574, 0, %v1660
        %v1663 = vcosq.f32.pop %v1661
        %v1664 = vsinq.f32.pop %v1661
        %vm1665 = vweird.f32 %v537
        %v1666 = vand.u32 %v1662, 3
        %vm1667 = vcmp.lt.s32.totalorder %v1666, 2
        %vm1668 = vcmp.eq.s32.totalorder %v1666, 0
        %v1669 = vxor.u32 %v1664, 2147483648
        %v1670 = vsel %vm1668, %v1663, %v1669
        %vm1671 = vcmp.eq.s32.totalorder %v1666, 2
        %v1672 = vxor.u32 %v1663, 2147483648
        %v1673 = vsel %vm1671, %v1672, %v1664
        %v1674 = vsel %vm1667, %v1670, %v1673
        %v1675 = vsel %vm1665, nan, %v1674
        %v1676 = vand.u32 2147483647, %v538
        %vm1677 = vcmp.le.f32.partialorder %v1676, 0.7853982
        %vm1678 = vcmp.lt.s32.totalorder %v538, 0
        %v1679 = vand.u32 %v538, 2139095040
        %v1680 = vshrl.u32 %v1679, 23
        %v1681 = vsub.s32 %v1680, 127
        %v1682 = vand.u32 2147483647, %v538
        %v1683 = vand.u32 %v1682, 8388607
        %v1684 = vor.u32 %v1683, 8388608
        %v1685 = vsub.s32 0, %v1684
        %v1686 = vadd.s32 %v1681, 1
        %vm1687 = vcmp.gt.s32.totalorder %v1686, 0
        %v1688 = vsel %vm1687, %v1686, 0
        %v1689 = vshrl.u32 %v1688, 5
        %v1690 = vand.u32 %v1688, 31
        %v1691 = vsub.s32 32, %v1690
        %v1692 = vshrl.u32 683565275, %v1691
        %v1693 = vshll.u32 683565275, %v1690
        %v1694 = vshrl.u32 2475754826, %v1691
        %v1695 = vor.u32 %v1693, %v1694
        %v1696 = vshll.u32 2475754826, %v1690
        %v1697 = vshrl.u32 2131351028, %v1691
        %v1698 = vor.u32 %v1696, %v1697
        %v1699 = vshll.u32 2131351028, %v1690
        %v1700 = vshrl.u32 2102212464, %v1691
        %v1701 = vor.u32 %v1699, %v1700
        %v1702 = vshll.u32 2102212464, %v1690
        %v1703 = vshrl.u32 920167782, %v1691
        %v1704 = vor.u32 %v1702, %v1703
        %v1705 = vshll.u32 920167782, %v1690
        %v1706 = vshrl.u32 1326507024, %v1691
        %v1707 = vor.u32 %v1705, %v1706
        %vm1708 = vcmp.lt.s32.totalorder %v1689, 1
        %vm1709 = vcmp.lt.s32.totalorder %v1689, 2
        %vm1710 = vcmp.lt.s32.totalorder %v1689, 3
        %vm1711 = vcmp.lt.s32.totalorder %v1689, 4
        %v1712 = vsel %vm1708, %v1692, %v1695
        %v1713 = vsel %vm1711, %v1701, 2102212464
        %v1714 = vsel %vm1710, %v1698, %v1713
        %v1715 = vsel %vm1709, %v1712, %v1714
        %v1716 = vsel %vm1708, %v1695, %v1698
        %v1717 = vsel %vm1711, %v1704, 920167782
        %v1718 = vsel %vm1710, %v1701, %v1717
        %v1719 = vsel %vm1709, %v1716, %v1718
        %v1720 = vsel %vm1708, %v1698, %v1701
        %v1721 = vsel %vm1711, %v1707, 1326507024
        %v1722 = vsel %vm1710, %v1704, %v1721
        %v1723 = vsel %vm1709, %v1720, %v1722
        %v1724 = vshll.u32 %v1684, 8
        %v1725 = vmul.u32.u64.compose %v1724, %v1723
        %v1726 = vextract.low.u32 %v1725
        %v1727 = vextract.high.u32 %v1725
        %v1728 = vmul.u32.u64.compose %v1724, %v1719
        %v1729 = vextract.low.u32 %v1728
        %v1730 = vextract.high.u32 %v1728
        %v1731 = vmul.u32 %v1724, %v1715
        %v1732 = vadd.s32 %v1727, %v1729
        %vm1733 = vc.u32 %v1727, %v1729
        %v1734 = vadd.s32 %v1730, 1
        %v1735 = vsel %vm1733, %v1734, %v1730
        %v1736 = vadd.s32 %v1731, %v1735
        %v1737 = vadd.s32 %v1736, 536870912
        %v1738 = vshrl.u32 %v1737, 30
        %v1739 = vshll.u32 %v1738, 30
        %v1740 = vsub.s32 %v1736, %v1739
        %vm1741 = vcmp.lt.s32.totalorder %v1740, 0
        %v1742 = vsub.s32 0, %v1740
        %v1743 = vsel %vm1741, %v1742, %v1740
        %v1744 = vclz %v1743
        %v1745 = vsub.s32 %v1744, 2
        %vm1746 = vcmp.gt.s32.totalorder 0, %v1745
        %v1747 = vsel %vm1746, 0, %v1745
        %v1748 = vsub.s32 32, %v1747
        %v1749 = vshll.u32 %v1740, %v1747
        %v1750 = vshrl.u32 %v1732, %v1748
        %v1751 = vor.u32 %v1749, %v1750
        %v1752 = vsub.s32 4294967266, %v1747
        %v1753 = vadd.s32 %v1752, 127
        %v1754 = vshll.u32 %v1753, 23
        %v1755 = vor.u32 4788187, %v1754
        %v1756 = vand.u32 2147483647, %v1755
        %v1758 = vcvt.s32.f32 %v1751
        %v1759 = vmul.f32 %v1758, %v1756
        %v1760 = vxor.u32 %v1759, 2147483648
        %v1761 = vsel %vm1678, %v1760, %v1759
        %v1762 = vsub.s32 4, %v1738
        %v1763 = vsel %vm1678, %v1762, %v1738
        %v1764 = vsel %vm1677, %v538, %v1761
        %v1765 = vsel %vm1677, 0, %v1763
        %v1766 = vcosq.f32.pop %v1764
        %v1767 = vsinq.f32.pop %v1764
        %vm1768 = vweird.f32 %v538
        %v1769 = vand.u32 %v1765, 3
        %vm1770 = vcmp.lt.s32.totalorder %v1769, 2
        %vm1771 = vcmp.eq.s32.totalorder %v1769, 0
        %v1772 = vxor.u32 %v1767, 2147483648
        %v1773 = vsel %vm1771, %v1766, %v1772
        %vm1774 = vcmp.eq.s32.totalorder %v1769, 2
        %v1775 = vxor.u32 %v1766, 2147483648
        %v1776 = vsel %vm1774, %v1775, %v1767
        %v1777 = vsel %vm1770, %v1773, %v1776
        %v1778 = vsel %vm1768, nan, %v1777
        %v1779 = vand.u32 2147483647, %v539
        %vm1780 = vcmp.le.f32.partialorder %v1779, 0.7853982
        %vm1781 = vcmp.lt.s32.totalorder %v539, 0
        %v1782 = vand.u32 %v539, 2139095040
        %v1783 = vshrl.u32 %v1782, 23
        %v1784 = vsub.s32 %v1783, 127
        %v1785 = vand.u32 2147483647, %v539
        %v1786 = vand.u32 %v1785, 8388607
        %v1787 = vor.u32 %v1786, 8388608
        %v1788 = vsub.s32 0, %v1787
        %v1789 = vadd.s32 %v1784, 1
        %vm1790 = vcmp.gt.s32.totalorder %v1789, 0
        %v1791 = vsel %vm1790, %v1789, 0
        %v1792 = vshrl.u32 %v1791, 5
        %v1793 = vand.u32 %v1791, 31
        %v1794 = vsub.s32 32, %v1793
        %v1795 = vshrl.u32 683565275, %v1794
        %v1796 = vshll.u32 683565275, %v1793
        %v1797 = vshrl.u32 2475754826, %v1794
        %v1798 = vor.u32 %v1796, %v1797
        %v1799 = vshll.u32 2475754826, %v1793
        %v1800 = vshrl.u32 2131351028, %v1794
        %v1801 = vor.u32 %v1799, %v1800
        %v1802 = vshll.u32 2131351028, %v1793
        %v1803 = vshrl.u32 2102212464, %v1794
        %v1804 = vor.u32 %v1802, %v1803
        %v1805 = vshll.u32 2102212464, %v1793
        %v1806 = vshrl.u32 920167782, %v1794
        %v1807 = vor.u32 %v1805, %v1806
        %v1808 = vshll.u32 920167782, %v1793
        %v1809 = vshrl.u32 1326507024, %v1794
        %v1810 = vor.u32 %v1808, %v1809
        %vm1811 = vcmp.lt.s32.totalorder %v1792, 1
        %vm1812 = vcmp.lt.s32.totalorder %v1792, 2
        %vm1813 = vcmp.lt.s32.totalorder %v1792, 3
        %vm1814 = vcmp.lt.s32.totalorder %v1792, 4
        %v1815 = vsel %vm1811, %v1795, %v1798
        %v1816 = vsel %vm1814, %v1804, 2102212464
        %v1817 = vsel %vm1813, %v1801, %v1816
        %v1818 = vsel %vm1812, %v1815, %v1817
        %v1819 = vsel %vm1811, %v1798, %v1801
        %v1820 = vsel %vm1814, %v1807, 920167782
        %v1821 = vsel %vm1813, %v1804, %v1820
        %v1822 = vsel %vm1812, %v1819, %v1821
        %v1823 = vsel %vm1811, %v1801, %v1804
        %v1824 = vsel %vm1814, %v1810, 1326507024
        %v1825 = vsel %vm1813, %v1807, %v1824
        %v1826 = vsel %vm1812, %v1823, %v1825
        %v1827 = vshll.u32 %v1787, 8
        %v1828 = vmul.u32.u64.compose %v1827, %v1826
        %v1829 = vextract.low.u32 %v1828
        %v1830 = vextract.high.u32 %v1828
        %v1831 = vmul.u32.u64.compose %v1827, %v1822
        %v1832 = vextract.low.u32 %v1831
        %v1833 = vextract.high.u32 %v1831
        %v1834 = vmul.u32 %v1827, %v1818
        %v1835 = vadd.s32 %v1830, %v1832
        %vm1836 = vc.u32 %v1830, %v1832
        %v1837 = vadd.s32 %v1833, 1
        %v1838 = vsel %vm1836, %v1837, %v1833
        %v1839 = vadd.s32 %v1834, %v1838
        %v1840 = vadd.s32 %v1839, 536870912
        %v1841 = vshrl.u32 %v1840, 30
        %v1842 = vshll.u32 %v1841, 30
        %v1843 = vsub.s32 %v1839, %v1842
        %vm1844 = vcmp.lt.s32.totalorder %v1843, 0
        %v1845 = vsub.s32 0, %v1843
        %v1846 = vsel %vm1844, %v1845, %v1843
        %v1847 = vclz %v1846
        %v1848 = vsub.s32 %v1847, 2
        %vm1849 = vcmp.gt.s32.totalorder 0, %v1848
        %v1850 = vsel %vm1849, 0, %v1848
        %v1851 = vsub.s32 32, %v1850
        %v1852 = vshll.u32 %v1843, %v1850
        %v1853 = vshrl.u32 %v1835, %v1851
        %v1854 = vor.u32 %v1852, %v1853
        %v1855 = vsub.s32 4294967266, %v1850
        %v1856 = vadd.s32 %v1855, 127
        %v1857 = vshll.u32 %v1856, 23
        %v1858 = vor.u32 4788187, %v1857
        %v1859 = vand.u32 2147483647, %v1858
        %v1861 = vcvt.s32.f32 %v1854
        %v1862 = vmul.f32 %v1861, %v1859
        %v1863 = vxor.u32 %v1862, 2147483648
        %v1864 = vsel %vm1781, %v1863, %v1862
        %v1865 = vsub.s32 4, %v1841
        %v1866 = vsel %vm1781, %v1865, %v1841
        %v1867 = vsel %vm1780, %v539, %v1864
        %v1868 = vsel %vm1780, 0, %v1866
        %v1869 = vcosq.f32.pop %v1867
        %v1870 = vsinq.f32.pop %v1867
        %vm1871 = vweird.f32 %v539
        %v1872 = vand.u32 %v1868, 3
        %vm1873 = vcmp.lt.s32.totalorder %v1872, 2
        %vm1874 = vcmp.eq.s32.totalorder %v1872, 0
        %v1875 = vxor.u32 %v1870, 2147483648
        %v1876 = vsel %vm1874, %v1869, %v1875
        %vm1877 = vcmp.eq.s32.totalorder %v1872, 2
        %v1878 = vxor.u32 %v1869, 2147483648
        %v1879 = vsel %vm1877, %v1878, %v1870
        %v1880 = vsel %vm1873, %v1876, %v1879
        %v1881 = vsel %vm1871, nan, %v1880
        %v1882 = vand.u32 2147483647, %v540
        %vm1883 = vcmp.le.f32.partialorder %v1882, 0.7853982
        %vm1884 = vcmp.lt.s32.totalorder %v540, 0
        %v1885 = vand.u32 %v540, 2139095040
        %v1886 = vshrl.u32 %v1885, 23
        %v1887 = vsub.s32 %v1886, 127
        %v1888 = vand.u32 2147483647, %v540
        %v1889 = vand.u32 %v1888, 8388607
        %v1890 = vor.u32 %v1889, 8388608
        %v1891 = vsub.s32 0, %v1890
        %v1892 = vadd.s32 %v1887, 1
        %vm1893 = vcmp.gt.s32.totalorder %v1892, 0
        %v1894 = vsel %vm1893, %v1892, 0
        %v1895 = vshrl.u32 %v1894, 5
        %v1896 = vand.u32 %v1894, 31
        %v1897 = vsub.s32 32, %v1896
        %v1898 = vshrl.u32 683565275, %v1897
        %v1899 = vshll.u32 683565275, %v1896
        %v1900 = vshrl.u32 2475754826, %v1897
        %v1901 = vor.u32 %v1899, %v1900
        %v1902 = vshll.u32 2475754826, %v1896
        %v1903 = vshrl.u32 2131351028, %v1897
        %v1904 = vor.u32 %v1902, %v1903
        %v1905 = vshll.u32 2131351028, %v1896
        %v1906 = vshrl.u32 2102212464, %v1897
        %v1907 = vor.u32 %v1905, %v1906
        %v1908 = vshll.u32 2102212464, %v1896
        %v1909 = vshrl.u32 920167782, %v1897
        %v1910 = vor.u32 %v1908, %v1909
        %v1911 = vshll.u32 920167782, %v1896
        %v1912 = vshrl.u32 1326507024, %v1897
        %v1913 = vor.u32 %v1911, %v1912
        %vm1914 = vcmp.lt.s32.totalorder %v1895, 1
        %vm1915 = vcmp.lt.s32.totalorder %v1895, 2
        %vm1916 = vcmp.lt.s32.totalorder %v1895, 3
        %vm1917 = vcmp.lt.s32.totalorder %v1895, 4
        %v1918 = vsel %vm1914, %v1898, %v1901
        %v1919 = vsel %vm1917, %v1907, 2102212464
        %v1920 = vsel %vm1916, %v1904, %v1919
        %v1921 = vsel %vm1915, %v1918, %v1920
        %v1922 = vsel %vm1914, %v1901, %v1904
        %v1923 = vsel %vm1917, %v1910, 920167782
        %v1924 = vsel %vm1916, %v1907, %v1923
        %v1925 = vsel %vm1915, %v1922, %v1924
        %v1926 = vsel %vm1914, %v1904, %v1907
        %v1927 = vsel %vm1917, %v1913, 1326507024
        %v1928 = vsel %vm1916, %v1910, %v1927
        %v1929 = vsel %vm1915, %v1926, %v1928
        %v1930 = vshll.u32 %v1890, 8
        %v1931 = vmul.u32.u64.compose %v1930, %v1929
        %v1932 = vextract.low.u32 %v1931
        %v1933 = vextract.high.u32 %v1931
        %v1934 = vmul.u32.u64.compose %v1930, %v1925
        %v1935 = vextract.low.u32 %v1934
        %v1936 = vextract.high.u32 %v1934
        %v1937 = vmul.u32 %v1930, %v1921
        %v1938 = vadd.s32 %v1933, %v1935
        %vm1939 = vc.u32 %v1933, %v1935
        %v1940 = vadd.s32 %v1936, 1
        %v1941 = vsel %vm1939, %v1940, %v1936
        %v1942 = vadd.s32 %v1937, %v1941
        %v1943 = vadd.s32 %v1942, 536870912
        %v1944 = vshrl.u32 %v1943, 30
        %v1945 = vshll.u32 %v1944, 30
        %v1946 = vsub.s32 %v1942, %v1945
        %vm1947 = vcmp.lt.s32.totalorder %v1946, 0
        %v1948 = vsub.s32 0, %v1946
        %v1949 = vsel %vm1947, %v1948, %v1946
        %v1950 = vclz %v1949
        %v1951 = vsub.s32 %v1950, 2
        %vm1952 = vcmp.gt.s32.totalorder 0, %v1951
        %v1953 = vsel %vm1952, 0, %v1951
        %v1954 = vsub.s32 32, %v1953
        %v1955 = vshll.u32 %v1946, %v1953
        %v1956 = vshrl.u32 %v1938, %v1954
        %v1957 = vor.u32 %v1955, %v1956
        %v1958 = vsub.s32 4294967266, %v1953
        %v1959 = vadd.s32 %v1958, 127
        %v1960 = vshll.u32 %v1959, 23
        %v1961 = vor.u32 4788187, %v1960
        %v1962 = vand.u32 2147483647, %v1961
        %v1964 = vcvt.s32.f32 %v1957
        %v1965 = vmul.f32 %v1964, %v1962
        %v1966 = vxor.u32 %v1965, 2147483648
        %v1967 = vsel %vm1884, %v1966, %v1965
        %v1968 = vsub.s32 4, %v1944
        %v1969 = vsel %vm1884, %v1968, %v1944
        %v1970 = vsel %vm1883, %v540, %v1967
        %v1971 = vsel %vm1883, 0, %v1969
        %v1972 = vcosq.f32.pop %v1970
        %v1973 = vsinq.f32.pop %v1970
        %vm1974 = vweird.f32 %v540
        %v1975 = vand.u32 %v1971, 3
        %vm1976 = vcmp.lt.s32.totalorder %v1975, 2
        %vm1977 = vcmp.eq.s32.totalorder %v1975, 0
        %v1978 = vxor.u32 %v1973, 2147483648
        %v1979 = vsel %vm1977, %v1972, %v1978
        %vm1980 = vcmp.eq.s32.totalorder %v1975, 2
        %v1981 = vxor.u32 %v1972, 2147483648
        %v1982 = vsel %vm1980, %v1981, %v1973
        %v1983 = vsel %vm1976, %v1979, %v1982
        %v1984 = vsel %vm1974, nan, %v1983
        %v1985 = vand.u32 2147483647, %v541
        %vm1986 = vcmp.le.f32.partialorder %v1985, 0.7853982
        %vm1987 = vcmp.lt.s32.totalorder %v541, 0
        %v1988 = vand.u32 %v541, 2139095040
        %v1989 = vshrl.u32 %v1988, 23
        %v1990 = vsub.s32 %v1989, 127
        %v1991 = vand.u32 2147483647, %v541
        %v1992 = vand.u32 %v1991, 8388607
        %v1993 = vor.u32 %v1992, 8388608
        %v1994 = vsub.s32 0, %v1993
        %v1995 = vadd.s32 %v1990, 1
        %vm1996 = vcmp.gt.s32.totalorder %v1995, 0
        %v1997 = vsel %vm1996, %v1995, 0
        %v1998 = vshrl.u32 %v1997, 5
        %v1999 = vand.u32 %v1997, 31
        %v2000 = vsub.s32 32, %v1999
        %v2001 = vshrl.u32 683565275, %v2000
        %v2002 = vshll.u32 683565275, %v1999
        %v2003 = vshrl.u32 2475754826, %v2000
        %v2004 = vor.u32 %v2002, %v2003
        %v2005 = vshll.u32 2475754826, %v1999
        %v2006 = vshrl.u32 2131351028, %v2000
        %v2007 = vor.u32 %v2005, %v2006
        %v2008 = vshll.u32 2131351028, %v1999
        %v2009 = vshrl.u32 2102212464, %v2000
        %v2010 = vor.u32 %v2008, %v2009
        %v2011 = vshll.u32 2102212464, %v1999
        %v2012 = vshrl.u32 920167782, %v2000
        %v2013 = vor.u32 %v2011, %v2012
        %v2014 = vshll.u32 920167782, %v1999
        %v2015 = vshrl.u32 1326507024, %v2000
        %v2016 = vor.u32 %v2014, %v2015
        %vm2017 = vcmp.lt.s32.totalorder %v1998, 1
        %vm2018 = vcmp.lt.s32.totalorder %v1998, 2
        %vm2019 = vcmp.lt.s32.totalorder %v1998, 3
        %vm2020 = vcmp.lt.s32.totalorder %v1998, 4
        %v2021 = vsel %vm2017, %v2001, %v2004
        %v2022 = vsel %vm2020, %v2010, 2102212464
        %v2023 = vsel %vm2019, %v2007, %v2022
        %v2024 = vsel %vm2018, %v2021, %v2023
        %v2025 = vsel %vm2017, %v2004, %v2007
        %v2026 = vsel %vm2020, %v2013, 920167782
        %v2027 = vsel %vm2019, %v2010, %v2026
        %v2028 = vsel %vm2018, %v2025, %v2027
        %v2029 = vsel %vm2017, %v2007, %v2010
        %v2030 = vsel %vm2020, %v2016, 1326507024
        %v2031 = vsel %vm2019, %v2013, %v2030
        %v2032 = vsel %vm2018, %v2029, %v2031
        %v2033 = vshll.u32 %v1993, 8
        %v2034 = vmul.u32.u64.compose %v2033, %v2032
        %v2035 = vextract.low.u32 %v2034
        %v2036 = vextract.high.u32 %v2034
        %v2037 = vmul.u32.u64.compose %v2033, %v2028
        %v2038 = vextract.low.u32 %v2037
        %v2039 = vextract.high.u32 %v2037
        %v2040 = vmul.u32 %v2033, %v2024
        %v2041 = vadd.s32 %v2036, %v2038
        %vm2042 = vc.u32 %v2036, %v2038
        %v2043 = vadd.s32 %v2039, 1
        %v2044 = vsel %vm2042, %v2043, %v2039
        %v2045 = vadd.s32 %v2040, %v2044
        %v2046 = vadd.s32 %v2045, 536870912
        %v2047 = vshrl.u32 %v2046, 30
        %v2048 = vshll.u32 %v2047, 30
        %v2049 = vsub.s32 %v2045, %v2048
        %vm2050 = vcmp.lt.s32.totalorder %v2049, 0
        %v2051 = vsub.s32 0, %v2049
        %v2052 = vsel %vm2050, %v2051, %v2049
        %v2053 = vclz %v2052
        %v2054 = vsub.s32 %v2053, 2
        %vm2055 = vcmp.gt.s32.totalorder 0, %v2054
        %v2056 = vsel %vm2055, 0, %v2054
        %v2057 = vsub.s32 32, %v2056
        %v2058 = vshll.u32 %v2049, %v2056
        %v2059 = vshrl.u32 %v2041, %v2057
        %v2060 = vor.u32 %v2058, %v2059
        %v2061 = vsub.s32 4294967266, %v2056
        %v2062 = vadd.s32 %v2061, 127
        %v2063 = vshll.u32 %v2062, 23
        %v2064 = vor.u32 4788187, %v2063
        %v2065 = vand.u32 2147483647, %v2064
        %v2067 = vcvt.s32.f32 %v2060
        %v2068 = vmul.f32 %v2067, %v2065
        %v2069 = vxor.u32 %v2068, 2147483648
        %v2070 = vsel %vm1987, %v2069, %v2068
        %v2071 = vsub.s32 4, %v2047
        %v2072 = vsel %vm1987, %v2071, %v2047
        %v2073 = vsel %vm1986, %v541, %v2070
        %v2074 = vsel %vm1986, 0, %v2072
        %v2075 = vcosq.f32.pop %v2073
        %v2076 = vsinq.f32.pop %v2073
        %vm2077 = vweird.f32 %v541
        %v2078 = vand.u32 %v2074, 3
        %vm2079 = vcmp.lt.s32.totalorder %v2078, 2
        %vm2080 = vcmp.eq.s32.totalorder %v2078, 0
        %v2081 = vxor.u32 %v2076, 2147483648
        %v2082 = vsel %vm2080, %v2075, %v2081
        %vm2083 = vcmp.eq.s32.totalorder %v2078, 2
        %v2084 = vxor.u32 %v2075, 2147483648
        %v2085 = vsel %vm2083, %v2084, %v2076
        %v2086 = vsel %vm2079, %v2082, %v2085
        %v2087 = vsel %vm2077, nan, %v2086
        %v2088 = vand.u32 2147483647, %v542
        %vm2089 = vcmp.le.f32.partialorder %v2088, 0.7853982
        %vm2090 = vcmp.lt.s32.totalorder %v542, 0
        %v2091 = vand.u32 %v542, 2139095040
        %v2092 = vshrl.u32 %v2091, 23
        %v2093 = vsub.s32 %v2092, 127
        %v2094 = vand.u32 2147483647, %v542
        %v2095 = vand.u32 %v2094, 8388607
        %v2096 = vor.u32 %v2095, 8388608
        %v2097 = vsub.s32 0, %v2096
        %v2098 = vadd.s32 %v2093, 1
        %vm2099 = vcmp.gt.s32.totalorder %v2098, 0
        %v2100 = vsel %vm2099, %v2098, 0
        %v2101 = vshrl.u32 %v2100, 5
        %v2102 = vand.u32 %v2100, 31
        %v2103 = vsub.s32 32, %v2102
        %v2104 = vshrl.u32 683565275, %v2103
        %v2105 = vshll.u32 683565275, %v2102
        %v2106 = vshrl.u32 2475754826, %v2103
        %v2107 = vor.u32 %v2105, %v2106
        %v2108 = vshll.u32 2475754826, %v2102
        %v2109 = vshrl.u32 2131351028, %v2103
        %v2110 = vor.u32 %v2108, %v2109
        %v2111 = vshll.u32 2131351028, %v2102
        %v2112 = vshrl.u32 2102212464, %v2103
        %v2113 = vor.u32 %v2111, %v2112
        %v2114 = vshll.u32 2102212464, %v2102
        %v2115 = vshrl.u32 920167782, %v2103
        %v2116 = vor.u32 %v2114, %v2115
        %v2117 = vshll.u32 920167782, %v2102
        %v2118 = vshrl.u32 1326507024, %v2103
        %v2119 = vor.u32 %v2117, %v2118
        %vm2120 = vcmp.lt.s32.totalorder %v2101, 1
        %vm2121 = vcmp.lt.s32.totalorder %v2101, 2
        %vm2122 = vcmp.lt.s32.totalorder %v2101, 3
        %vm2123 = vcmp.lt.s32.totalorder %v2101, 4
        %v2124 = vsel %vm2120, %v2104, %v2107
        %v2125 = vsel %vm2123, %v2113, 2102212464
        %v2126 = vsel %vm2122, %v2110, %v2125
        %v2127 = vsel %vm2121, %v2124, %v2126
        %v2128 = vsel %vm2120, %v2107, %v2110
        %v2129 = vsel %vm2123, %v2116, 920167782
        %v2130 = vsel %vm2122, %v2113, %v2129
        %v2131 = vsel %vm2121, %v2128, %v2130
        %v2132 = vsel %vm2120, %v2110, %v2113
        %v2133 = vsel %vm2123, %v2119, 1326507024
        %v2134 = vsel %vm2122, %v2116, %v2133
        %v2135 = vsel %vm2121, %v2132, %v2134
        %v2136 = vshll.u32 %v2096, 8
        %v2137 = vmul.u32.u64.compose %v2136, %v2135
        %v2138 = vextract.low.u32 %v2137
        %v2139 = vextract.high.u32 %v2137
        %v2140 = vmul.u32.u64.compose %v2136, %v2131
        %v2141 = vextract.low.u32 %v2140
        %v2142 = vextract.high.u32 %v2140
        %v2143 = vmul.u32 %v2136, %v2127
        %v2144 = vadd.s32 %v2139, %v2141
        %vm2145 = vc.u32 %v2139, %v2141
        %v2146 = vadd.s32 %v2142, 1
        %v2147 = vsel %vm2145, %v2146, %v2142
        %v2148 = vadd.s32 %v2143, %v2147
        %v2149 = vadd.s32 %v2148, 536870912
        %v2150 = vshrl.u32 %v2149, 30
        %v2151 = vshll.u32 %v2150, 30
        %v2152 = vsub.s32 %v2148, %v2151
        %vm2153 = vcmp.lt.s32.totalorder %v2152, 0
        %v2154 = vsub.s32 0, %v2152
        %v2155 = vsel %vm2153, %v2154, %v2152
        %v2156 = vclz %v2155
        %v2157 = vsub.s32 %v2156, 2
        %vm2158 = vcmp.gt.s32.totalorder 0, %v2157
        %v2159 = vsel %vm2158, 0, %v2157
        %v2160 = vsub.s32 32, %v2159
        %v2161 = vshll.u32 %v2152, %v2159
        %v2162 = vshrl.u32 %v2144, %v2160
        %v2163 = vor.u32 %v2161, %v2162
        %v2164 = vsub.s32 4294967266, %v2159
        %v2165 = vadd.s32 %v2164, 127
        %v2166 = vshll.u32 %v2165, 23
        %v2167 = vor.u32 4788187, %v2166
        %v2168 = vand.u32 2147483647, %v2167
        %v2170 = vcvt.s32.f32 %v2163
        %v2171 = vmul.f32 %v2170, %v2168
        %v2172 = vxor.u32 %v2171, 2147483648
        %v2173 = vsel %vm2090, %v2172, %v2171
        %v2174 = vsub.s32 4, %v2150
        %v2175 = vsel %vm2090, %v2174, %v2150
        %v2176 = vsel %vm2089, %v542, %v2173
        %v2177 = vsel %vm2089, 0, %v2175
        %v2178 = vcosq.f32.pop %v2176
        %v2179 = vsinq.f32.pop %v2176
        %vm2180 = vweird.f32 %v542
        %v2181 = vand.u32 %v2177, 3
        %vm2182 = vcmp.lt.s32.totalorder %v2181, 2
        %vm2183 = vcmp.eq.s32.totalorder %v2181, 0
        %v2184 = vxor.u32 %v2179, 2147483648
        %v2185 = vsel %vm2183, %v2178, %v2184
        %vm2186 = vcmp.eq.s32.totalorder %v2181, 2
        %v2187 = vxor.u32 %v2178, 2147483648
        %v2188 = vsel %vm2186, %v2187, %v2179
        %v2189 = vsel %vm2182, %v2185, %v2188
        %v2190 = vsel %vm2180, nan, %v2189
        %v2191 = vand.u32 2147483647, %v527
        %vm2192 = vcmp.le.f32.partialorder %v2191, 0.7853982
        %vm2193 = vcmp.lt.s32.totalorder %v527, 0
        %v2194 = vand.u32 %v527, 2139095040
        %v2195 = vshrl.u32 %v2194, 23
        %v2196 = vsub.s32 %v2195, 127
        %v2197 = vand.u32 2147483647, %v527
        %v2198 = vand.u32 %v2197, 8388607
        %v2199 = vor.u32 %v2198, 8388608
        %v2200 = vsub.s32 0, %v2199
        %v2201 = vadd.s32 %v2196, 1
        %vm2202 = vcmp.gt.s32.totalorder %v2201, 0
        %v2203 = vsel %vm2202, %v2201, 0
        %v2204 = vshrl.u32 %v2203, 5
        %v2205 = vand.u32 %v2203, 31
        %v2206 = vsub.s32 32, %v2205
        %v2207 = vshrl.u32 683565275, %v2206
        %v2208 = vshll.u32 683565275, %v2205
        %v2209 = vshrl.u32 2475754826, %v2206
        %v2210 = vor.u32 %v2208, %v2209
        %v2211 = vshll.u32 2475754826, %v2205
        %v2212 = vshrl.u32 2131351028, %v2206
        %v2213 = vor.u32 %v2211, %v2212
        %v2214 = vshll.u32 2131351028, %v2205
        %v2215 = vshrl.u32 2102212464, %v2206
        %v2216 = vor.u32 %v2214, %v2215
        %v2217 = vshll.u32 2102212464, %v2205
        %v2218 = vshrl.u32 920167782, %v2206
        %v2219 = vor.u32 %v2217, %v2218
        %v2220 = vshll.u32 920167782, %v2205
        %v2221 = vshrl.u32 1326507024, %v2206
        %v2222 = vor.u32 %v2220, %v2221
        %vm2223 = vcmp.lt.s32.totalorder %v2204, 1
        %vm2224 = vcmp.lt.s32.totalorder %v2204, 2
        %vm2225 = vcmp.lt.s32.totalorder %v2204, 3
        %vm2226 = vcmp.lt.s32.totalorder %v2204, 4
        %v2227 = vsel %vm2223, %v2207, %v2210
        %v2228 = vsel %vm2226, %v2216, 2102212464
        %v2229 = vsel %vm2225, %v2213, %v2228
        %v2230 = vsel %vm2224, %v2227, %v2229
        %v2231 = vsel %vm2223, %v2210, %v2213
        %v2232 = vsel %vm2226, %v2219, 920167782
        %v2233 = vsel %vm2225, %v2216, %v2232
        %v2234 = vsel %vm2224, %v2231, %v2233
        %v2235 = vsel %vm2223, %v2213, %v2216
        %v2236 = vsel %vm2226, %v2222, 1326507024
        %v2237 = vsel %vm2225, %v2219, %v2236
        %v2238 = vsel %vm2224, %v2235, %v2237
        %v2239 = vshll.u32 %v2199, 8
        %v2240 = vmul.u32.u64.compose %v2239, %v2238
        %v2241 = vextract.low.u32 %v2240
        %v2242 = vextract.high.u32 %v2240
        %v2243 = vmul.u32.u64.compose %v2239, %v2234
        %v2244 = vextract.low.u32 %v2243
        %v2245 = vextract.high.u32 %v2243
        %v2246 = vmul.u32 %v2239, %v2230
        %v2247 = vadd.s32 %v2242, %v2244
        %vm2248 = vc.u32 %v2242, %v2244
        %v2249 = vadd.s32 %v2245, 1
        %v2250 = vsel %vm2248, %v2249, %v2245
        %v2251 = vadd.s32 %v2246, %v2250
        %v2252 = vadd.s32 %v2251, 536870912
        %v2253 = vshrl.u32 %v2252, 30
        %v2254 = vshll.u32 %v2253, 30
        %v2255 = vsub.s32 %v2251, %v2254
        %vm2256 = vcmp.lt.s32.totalorder %v2255, 0
        %v2257 = vsub.s32 0, %v2255
        %v2258 = vsel %vm2256, %v2257, %v2255
        %v2259 = vclz %v2258
        %v2260 = vsub.s32 %v2259, 2
        %vm2261 = vcmp.gt.s32.totalorder 0, %v2260
        %v2262 = vsel %vm2261, 0, %v2260
        %v2263 = vsub.s32 32, %v2262
        %v2264 = vshll.u32 %v2255, %v2262
        %v2265 = vshrl.u32 %v2247, %v2263
        %v2266 = vor.u32 %v2264, %v2265
        %v2267 = vsub.s32 4294967266, %v2262
        %v2268 = vadd.s32 %v2267, 127
        %v2269 = vshll.u32 %v2268, 23
        %v2270 = vor.u32 4788187, %v2269
        %v2271 = vand.u32 2147483647, %v2270
        %v2273 = vcvt.s32.f32 %v2266
        %v2274 = vmul.f32 %v2273, %v2271
        %v2275 = vxor.u32 %v2274, 2147483648
        %v2276 = vsel %vm2193, %v2275, %v2274
        %v2277 = vsub.s32 4, %v2253
        %v2278 = vsel %vm2193, %v2277, %v2253
        %v2279 = vsel %vm2192, %v527, %v2276
        %v2280 = vsel %vm2192, 0, %v2278
        %v2281 = vcosq.f32.pop %v2279
        %v2282 = vsinq.f32.pop %v2279
        %vm2283 = vweird.f32 %v527
        %v2284 = vadd.s32 %v2280, 3
        %v2285 = vand.u32 %v2284, 3
        %vm2286 = vcmp.lt.s32.totalorder %v2285, 2
        %vm2287 = vcmp.eq.s32.totalorder %v2285, 0
        %v2288 = vxor.u32 %v2282, 2147483648
        %v2289 = vsel %vm2287, %v2281, %v2288
        %vm2290 = vcmp.eq.s32.totalorder %v2285, 2
        %v2291 = vxor.u32 %v2281, 2147483648
        %v2292 = vsel %vm2290, %v2291, %v2282
        %v2293 = vsel %vm2286, %v2289, %v2292
        %v2294 = vsel %vm2283, nan, %v2293
        %v2295 = vand.u32 2147483647, %v528
        %vm2296 = vcmp.le.f32.partialorder %v2295, 0.7853982
        %vm2297 = vcmp.lt.s32.totalorder %v528, 0
        %v2298 = vand.u32 %v528, 2139095040
        %v2299 = vshrl.u32 %v2298, 23
        %v2300 = vsub.s32 %v2299, 127
        %v2301 = vand.u32 2147483647, %v528
        %v2302 = vand.u32 %v2301, 8388607
        %v2303 = vor.u32 %v2302, 8388608
        %v2304 = vsub.s32 0, %v2303
        %v2305 = vadd.s32 %v2300, 1
        %vm2306 = vcmp.gt.s32.totalorder %v2305, 0
        %v2307 = vsel %vm2306, %v2305, 0
        %v2308 = vshrl.u32 %v2307, 5
        %v2309 = vand.u32 %v2307, 31
        %v2310 = vsub.s32 32, %v2309
        %v2311 = vshrl.u32 683565275, %v2310
        %v2312 = vshll.u32 683565275, %v2309
        %v2313 = vshrl.u32 2475754826, %v2310
        %v2314 = vor.u32 %v2312, %v2313
        %v2315 = vshll.u32 2475754826, %v2309
        %v2316 = vshrl.u32 2131351028, %v2310
        %v2317 = vor.u32 %v2315, %v2316
        %v2318 = vshll.u32 2131351028, %v2309
        %v2319 = vshrl.u32 2102212464, %v2310
        %v2320 = vor.u32 %v2318, %v2319
        %v2321 = vshll.u32 2102212464, %v2309
        %v2322 = vshrl.u32 920167782, %v2310
        %v2323 = vor.u32 %v2321, %v2322
        %v2324 = vshll.u32 920167782, %v2309
        %v2325 = vshrl.u32 1326507024, %v2310
        %v2326 = vor.u32 %v2324, %v2325
        %vm2327 = vcmp.lt.s32.totalorder %v2308, 1
        %vm2328 = vcmp.lt.s32.totalorder %v2308, 2
        %vm2329 = vcmp.lt.s32.totalorder %v2308, 3
        %vm2330 = vcmp.lt.s32.totalorder %v2308, 4
        %v2331 = vsel %vm2327, %v2311, %v2314
        %v2332 = vsel %vm2330, %v2320, 2102212464
        %v2333 = vsel %vm2329, %v2317, %v2332
        %v2334 = vsel %vm2328, %v2331, %v2333
        %v2335 = vsel %vm2327, %v2314, %v2317
        %v2336 = vsel %vm2330, %v2323, 920167782
        %v2337 = vsel %vm2329, %v2320, %v2336
        %v2338 = vsel %vm2328, %v2335, %v2337
        %v2339 = vsel %vm2327, %v2317, %v2320
        %v2340 = vsel %vm2330, %v2326, 1326507024
        %v2341 = vsel %vm2329, %v2323, %v2340
        %v2342 = vsel %vm2328, %v2339, %v2341
        %v2343 = vshll.u32 %v2303, 8
        %v2344 = vmul.u32.u64.compose %v2343, %v2342
        %v2345 = vextract.low.u32 %v2344
        %v2346 = vextract.high.u32 %v2344
        %v2347 = vmul.u32.u64.compose %v2343, %v2338
        %v2348 = vextract.low.u32 %v2347
        %v2349 = vextract.high.u32 %v2347
        %v2350 = vmul.u32 %v2343, %v2334
        %v2351 = vadd.s32 %v2346, %v2348
        %vm2352 = vc.u32 %v2346, %v2348
        %v2353 = vadd.s32 %v2349, 1
        %v2354 = vsel %vm2352, %v2353, %v2349
        %v2355 = vadd.s32 %v2350, %v2354
        %v2356 = vadd.s32 %v2355, 536870912
        %v2357 = vshrl.u32 %v2356, 30
        %v2358 = vshll.u32 %v2357, 30
        %v2359 = vsub.s32 %v2355, %v2358
        %vm2360 = vcmp.lt.s32.totalorder %v2359, 0
        %v2361 = vsub.s32 0, %v2359
        %v2362 = vsel %vm2360, %v2361, %v2359
        %v2363 = vclz %v2362
        %v2364 = vsub.s32 %v2363, 2
        %vm2365 = vcmp.gt.s32.totalorder 0, %v2364
        %v2366 = vsel %vm2365, 0, %v2364
        %v2367 = vsub.s32 32, %v2366
        %v2368 = vshll.u32 %v2359, %v2366
        %v2369 = vshrl.u32 %v2351, %v2367
        %v2370 = vor.u32 %v2368, %v2369
        %v2371 = vsub.s32 4294967266, %v2366
        %v2372 = vadd.s32 %v2371, 127
        %v2373 = vshll.u32 %v2372, 23
        %v2374 = vor.u32 4788187, %v2373
        %v2375 = vand.u32 2147483647, %v2374
        %v2377 = vcvt.s32.f32 %v2370
        %v2378 = vmul.f32 %v2377, %v2375
        %v2379 = vxor.u32 %v2378, 2147483648
        %v2380 = vsel %vm2297, %v2379, %v2378
        %v2381 = vsub.s32 4, %v2357
        %v2382 = vsel %vm2297, %v2381, %v2357
        %v2383 = vsel %vm2296, %v528, %v2380
        %v2384 = vsel %vm2296, 0, %v2382
        %v2385 = vcosq.f32.pop %v2383
        %v2386 = vsinq.f32.pop %v2383
        %vm2387 = vweird.f32 %v528
        %v2388 = vadd.s32 %v2384, 3
        %v2389 = vand.u32 %v2388, 3
        %vm2390 = vcmp.lt.s32.totalorder %v2389, 2
        %vm2391 = vcmp.eq.s32.totalorder %v2389, 0
        %v2392 = vxor.u32 %v2386, 2147483648
        %v2393 = vsel %vm2391, %v2385, %v2392
        %vm2394 = vcmp.eq.s32.totalorder %v2389, 2
        %v2395 = vxor.u32 %v2385, 2147483648
        %v2396 = vsel %vm2394, %v2395, %v2386
        %v2397 = vsel %vm2390, %v2393, %v2396
        %v2398 = vsel %vm2387, nan, %v2397
        %v2399 = vand.u32 2147483647, %v529
        %vm2400 = vcmp.le.f32.partialorder %v2399, 0.7853982
        %vm2401 = vcmp.lt.s32.totalorder %v529, 0
        %v2402 = vand.u32 %v529, 2139095040
        %v2403 = vshrl.u32 %v2402, 23
        %v2404 = vsub.s32 %v2403, 127
        %v2405 = vand.u32 2147483647, %v529
        %v2406 = vand.u32 %v2405, 8388607
        %v2407 = vor.u32 %v2406, 8388608
        %v2408 = vsub.s32 0, %v2407
        %v2409 = vadd.s32 %v2404, 1
        %vm2410 = vcmp.gt.s32.totalorder %v2409, 0
        %v2411 = vsel %vm2410, %v2409, 0
        %v2412 = vshrl.u32 %v2411, 5
        %v2413 = vand.u32 %v2411, 31
        %v2414 = vsub.s32 32, %v2413
        %v2415 = vshrl.u32 683565275, %v2414
        %v2416 = vshll.u32 683565275, %v2413
        %v2417 = vshrl.u32 2475754826, %v2414
        %v2418 = vor.u32 %v2416, %v2417
        %v2419 = vshll.u32 2475754826, %v2413
        %v2420 = vshrl.u32 2131351028, %v2414
        %v2421 = vor.u32 %v2419, %v2420
        %v2422 = vshll.u32 2131351028, %v2413
        %v2423 = vshrl.u32 2102212464, %v2414
        %v2424 = vor.u32 %v2422, %v2423
        %v2425 = vshll.u32 2102212464, %v2413
        %v2426 = vshrl.u32 920167782, %v2414
        %v2427 = vor.u32 %v2425, %v2426
        %v2428 = vshll.u32 920167782, %v2413
        %v2429 = vshrl.u32 1326507024, %v2414
        %v2430 = vor.u32 %v2428, %v2429
        %vm2431 = vcmp.lt.s32.totalorder %v2412, 1
        %vm2432 = vcmp.lt.s32.totalorder %v2412, 2
        %vm2433 = vcmp.lt.s32.totalorder %v2412, 3
        %vm2434 = vcmp.lt.s32.totalorder %v2412, 4
        %v2435 = vsel %vm2431, %v2415, %v2418
        %v2436 = vsel %vm2434, %v2424, 2102212464
        %v2437 = vsel %vm2433, %v2421, %v2436
        %v2438 = vsel %vm2432, %v2435, %v2437
        %v2439 = vsel %vm2431, %v2418, %v2421
        %v2440 = vsel %vm2434, %v2427, 920167782
        %v2441 = vsel %vm2433, %v2424, %v2440
        %v2442 = vsel %vm2432, %v2439, %v2441
        %v2443 = vsel %vm2431, %v2421, %v2424
        %v2444 = vsel %vm2434, %v2430, 1326507024
        %v2445 = vsel %vm2433, %v2427, %v2444
        %v2446 = vsel %vm2432, %v2443, %v2445
        %v2447 = vshll.u32 %v2407, 8
        %v2448 = vmul.u32.u64.compose %v2447, %v2446
        %v2449 = vextract.low.u32 %v2448
        %v2450 = vextract.high.u32 %v2448
        %v2451 = vmul.u32.u64.compose %v2447, %v2442
        %v2452 = vextract.low.u32 %v2451
        %v2453 = vextract.high.u32 %v2451
        %v2454 = vmul.u32 %v2447, %v2438
        %v2455 = vadd.s32 %v2450, %v2452
        %vm2456 = vc.u32 %v2450, %v2452
        %v2457 = vadd.s32 %v2453, 1
        %v2458 = vsel %vm2456, %v2457, %v2453
        %v2459 = vadd.s32 %v2454, %v2458
        %v2460 = vadd.s32 %v2459, 536870912
        %v2461 = vshrl.u32 %v2460, 30
        %v2462 = vshll.u32 %v2461, 30
        %v2463 = vsub.s32 %v2459, %v2462
        %vm2464 = vcmp.lt.s32.totalorder %v2463, 0
        %v2465 = vsub.s32 0, %v2463
        %v2466 = vsel %vm2464, %v2465, %v2463
        %v2467 = vclz %v2466
        %v2468 = vsub.s32 %v2467, 2
        %vm2469 = vcmp.gt.s32.totalorder 0, %v2468
        %v2470 = vsel %vm2469, 0, %v2468
        %v2471 = vsub.s32 32, %v2470
        %v2472 = vshll.u32 %v2463, %v2470
        %v2473 = vshrl.u32 %v2455, %v2471
        %v2474 = vor.u32 %v2472, %v2473
        %v2475 = vsub.s32 4294967266, %v2470
        %v2476 = vadd.s32 %v2475, 127
        %v2477 = vshll.u32 %v2476, 23
        %v2478 = vor.u32 4788187, %v2477
        %v2479 = vand.u32 2147483647, %v2478
        %v2481 = vcvt.s32.f32 %v2474
        %v2482 = vmul.f32 %v2481, %v2479
        %v2483 = vxor.u32 %v2482, 2147483648
        %v2484 = vsel %vm2401, %v2483, %v2482
        %v2485 = vsub.s32 4, %v2461
        %v2486 = vsel %vm2401, %v2485, %v2461
        %v2487 = vsel %vm2400, %v529, %v2484
        %v2488 = vsel %vm2400, 0, %v2486
        %v2489 = vcosq.f32.pop %v2487
        %v2490 = vsinq.f32.pop %v2487
        %vm2491 = vweird.f32 %v529
        %v2492 = vadd.s32 %v2488, 3
        %v2493 = vand.u32 %v2492, 3
        %vm2494 = vcmp.lt.s32.totalorder %v2493, 2
        %vm2495 = vcmp.eq.s32.totalorder %v2493, 0
        %v2496 = vxor.u32 %v2490, 2147483648
        %v2497 = vsel %vm2495, %v2489, %v2496
        %vm2498 = vcmp.eq.s32.totalorder %v2493, 2
        %v2499 = vxor.u32 %v2489, 2147483648
        %v2500 = vsel %vm2498, %v2499, %v2490
        %v2501 = vsel %vm2494, %v2497, %v2500
        %v2502 = vsel %vm2491, nan, %v2501
        %v2503 = vand.u32 2147483647, %v530
        %vm2504 = vcmp.le.f32.partialorder %v2503, 0.7853982
        %vm2505 = vcmp.lt.s32.totalorder %v530, 0
        %v2506 = vand.u32 %v530, 2139095040
        %v2507 = vshrl.u32 %v2506, 23
        %v2508 = vsub.s32 %v2507, 127
        %v2509 = vand.u32 2147483647, %v530
        %v2510 = vand.u32 %v2509, 8388607
        %v2511 = vor.u32 %v2510, 8388608
        %v2512 = vsub.s32 0, %v2511
        %v2513 = vadd.s32 %v2508, 1
        %vm2514 = vcmp.gt.s32.totalorder %v2513, 0
        %v2515 = vsel %vm2514, %v2513, 0
        %v2516 = vshrl.u32 %v2515, 5
        %v2517 = vand.u32 %v2515, 31
        %v2518 = vsub.s32 32, %v2517
        %v2519 = vshrl.u32 683565275, %v2518
        %v2520 = vshll.u32 683565275, %v2517
        %v2521 = vshrl.u32 2475754826, %v2518
        %v2522 = vor.u32 %v2520, %v2521
        %v2523 = vshll.u32 2475754826, %v2517
        %v2524 = vshrl.u32 2131351028, %v2518
        %v2525 = vor.u32 %v2523, %v2524
        %v2526 = vshll.u32 2131351028, %v2517
        %v2527 = vshrl.u32 2102212464, %v2518
        %v2528 = vor.u32 %v2526, %v2527
        %v2529 = vshll.u32 2102212464, %v2517
        %v2530 = vshrl.u32 920167782, %v2518
        %v2531 = vor.u32 %v2529, %v2530
        %v2532 = vshll.u32 920167782, %v2517
        %v2533 = vshrl.u32 1326507024, %v2518
        %v2534 = vor.u32 %v2532, %v2533
        %vm2535 = vcmp.lt.s32.totalorder %v2516, 1
        %vm2536 = vcmp.lt.s32.totalorder %v2516, 2
        %vm2537 = vcmp.lt.s32.totalorder %v2516, 3
        %vm2538 = vcmp.lt.s32.totalorder %v2516, 4
        %v2539 = vsel %vm2535, %v2519, %v2522
        %v2540 = vsel %vm2538, %v2528, 2102212464
        %v2541 = vsel %vm2537, %v2525, %v2540
        %v2542 = vsel %vm2536, %v2539, %v2541
        %v2543 = vsel %vm2535, %v2522, %v2525
        %v2544 = vsel %vm2538, %v2531, 920167782
        %v2545 = vsel %vm2537, %v2528, %v2544
        %v2546 = vsel %vm2536, %v2543, %v2545
        %v2547 = vsel %vm2535, %v2525, %v2528
        %v2548 = vsel %vm2538, %v2534, 1326507024
        %v2549 = vsel %vm2537, %v2531, %v2548
        %v2550 = vsel %vm2536, %v2547, %v2549
        %v2551 = vshll.u32 %v2511, 8
        %v2552 = vmul.u32.u64.compose %v2551, %v2550
        %v2553 = vextract.low.u32 %v2552
        %v2554 = vextract.high.u32 %v2552
        %v2555 = vmul.u32.u64.compose %v2551, %v2546
        %v2556 = vextract.low.u32 %v2555
        %v2557 = vextract.high.u32 %v2555
        %v2558 = vmul.u32 %v2551, %v2542
        %v2559 = vadd.s32 %v2554, %v2556
        %vm2560 = vc.u32 %v2554, %v2556
        %v2561 = vadd.s32 %v2557, 1
        %v2562 = vsel %vm2560, %v2561, %v2557
        %v2563 = vadd.s32 %v2558, %v2562
        %v2564 = vadd.s32 %v2563, 536870912
        %v2565 = vshrl.u32 %v2564, 30
        %v2566 = vshll.u32 %v2565, 30
        %v2567 = vsub.s32 %v2563, %v2566
        %vm2568 = vcmp.lt.s32.totalorder %v2567, 0
        %v2569 = vsub.s32 0, %v2567
        %v2570 = vsel %vm2568, %v2569, %v2567
        %v2571 = vclz %v2570
        %v2572 = vsub.s32 %v2571, 2
        %vm2573 = vcmp.gt.s32.totalorder 0, %v2572
        %v2574 = vsel %vm2573, 0, %v2572
        %v2575 = vsub.s32 32, %v2574
        %v2576 = vshll.u32 %v2567, %v2574
        %v2577 = vshrl.u32 %v2559, %v2575
        %v2578 = vor.u32 %v2576, %v2577
        %v2579 = vsub.s32 4294967266, %v2574
        %v2580 = vadd.s32 %v2579, 127
        %v2581 = vshll.u32 %v2580, 23
        %v2582 = vor.u32 4788187, %v2581
        %v2583 = vand.u32 2147483647, %v2582
        %v2585 = vcvt.s32.f32 %v2578
        %v2586 = vmul.f32 %v2585, %v2583
        %v2587 = vxor.u32 %v2586, 2147483648
        %v2588 = vsel %vm2505, %v2587, %v2586
        %v2589 = vsub.s32 4, %v2565
        %v2590 = vsel %vm2505, %v2589, %v2565
        %v2591 = vsel %vm2504, %v530, %v2588
        %v2592 = vsel %vm2504, 0, %v2590
        %v2593 = vcosq.f32.pop %v2591
        %v2594 = vsinq.f32.pop %v2591
        %vm2595 = vweird.f32 %v530
        %v2596 = vadd.s32 %v2592, 3
        %v2597 = vand.u32 %v2596, 3
        %vm2598 = vcmp.lt.s32.totalorder %v2597, 2
        %vm2599 = vcmp.eq.s32.totalorder %v2597, 0
        %v2600 = vxor.u32 %v2594, 2147483648
        %v2601 = vsel %vm2599, %v2593, %v2600
        %vm2602 = vcmp.eq.s32.totalorder %v2597, 2
        %v2603 = vxor.u32 %v2593, 2147483648
        %v2604 = vsel %vm2602, %v2603, %v2594
        %v2605 = vsel %vm2598, %v2601, %v2604
        %v2606 = vsel %vm2595, nan, %v2605
        %v2607 = vand.u32 2147483647, %v531
        %vm2608 = vcmp.le.f32.partialorder %v2607, 0.7853982
        %vm2609 = vcmp.lt.s32.totalorder %v531, 0
        %v2610 = vand.u32 %v531, 2139095040
        %v2611 = vshrl.u32 %v2610, 23
        %v2612 = vsub.s32 %v2611, 127
        %v2613 = vand.u32 2147483647, %v531
        %v2614 = vand.u32 %v2613, 8388607
        %v2615 = vor.u32 %v2614, 8388608
        %v2616 = vsub.s32 0, %v2615
        %v2617 = vadd.s32 %v2612, 1
        %vm2618 = vcmp.gt.s32.totalorder %v2617, 0
        %v2619 = vsel %vm2618, %v2617, 0
        %v2620 = vshrl.u32 %v2619, 5
        %v2621 = vand.u32 %v2619, 31
        %v2622 = vsub.s32 32, %v2621
        %v2623 = vshrl.u32 683565275, %v2622
        %v2624 = vshll.u32 683565275, %v2621
        %v2625 = vshrl.u32 2475754826, %v2622
        %v2626 = vor.u32 %v2624, %v2625
        %v2627 = vshll.u32 2475754826, %v2621
        %v2628 = vshrl.u32 2131351028, %v2622
        %v2629 = vor.u32 %v2627, %v2628
        %v2630 = vshll.u32 2131351028, %v2621
        %v2631 = vshrl.u32 2102212464, %v2622
        %v2632 = vor.u32 %v2630, %v2631
        %v2633 = vshll.u32 2102212464, %v2621
        %v2634 = vshrl.u32 920167782, %v2622
        %v2635 = vor.u32 %v2633, %v2634
        %v2636 = vshll.u32 920167782, %v2621
        %v2637 = vshrl.u32 1326507024, %v2622
        %v2638 = vor.u32 %v2636, %v2637
        %vm2639 = vcmp.lt.s32.totalorder %v2620, 1
        %vm2640 = vcmp.lt.s32.totalorder %v2620, 2
        %vm2641 = vcmp.lt.s32.totalorder %v2620, 3
        %vm2642 = vcmp.lt.s32.totalorder %v2620, 4
        %v2643 = vsel %vm2639, %v2623, %v2626
        %v2644 = vsel %vm2642, %v2632, 2102212464
        %v2645 = vsel %vm2641, %v2629, %v2644
        %v2646 = vsel %vm2640, %v2643, %v2645
        %v2647 = vsel %vm2639, %v2626, %v2629
        %v2648 = vsel %vm2642, %v2635, 920167782
        %v2649 = vsel %vm2641, %v2632, %v2648
        %v2650 = vsel %vm2640, %v2647, %v2649
        %v2651 = vsel %vm2639, %v2629, %v2632
        %v2652 = vsel %vm2642, %v2638, 1326507024
        %v2653 = vsel %vm2641, %v2635, %v2652
        %v2654 = vsel %vm2640, %v2651, %v2653
        %v2655 = vshll.u32 %v2615, 8
        %v2656 = vmul.u32.u64.compose %v2655, %v2654
        %v2657 = vextract.low.u32 %v2656
        %v2658 = vextract.high.u32 %v2656
        %v2659 = vmul.u32.u64.compose %v2655, %v2650
        %v2660 = vextract.low.u32 %v2659
        %v2661 = vextract.high.u32 %v2659
        %v2662 = vmul.u32 %v2655, %v2646
        %v2663 = vadd.s32 %v2658, %v2660
        %vm2664 = vc.u32 %v2658, %v2660
        %v2665 = vadd.s32 %v2661, 1
        %v2666 = vsel %vm2664, %v2665, %v2661
        %v2667 = vadd.s32 %v2662, %v2666
        %v2668 = vadd.s32 %v2667, 536870912
        %v2669 = vshrl.u32 %v2668, 30
        %v2670 = vshll.u32 %v2669, 30
        %v2671 = vsub.s32 %v2667, %v2670
        %vm2672 = vcmp.lt.s32.totalorder %v2671, 0
        %v2673 = vsub.s32 0, %v2671
        %v2674 = vsel %vm2672, %v2673, %v2671
        %v2675 = vclz %v2674
        %v2676 = vsub.s32 %v2675, 2
        %vm2677 = vcmp.gt.s32.totalorder 0, %v2676
        %v2678 = vsel %vm2677, 0, %v2676
        %v2679 = vsub.s32 32, %v2678
        %v2680 = vshll.u32 %v2671, %v2678
        %v2681 = vshrl.u32 %v2663, %v2679
        %v2682 = vor.u32 %v2680, %v2681
        %v2683 = vsub.s32 4294967266, %v2678
        %v2684 = vadd.s32 %v2683, 127
        %v2685 = vshll.u32 %v2684, 23
        %v2686 = vor.u32 4788187, %v2685
        %v2687 = vand.u32 2147483647, %v2686
        %v2689 = vcvt.s32.f32 %v2682
        %v2690 = vmul.f32 %v2689, %v2687
        %v2691 = vxor.u32 %v2690, 2147483648
        %v2692 = vsel %vm2609, %v2691, %v2690
        %v2693 = vsub.s32 4, %v2669
        %v2694 = vsel %vm2609, %v2693, %v2669
        %v2695 = vsel %vm2608, %v531, %v2692
        %v2696 = vsel %vm2608, 0, %v2694
        %v2697 = vcosq.f32.pop %v2695
        %v2698 = vsinq.f32.pop %v2695
        %vm2699 = vweird.f32 %v531
        %v2700 = vadd.s32 %v2696, 3
        %v2701 = vand.u32 %v2700, 3
        %vm2702 = vcmp.lt.s32.totalorder %v2701, 2
        %vm2703 = vcmp.eq.s32.totalorder %v2701, 0
        %v2704 = vxor.u32 %v2698, 2147483648
        %v2705 = vsel %vm2703, %v2697, %v2704
        %vm2706 = vcmp.eq.s32.totalorder %v2701, 2
        %v2707 = vxor.u32 %v2697, 2147483648
        %v2708 = vsel %vm2706, %v2707, %v2698
        %v2709 = vsel %vm2702, %v2705, %v2708
        %v2710 = vsel %vm2699, nan, %v2709
        %v2711 = vand.u32 2147483647, %v532
        %vm2712 = vcmp.le.f32.partialorder %v2711, 0.7853982
        %vm2713 = vcmp.lt.s32.totalorder %v532, 0
        %v2714 = vand.u32 %v532, 2139095040
        %v2715 = vshrl.u32 %v2714, 23
        %v2716 = vsub.s32 %v2715, 127
        %v2717 = vand.u32 2147483647, %v532
        %v2718 = vand.u32 %v2717, 8388607
        %v2719 = vor.u32 %v2718, 8388608
        %v2720 = vsub.s32 0, %v2719
        %v2721 = vadd.s32 %v2716, 1
        %vm2722 = vcmp.gt.s32.totalorder %v2721, 0
        %v2723 = vsel %vm2722, %v2721, 0
        %v2724 = vshrl.u32 %v2723, 5
        %v2725 = vand.u32 %v2723, 31
        %v2726 = vsub.s32 32, %v2725
        %v2727 = vshrl.u32 683565275, %v2726
        %v2728 = vshll.u32 683565275, %v2725
        %v2729 = vshrl.u32 2475754826, %v2726
        %v2730 = vor.u32 %v2728, %v2729
        %v2731 = vshll.u32 2475754826, %v2725
        %v2732 = vshrl.u32 2131351028, %v2726
        %v2733 = vor.u32 %v2731, %v2732
        %v2734 = vshll.u32 2131351028, %v2725
        %v2735 = vshrl.u32 2102212464, %v2726
        %v2736 = vor.u32 %v2734, %v2735
        %v2737 = vshll.u32 2102212464, %v2725
        %v2738 = vshrl.u32 920167782, %v2726
        %v2739 = vor.u32 %v2737, %v2738
        %v2740 = vshll.u32 920167782, %v2725
        %v2741 = vshrl.u32 1326507024, %v2726
        %v2742 = vor.u32 %v2740, %v2741
        %vm2743 = vcmp.lt.s32.totalorder %v2724, 1
        %vm2744 = vcmp.lt.s32.totalorder %v2724, 2
        %vm2745 = vcmp.lt.s32.totalorder %v2724, 3
        %vm2746 = vcmp.lt.s32.totalorder %v2724, 4
        %v2747 = vsel %vm2743, %v2727, %v2730
        %v2748 = vsel %vm2746, %v2736, 2102212464
        %v2749 = vsel %vm2745, %v2733, %v2748
        %v2750 = vsel %vm2744, %v2747, %v2749
        %v2751 = vsel %vm2743, %v2730, %v2733
        %v2752 = vsel %vm2746, %v2739, 920167782
        %v2753 = vsel %vm2745, %v2736, %v2752
        %v2754 = vsel %vm2744, %v2751, %v2753
        %v2755 = vsel %vm2743, %v2733, %v2736
        %v2756 = vsel %vm2746, %v2742, 1326507024
        %v2757 = vsel %vm2745, %v2739, %v2756
        %v2758 = vsel %vm2744, %v2755, %v2757
        %v2759 = vshll.u32 %v2719, 8
        %v2760 = vmul.u32.u64.compose %v2759, %v2758
        %v2761 = vextract.low.u32 %v2760
        %v2762 = vextract.high.u32 %v2760
        %v2763 = vmul.u32.u64.compose %v2759, %v2754
        %v2764 = vextract.low.u32 %v2763
        %v2765 = vextract.high.u32 %v2763
        %v2766 = vmul.u32 %v2759, %v2750
        %v2767 = vadd.s32 %v2762, %v2764
        %vm2768 = vc.u32 %v2762, %v2764
        %v2769 = vadd.s32 %v2765, 1
        %v2770 = vsel %vm2768, %v2769, %v2765
        %v2771 = vadd.s32 %v2766, %v2770
        %v2772 = vadd.s32 %v2771, 536870912
        %v2773 = vshrl.u32 %v2772, 30
        %v2774 = vshll.u32 %v2773, 30
        %v2775 = vsub.s32 %v2771, %v2774
        %vm2776 = vcmp.lt.s32.totalorder %v2775, 0
        %v2777 = vsub.s32 0, %v2775
        %v2778 = vsel %vm2776, %v2777, %v2775
        %v2779 = vclz %v2778
        %v2780 = vsub.s32 %v2779, 2
        %vm2781 = vcmp.gt.s32.totalorder 0, %v2780
        %v2782 = vsel %vm2781, 0, %v2780
        %v2783 = vsub.s32 32, %v2782
        %v2784 = vshll.u32 %v2775, %v2782
        %v2785 = vshrl.u32 %v2767, %v2783
        %v2786 = vor.u32 %v2784, %v2785
        %v2787 = vsub.s32 4294967266, %v2782
        %v2788 = vadd.s32 %v2787, 127
        %v2789 = vshll.u32 %v2788, 23
        %v2790 = vor.u32 4788187, %v2789
        %v2791 = vand.u32 2147483647, %v2790
        %v2793 = vcvt.s32.f32 %v2786
        %v2794 = vmul.f32 %v2793, %v2791
        %v2795 = vxor.u32 %v2794, 2147483648
        %v2796 = vsel %vm2713, %v2795, %v2794
        %v2797 = vsub.s32 4, %v2773
        %v2798 = vsel %vm2713, %v2797, %v2773
        %v2799 = vsel %vm2712, %v532, %v2796
        %v2800 = vsel %vm2712, 0, %v2798
        %v2801 = vcosq.f32.pop %v2799
        %v2802 = vsinq.f32.pop %v2799
        %vm2803 = vweird.f32 %v532
        %v2804 = vadd.s32 %v2800, 3
        %v2805 = vand.u32 %v2804, 3
        %vm2806 = vcmp.lt.s32.totalorder %v2805, 2
        %vm2807 = vcmp.eq.s32.totalorder %v2805, 0
        %v2808 = vxor.u32 %v2802, 2147483648
        %v2809 = vsel %vm2807, %v2801, %v2808
        %vm2810 = vcmp.eq.s32.totalorder %v2805, 2
        %v2811 = vxor.u32 %v2801, 2147483648
        %v2812 = vsel %vm2810, %v2811, %v2802
        %v2813 = vsel %vm2806, %v2809, %v2812
        %v2814 = vsel %vm2803, nan, %v2813
        %v2815 = vand.u32 2147483647, %v533
        %vm2816 = vcmp.le.f32.partialorder %v2815, 0.7853982
        %vm2817 = vcmp.lt.s32.totalorder %v533, 0
        %v2818 = vand.u32 %v533, 2139095040
        %v2819 = vshrl.u32 %v2818, 23
        %v2820 = vsub.s32 %v2819, 127
        %v2821 = vand.u32 2147483647, %v533
        %v2822 = vand.u32 %v2821, 8388607
        %v2823 = vor.u32 %v2822, 8388608
        %v2824 = vsub.s32 0, %v2823
        %v2825 = vadd.s32 %v2820, 1
        %vm2826 = vcmp.gt.s32.totalorder %v2825, 0
        %v2827 = vsel %vm2826, %v2825, 0
        %v2828 = vshrl.u32 %v2827, 5
        %v2829 = vand.u32 %v2827, 31
        %v2830 = vsub.s32 32, %v2829
        %v2831 = vshrl.u32 683565275, %v2830
        %v2832 = vshll.u32 683565275, %v2829
        %v2833 = vshrl.u32 2475754826, %v2830
        %v2834 = vor.u32 %v2832, %v2833
        %v2835 = vshll.u32 2475754826, %v2829
        %v2836 = vshrl.u32 2131351028, %v2830
        %v2837 = vor.u32 %v2835, %v2836
        %v2838 = vshll.u32 2131351028, %v2829
        %v2839 = vshrl.u32 2102212464, %v2830
        %v2840 = vor.u32 %v2838, %v2839
        %v2841 = vshll.u32 2102212464, %v2829
        %v2842 = vshrl.u32 920167782, %v2830
        %v2843 = vor.u32 %v2841, %v2842
        %v2844 = vshll.u32 920167782, %v2829
        %v2845 = vshrl.u32 1326507024, %v2830
        %v2846 = vor.u32 %v2844, %v2845
        %vm2847 = vcmp.lt.s32.totalorder %v2828, 1
        %vm2848 = vcmp.lt.s32.totalorder %v2828, 2
        %vm2849 = vcmp.lt.s32.totalorder %v2828, 3
        %vm2850 = vcmp.lt.s32.totalorder %v2828, 4
        %v2851 = vsel %vm2847, %v2831, %v2834
        %v2852 = vsel %vm2850, %v2840, 2102212464
        %v2853 = vsel %vm2849, %v2837, %v2852
        %v2854 = vsel %vm2848, %v2851, %v2853
        %v2855 = vsel %vm2847, %v2834, %v2837
        %v2856 = vsel %vm2850, %v2843, 920167782
        %v2857 = vsel %vm2849, %v2840, %v2856
        %v2858 = vsel %vm2848, %v2855, %v2857
        %v2859 = vsel %vm2847, %v2837, %v2840
        %v2860 = vsel %vm2850, %v2846, 1326507024
        %v2861 = vsel %vm2849, %v2843, %v2860
        %v2862 = vsel %vm2848, %v2859, %v2861
        %v2863 = vshll.u32 %v2823, 8
        %v2864 = vmul.u32.u64.compose %v2863, %v2862
        %v2865 = vextract.low.u32 %v2864
        %v2866 = vextract.high.u32 %v2864
        %v2867 = vmul.u32.u64.compose %v2863, %v2858
        %v2868 = vextract.low.u32 %v2867
        %v2869 = vextract.high.u32 %v2867
        %v2870 = vmul.u32 %v2863, %v2854
        %v2871 = vadd.s32 %v2866, %v2868
        %vm2872 = vc.u32 %v2866, %v2868
        %v2873 = vadd.s32 %v2869, 1
        %v2874 = vsel %vm2872, %v2873, %v2869
        %v2875 = vadd.s32 %v2870, %v2874
        %v2876 = vadd.s32 %v2875, 536870912
        %v2877 = vshrl.u32 %v2876, 30
        %v2878 = vshll.u32 %v2877, 30
        %v2879 = vsub.s32 %v2875, %v2878
        %vm2880 = vcmp.lt.s32.totalorder %v2879, 0
        %v2881 = vsub.s32 0, %v2879
        %v2882 = vsel %vm2880, %v2881, %v2879
        %v2883 = vclz %v2882
        %v2884 = vsub.s32 %v2883, 2
        %vm2885 = vcmp.gt.s32.totalorder 0, %v2884
        %v2886 = vsel %vm2885, 0, %v2884
        %v2887 = vsub.s32 32, %v2886
        %v2888 = vshll.u32 %v2879, %v2886
        %v2889 = vshrl.u32 %v2871, %v2887
        %v2890 = vor.u32 %v2888, %v2889
        %v2891 = vsub.s32 4294967266, %v2886
        %v2892 = vadd.s32 %v2891, 127
        %v2893 = vshll.u32 %v2892, 23
        %v2894 = vor.u32 4788187, %v2893
        %v2895 = vand.u32 2147483647, %v2894
        %v2897 = vcvt.s32.f32 %v2890
        %v2898 = vmul.f32 %v2897, %v2895
        %v2899 = vxor.u32 %v2898, 2147483648
        %v2900 = vsel %vm2817, %v2899, %v2898
        %v2901 = vsub.s32 4, %v2877
        %v2902 = vsel %vm2817, %v2901, %v2877
        %v2903 = vsel %vm2816, %v533, %v2900
        %v2904 = vsel %vm2816, 0, %v2902
        %v2905 = vcosq.f32.pop %v2903
        %v2906 = vsinq.f32.pop %v2903
        %vm2907 = vweird.f32 %v533
        %v2908 = vadd.s32 %v2904, 3
        %v2909 = vand.u32 %v2908, 3
        %vm2910 = vcmp.lt.s32.totalorder %v2909, 2
        %vm2911 = vcmp.eq.s32.totalorder %v2909, 0
        %v2912 = vxor.u32 %v2906, 2147483648
        %v2913 = vsel %vm2911, %v2905, %v2912
        %vm2914 = vcmp.eq.s32.totalorder %v2909, 2
        %v2915 = vxor.u32 %v2905, 2147483648
        %v2916 = vsel %vm2914, %v2915, %v2906
        %v2917 = vsel %vm2910, %v2913, %v2916
        %v2918 = vsel %vm2907, nan, %v2917
        %v2919 = vand.u32 2147483647, %v534
        %vm2920 = vcmp.le.f32.partialorder %v2919, 0.7853982
        %vm2921 = vcmp.lt.s32.totalorder %v534, 0
        %v2922 = vand.u32 %v534, 2139095040
        %v2923 = vshrl.u32 %v2922, 23
        %v2924 = vsub.s32 %v2923, 127
        %v2925 = vand.u32 2147483647, %v534
        %v2926 = vand.u32 %v2925, 8388607
        %v2927 = vor.u32 %v2926, 8388608
        %v2928 = vsub.s32 0, %v2927
        %v2929 = vadd.s32 %v2924, 1
        %vm2930 = vcmp.gt.s32.totalorder %v2929, 0
        %v2931 = vsel %vm2930, %v2929, 0
        %v2932 = vshrl.u32 %v2931, 5
        %v2933 = vand.u32 %v2931, 31
        %v2934 = vsub.s32 32, %v2933
        %v2935 = vshrl.u32 683565275, %v2934
        %v2936 = vshll.u32 683565275, %v2933
        %v2937 = vshrl.u32 2475754826, %v2934
        %v2938 = vor.u32 %v2936, %v2937
        %v2939 = vshll.u32 2475754826, %v2933
        %v2940 = vshrl.u32 2131351028, %v2934
        %v2941 = vor.u32 %v2939, %v2940
        %v2942 = vshll.u32 2131351028, %v2933
        %v2943 = vshrl.u32 2102212464, %v2934
        %v2944 = vor.u32 %v2942, %v2943
        %v2945 = vshll.u32 2102212464, %v2933
        %v2946 = vshrl.u32 920167782, %v2934
        %v2947 = vor.u32 %v2945, %v2946
        %v2948 = vshll.u32 920167782, %v2933
        %v2949 = vshrl.u32 1326507024, %v2934
        %v2950 = vor.u32 %v2948, %v2949
        %vm2951 = vcmp.lt.s32.totalorder %v2932, 1
        %vm2952 = vcmp.lt.s32.totalorder %v2932, 2
        %vm2953 = vcmp.lt.s32.totalorder %v2932, 3
        %vm2954 = vcmp.lt.s32.totalorder %v2932, 4
        %v2955 = vsel %vm2951, %v2935, %v2938
        %v2956 = vsel %vm2954, %v2944, 2102212464
        %v2957 = vsel %vm2953, %v2941, %v2956
        %v2958 = vsel %vm2952, %v2955, %v2957
        %v2959 = vsel %vm2951, %v2938, %v2941
        %v2960 = vsel %vm2954, %v2947, 920167782
        %v2961 = vsel %vm2953, %v2944, %v2960
        %v2962 = vsel %vm2952, %v2959, %v2961
        %v2963 = vsel %vm2951, %v2941, %v2944
        %v2964 = vsel %vm2954, %v2950, 1326507024
        %v2965 = vsel %vm2953, %v2947, %v2964
        %v2966 = vsel %vm2952, %v2963, %v2965
        %v2967 = vshll.u32 %v2927, 8
        %v2968 = vmul.u32.u64.compose %v2967, %v2966
        %v2969 = vextract.low.u32 %v2968
        %v2970 = vextract.high.u32 %v2968
        %v2971 = vmul.u32.u64.compose %v2967, %v2962
        %v2972 = vextract.low.u32 %v2971
        %v2973 = vextract.high.u32 %v2971
        %v2974 = vmul.u32 %v2967, %v2958
        %v2975 = vadd.s32 %v2970, %v2972
        %vm2976 = vc.u32 %v2970, %v2972
        %v2977 = vadd.s32 %v2973, 1
        %v2978 = vsel %vm2976, %v2977, %v2973
        %v2979 = vadd.s32 %v2974, %v2978
        %v2980 = vadd.s32 %v2979, 536870912
        %v2981 = vshrl.u32 %v2980, 30
        %v2982 = vshll.u32 %v2981, 30
        %v2983 = vsub.s32 %v2979, %v2982
        %vm2984 = vcmp.lt.s32.totalorder %v2983, 0
        %v2985 = vsub.s32 0, %v2983
        %v2986 = vsel %vm2984, %v2985, %v2983
        %v2987 = vclz %v2986
        %v2988 = vsub.s32 %v2987, 2
        %vm2989 = vcmp.gt.s32.totalorder 0, %v2988
        %v2990 = vsel %vm2989, 0, %v2988
        %v2991 = vsub.s32 32, %v2990
        %v2992 = vshll.u32 %v2983, %v2990
        %v2993 = vshrl.u32 %v2975, %v2991
        %v2994 = vor.u32 %v2992, %v2993
        %v2995 = vsub.s32 4294967266, %v2990
        %v2996 = vadd.s32 %v2995, 127
        %v2997 = vshll.u32 %v2996, 23
        %v2998 = vor.u32 4788187, %v2997
        %v2999 = vand.u32 2147483647, %v2998
        %v3001 = vcvt.s32.f32 %v2994
        %v3002 = vmul.f32 %v3001, %v2999
        %v3003 = vxor.u32 %v3002, 2147483648
        %v3004 = vsel %vm2921, %v3003, %v3002
        %v3005 = vsub.s32 4, %v2981
        %v3006 = vsel %vm2921, %v3005, %v2981
        %v3007 = vsel %vm2920, %v534, %v3004
        %v3008 = vsel %vm2920, 0, %v3006
        %v3009 = vcosq.f32.pop %v3007
        %v3010 = vsinq.f32.pop %v3007
        %vm3011 = vweird.f32 %v534
        %v3012 = vadd.s32 %v3008, 3
        %v3013 = vand.u32 %v3012, 3
        %vm3014 = vcmp.lt.s32.totalorder %v3013, 2
        %vm3015 = vcmp.eq.s32.totalorder %v3013, 0
        %v3016 = vxor.u32 %v3010, 2147483648
        %v3017 = vsel %vm3015, %v3009, %v3016
        %vm3018 = vcmp.eq.s32.totalorder %v3013, 2
        %v3019 = vxor.u32 %v3009, 2147483648
        %v3020 = vsel %vm3018, %v3019, %v3010
        %v3021 = vsel %vm3014, %v3017, %v3020
        %v3022 = vsel %vm3011, nan, %v3021
        %v3023 = vand.u32 2147483647, %v535
        %vm3024 = vcmp.le.f32.partialorder %v3023, 0.7853982
        %vm3025 = vcmp.lt.s32.totalorder %v535, 0
        %v3026 = vand.u32 %v535, 2139095040
        %v3027 = vshrl.u32 %v3026, 23
        %v3028 = vsub.s32 %v3027, 127
        %v3029 = vand.u32 2147483647, %v535
        %v3030 = vand.u32 %v3029, 8388607
        %v3031 = vor.u32 %v3030, 8388608
        %v3032 = vsub.s32 0, %v3031
        %v3033 = vadd.s32 %v3028, 1
        %vm3034 = vcmp.gt.s32.totalorder %v3033, 0
        %v3035 = vsel %vm3034, %v3033, 0
        %v3036 = vshrl.u32 %v3035, 5
        %v3037 = vand.u32 %v3035, 31
        %v3038 = vsub.s32 32, %v3037
        %v3039 = vshrl.u32 683565275, %v3038
        %v3040 = vshll.u32 683565275, %v3037
        %v3041 = vshrl.u32 2475754826, %v3038
        %v3042 = vor.u32 %v3040, %v3041
        %v3043 = vshll.u32 2475754826, %v3037
        %v3044 = vshrl.u32 2131351028, %v3038
        %v3045 = vor.u32 %v3043, %v3044
        %v3046 = vshll.u32 2131351028, %v3037
        %v3047 = vshrl.u32 2102212464, %v3038
        %v3048 = vor.u32 %v3046, %v3047
        %v3049 = vshll.u32 2102212464, %v3037
        %v3050 = vshrl.u32 920167782, %v3038
        %v3051 = vor.u32 %v3049, %v3050
        %v3052 = vshll.u32 920167782, %v3037
        %v3053 = vshrl.u32 1326507024, %v3038
        %v3054 = vor.u32 %v3052, %v3053
        %vm3055 = vcmp.lt.s32.totalorder %v3036, 1
        %vm3056 = vcmp.lt.s32.totalorder %v3036, 2
        %vm3057 = vcmp.lt.s32.totalorder %v3036, 3
        %vm3058 = vcmp.lt.s32.totalorder %v3036, 4
        %v3059 = vsel %vm3055, %v3039, %v3042
        %v3060 = vsel %vm3058, %v3048, 2102212464
        %v3061 = vsel %vm3057, %v3045, %v3060
        %v3062 = vsel %vm3056, %v3059, %v3061
        %v3063 = vsel %vm3055, %v3042, %v3045
        %v3064 = vsel %vm3058, %v3051, 920167782
        %v3065 = vsel %vm3057, %v3048, %v3064
        %v3066 = vsel %vm3056, %v3063, %v3065
        %v3067 = vsel %vm3055, %v3045, %v3048
        %v3068 = vsel %vm3058, %v3054, 1326507024
        %v3069 = vsel %vm3057, %v3051, %v3068
        %v3070 = vsel %vm3056, %v3067, %v3069
        %v3071 = vshll.u32 %v3031, 8
        %v3072 = vmul.u32.u64.compose %v3071, %v3070
        %v3073 = vextract.low.u32 %v3072
        %v3074 = vextract.high.u32 %v3072
        %v3075 = vmul.u32.u64.compose %v3071, %v3066
        %v3076 = vextract.low.u32 %v3075
        %v3077 = vextract.high.u32 %v3075
        %v3078 = vmul.u32 %v3071, %v3062
        %v3079 = vadd.s32 %v3074, %v3076
        %vm3080 = vc.u32 %v3074, %v3076
        %v3081 = vadd.s32 %v3077, 1
        %v3082 = vsel %vm3080, %v3081, %v3077
        %v3083 = vadd.s32 %v3078, %v3082
        %v3084 = vadd.s32 %v3083, 536870912
        %v3085 = vshrl.u32 %v3084, 30
        %v3086 = vshll.u32 %v3085, 30
        %v3087 = vsub.s32 %v3083, %v3086
        %vm3088 = vcmp.lt.s32.totalorder %v3087, 0
        %v3089 = vsub.s32 0, %v3087
        %v3090 = vsel %vm3088, %v3089, %v3087
        %v3091 = vclz %v3090
        %v3092 = vsub.s32 %v3091, 2
        %vm3093 = vcmp.gt.s32.totalorder 0, %v3092
        %v3094 = vsel %vm3093, 0, %v3092
        %v3095 = vsub.s32 32, %v3094
        %v3096 = vshll.u32 %v3087, %v3094
        %v3097 = vshrl.u32 %v3079, %v3095
        %v3098 = vor.u32 %v3096, %v3097
        %v3099 = vsub.s32 4294967266, %v3094
        %v3100 = vadd.s32 %v3099, 127
        %v3101 = vshll.u32 %v3100, 23
        %v3102 = vor.u32 4788187, %v3101
        %v3103 = vand.u32 2147483647, %v3102
        %v3105 = vcvt.s32.f32 %v3098
        %v3106 = vmul.f32 %v3105, %v3103
        %v3107 = vxor.u32 %v3106, 2147483648
        %v3108 = vsel %vm3025, %v3107, %v3106
        %v3109 = vsub.s32 4, %v3085
        %v3110 = vsel %vm3025, %v3109, %v3085
        %v3111 = vsel %vm3024, %v535, %v3108
        %v3112 = vsel %vm3024, 0, %v3110
        %v3113 = vcosq.f32.pop %v3111
        %v3114 = vsinq.f32.pop %v3111
        %vm3115 = vweird.f32 %v535
        %v3116 = vadd.s32 %v3112, 3
        %v3117 = vand.u32 %v3116, 3
        %vm3118 = vcmp.lt.s32.totalorder %v3117, 2
        %vm3119 = vcmp.eq.s32.totalorder %v3117, 0
        %v3120 = vxor.u32 %v3114, 2147483648
        %v3121 = vsel %vm3119, %v3113, %v3120
        %vm3122 = vcmp.eq.s32.totalorder %v3117, 2
        %v3123 = vxor.u32 %v3113, 2147483648
        %v3124 = vsel %vm3122, %v3123, %v3114
        %v3125 = vsel %vm3118, %v3121, %v3124
        %v3126 = vsel %vm3115, nan, %v3125
        %v3127 = vand.u32 2147483647, %v536
        %vm3128 = vcmp.le.f32.partialorder %v3127, 0.7853982
        %vm3129 = vcmp.lt.s32.totalorder %v536, 0
        %v3130 = vand.u32 %v536, 2139095040
        %v3131 = vshrl.u32 %v3130, 23
        %v3132 = vsub.s32 %v3131, 127
        %v3133 = vand.u32 2147483647, %v536
        %v3134 = vand.u32 %v3133, 8388607
        %v3135 = vor.u32 %v3134, 8388608
        %v3136 = vsub.s32 0, %v3135
        %v3137 = vadd.s32 %v3132, 1
        %vm3138 = vcmp.gt.s32.totalorder %v3137, 0
        %v3139 = vsel %vm3138, %v3137, 0
        %v3140 = vshrl.u32 %v3139, 5
        %v3141 = vand.u32 %v3139, 31
        %v3142 = vsub.s32 32, %v3141
        %v3143 = vshrl.u32 683565275, %v3142
        %v3144 = vshll.u32 683565275, %v3141
        %v3145 = vshrl.u32 2475754826, %v3142
        %v3146 = vor.u32 %v3144, %v3145
        %v3147 = vshll.u32 2475754826, %v3141
        %v3148 = vshrl.u32 2131351028, %v3142
        %v3149 = vor.u32 %v3147, %v3148
        %v3150 = vshll.u32 2131351028, %v3141
        %v3151 = vshrl.u32 2102212464, %v3142
        %v3152 = vor.u32 %v3150, %v3151
        %v3153 = vshll.u32 2102212464, %v3141
        %v3154 = vshrl.u32 920167782, %v3142
        %v3155 = vor.u32 %v3153, %v3154
        %v3156 = vshll.u32 920167782, %v3141
        %v3157 = vshrl.u32 1326507024, %v3142
        %v3158 = vor.u32 %v3156, %v3157
        %vm3159 = vcmp.lt.s32.totalorder %v3140, 1
        %vm3160 = vcmp.lt.s32.totalorder %v3140, 2
        %vm3161 = vcmp.lt.s32.totalorder %v3140, 3
        %vm3162 = vcmp.lt.s32.totalorder %v3140, 4
        %v3163 = vsel %vm3159, %v3143, %v3146
        %v3164 = vsel %vm3162, %v3152, 2102212464
        %v3165 = vsel %vm3161, %v3149, %v3164
        %v3166 = vsel %vm3160, %v3163, %v3165
        %v3167 = vsel %vm3159, %v3146, %v3149
        %v3168 = vsel %vm3162, %v3155, 920167782
        %v3169 = vsel %vm3161, %v3152, %v3168
        %v3170 = vsel %vm3160, %v3167, %v3169
        %v3171 = vsel %vm3159, %v3149, %v3152
        %v3172 = vsel %vm3162, %v3158, 1326507024
        %v3173 = vsel %vm3161, %v3155, %v3172
        %v3174 = vsel %vm3160, %v3171, %v3173
        %v3175 = vshll.u32 %v3135, 8
        %v3176 = vmul.u32.u64.compose %v3175, %v3174
        %v3177 = vextract.low.u32 %v3176
        %v3178 = vextract.high.u32 %v3176
        %v3179 = vmul.u32.u64.compose %v3175, %v3170
        %v3180 = vextract.low.u32 %v3179
        %v3181 = vextract.high.u32 %v3179
        %v3182 = vmul.u32 %v3175, %v3166
        %v3183 = vadd.s32 %v3178, %v3180
        %vm3184 = vc.u32 %v3178, %v3180
        %v3185 = vadd.s32 %v3181, 1
        %v3186 = vsel %vm3184, %v3185, %v3181
        %v3187 = vadd.s32 %v3182, %v3186
        %v3188 = vadd.s32 %v3187, 536870912
        %v3189 = vshrl.u32 %v3188, 30
        %v3190 = vshll.u32 %v3189, 30
        %v3191 = vsub.s32 %v3187, %v3190
        %vm3192 = vcmp.lt.s32.totalorder %v3191, 0
        %v3193 = vsub.s32 0, %v3191
        %v3194 = vsel %vm3192, %v3193, %v3191
        %v3195 = vclz %v3194
        %v3196 = vsub.s32 %v3195, 2
        %vm3197 = vcmp.gt.s32.totalorder 0, %v3196
        %v3198 = vsel %vm3197, 0, %v3196
        %v3199 = vsub.s32 32, %v3198
        %v3200 = vshll.u32 %v3191, %v3198
        %v3201 = vshrl.u32 %v3183, %v3199
        %v3202 = vor.u32 %v3200, %v3201
        %v3203 = vsub.s32 4294967266, %v3198
        %v3204 = vadd.s32 %v3203, 127
        %v3205 = vshll.u32 %v3204, 23
        %v3206 = vor.u32 4788187, %v3205
        %v3207 = vand.u32 2147483647, %v3206
        %v3209 = vcvt.s32.f32 %v3202
        %v3210 = vmul.f32 %v3209, %v3207
        %v3211 = vxor.u32 %v3210, 2147483648
        %v3212 = vsel %vm3129, %v3211, %v3210
        %v3213 = vsub.s32 4, %v3189
        %v3214 = vsel %vm3129, %v3213, %v3189
        %v3215 = vsel %vm3128, %v536, %v3212
        %v3216 = vsel %vm3128, 0, %v3214
        %v3217 = vcosq.f32.pop %v3215
        %v3218 = vsinq.f32.pop %v3215
        %vm3219 = vweird.f32 %v536
        %v3220 = vadd.s32 %v3216, 3
        %v3221 = vand.u32 %v3220, 3
        %vm3222 = vcmp.lt.s32.totalorder %v3221, 2
        %vm3223 = vcmp.eq.s32.totalorder %v3221, 0
        %v3224 = vxor.u32 %v3218, 2147483648
        %v3225 = vsel %vm3223, %v3217, %v3224
        %vm3226 = vcmp.eq.s32.totalorder %v3221, 2
        %v3227 = vxor.u32 %v3217, 2147483648
        %v3228 = vsel %vm3226, %v3227, %v3218
        %v3229 = vsel %vm3222, %v3225, %v3228
        %v3230 = vsel %vm3219, nan, %v3229
        %v3231 = vand.u32 2147483647, %v537
        %vm3232 = vcmp.le.f32.partialorder %v3231, 0.7853982
        %vm3233 = vcmp.lt.s32.totalorder %v537, 0
        %v3234 = vand.u32 %v537, 2139095040
        %v3235 = vshrl.u32 %v3234, 23
        %v3236 = vsub.s32 %v3235, 127
        %v3237 = vand.u32 2147483647, %v537
        %v3238 = vand.u32 %v3237, 8388607
        %v3239 = vor.u32 %v3238, 8388608
        %v3240 = vsub.s32 0, %v3239
        %v3241 = vadd.s32 %v3236, 1
        %vm3242 = vcmp.gt.s32.totalorder %v3241, 0
        %v3243 = vsel %vm3242, %v3241, 0
        %v3244 = vshrl.u32 %v3243, 5
        %v3245 = vand.u32 %v3243, 31
        %v3246 = vsub.s32 32, %v3245
        %v3247 = vshrl.u32 683565275, %v3246
        %v3248 = vshll.u32 683565275, %v3245
        %v3249 = vshrl.u32 2475754826, %v3246
        %v3250 = vor.u32 %v3248, %v3249
        %v3251 = vshll.u32 2475754826, %v3245
        %v3252 = vshrl.u32 2131351028, %v3246
        %v3253 = vor.u32 %v3251, %v3252
        %v3254 = vshll.u32 2131351028, %v3245
        %v3255 = vshrl.u32 2102212464, %v3246
        %v3256 = vor.u32 %v3254, %v3255
        %v3257 = vshll.u32 2102212464, %v3245
        %v3258 = vshrl.u32 920167782, %v3246
        %v3259 = vor.u32 %v3257, %v3258
        %v3260 = vshll.u32 920167782, %v3245
        %v3261 = vshrl.u32 1326507024, %v3246
        %v3262 = vor.u32 %v3260, %v3261
        %vm3263 = vcmp.lt.s32.totalorder %v3244, 1
        %vm3264 = vcmp.lt.s32.totalorder %v3244, 2
        %vm3265 = vcmp.lt.s32.totalorder %v3244, 3
        %vm3266 = vcmp.lt.s32.totalorder %v3244, 4
        %v3267 = vsel %vm3263, %v3247, %v3250
        %v3268 = vsel %vm3266, %v3256, 2102212464
        %v3269 = vsel %vm3265, %v3253, %v3268
        %v3270 = vsel %vm3264, %v3267, %v3269
        %v3271 = vsel %vm3263, %v3250, %v3253
        %v3272 = vsel %vm3266, %v3259, 920167782
        %v3273 = vsel %vm3265, %v3256, %v3272
        %v3274 = vsel %vm3264, %v3271, %v3273
        %v3275 = vsel %vm3263, %v3253, %v3256
        %v3276 = vsel %vm3266, %v3262, 1326507024
        %v3277 = vsel %vm3265, %v3259, %v3276
        %v3278 = vsel %vm3264, %v3275, %v3277
        %v3279 = vshll.u32 %v3239, 8
        %v3280 = vmul.u32.u64.compose %v3279, %v3278
        %v3281 = vextract.low.u32 %v3280
        %v3282 = vextract.high.u32 %v3280
        %v3283 = vmul.u32.u64.compose %v3279, %v3274
        %v3284 = vextract.low.u32 %v3283
        %v3285 = vextract.high.u32 %v3283
        %v3286 = vmul.u32 %v3279, %v3270
        %v3287 = vadd.s32 %v3282, %v3284
        %vm3288 = vc.u32 %v3282, %v3284
        %v3289 = vadd.s32 %v3285, 1
        %v3290 = vsel %vm3288, %v3289, %v3285
        %v3291 = vadd.s32 %v3286, %v3290
        %v3292 = vadd.s32 %v3291, 536870912
        %v3293 = vshrl.u32 %v3292, 30
        %v3294 = vshll.u32 %v3293, 30
        %v3295 = vsub.s32 %v3291, %v3294
        %vm3296 = vcmp.lt.s32.totalorder %v3295, 0
        %v3297 = vsub.s32 0, %v3295
        %v3298 = vsel %vm3296, %v3297, %v3295
        %v3299 = vclz %v3298
        %v3300 = vsub.s32 %v3299, 2
        %vm3301 = vcmp.gt.s32.totalorder 0, %v3300
        %v3302 = vsel %vm3301, 0, %v3300
        %v3303 = vsub.s32 32, %v3302
        %v3304 = vshll.u32 %v3295, %v3302
        %v3305 = vshrl.u32 %v3287, %v3303
        %v3306 = vor.u32 %v3304, %v3305
        %v3307 = vsub.s32 4294967266, %v3302
        %v3308 = vadd.s32 %v3307, 127
        %v3309 = vshll.u32 %v3308, 23
        %v3310 = vor.u32 4788187, %v3309
        %v3311 = vand.u32 2147483647, %v3310
        %v3313 = vcvt.s32.f32 %v3306
        %v3314 = vmul.f32 %v3313, %v3311
        %v3315 = vxor.u32 %v3314, 2147483648
        %v3316 = vsel %vm3233, %v3315, %v3314
        %v3317 = vsub.s32 4, %v3293
        %v3318 = vsel %vm3233, %v3317, %v3293
        %v3319 = vsel %vm3232, %v537, %v3316
        %v3320 = vsel %vm3232, 0, %v3318
        %v3321 = vcosq.f32.pop %v3319
        %v3322 = vsinq.f32.pop %v3319
        %vm3323 = vweird.f32 %v537
        %v3324 = vadd.s32 %v3320, 3
        %v3325 = vand.u32 %v3324, 3
        %vm3326 = vcmp.lt.s32.totalorder %v3325, 2
        %vm3327 = vcmp.eq.s32.totalorder %v3325, 0
        %v3328 = vxor.u32 %v3322, 2147483648
        %v3329 = vsel %vm3327, %v3321, %v3328
        %vm3330 = vcmp.eq.s32.totalorder %v3325, 2
        %v3331 = vxor.u32 %v3321, 2147483648
        %v3332 = vsel %vm3330, %v3331, %v3322
        %v3333 = vsel %vm3326, %v3329, %v3332
        %v3334 = vsel %vm3323, nan, %v3333
        %v3335 = vand.u32 2147483647, %v538
        %vm3336 = vcmp.le.f32.partialorder %v3335, 0.7853982
        %vm3337 = vcmp.lt.s32.totalorder %v538, 0
        %v3338 = vand.u32 %v538, 2139095040
        %v3339 = vshrl.u32 %v3338, 23
        %v3340 = vsub.s32 %v3339, 127
        %v3341 = vand.u32 2147483647, %v538
        %v3342 = vand.u32 %v3341, 8388607
        %v3343 = vor.u32 %v3342, 8388608
        %v3344 = vsub.s32 0, %v3343
        %v3345 = vadd.s32 %v3340, 1
        %vm3346 = vcmp.gt.s32.totalorder %v3345, 0
        %v3347 = vsel %vm3346, %v3345, 0
        %v3348 = vshrl.u32 %v3347, 5
        %v3349 = vand.u32 %v3347, 31
        %v3350 = vsub.s32 32, %v3349
        %v3351 = vshrl.u32 683565275, %v3350
        %v3352 = vshll.u32 683565275, %v3349
        %v3353 = vshrl.u32 2475754826, %v3350
        %v3354 = vor.u32 %v3352, %v3353
        %v3355 = vshll.u32 2475754826, %v3349
        %v3356 = vshrl.u32 2131351028, %v3350
        %v3357 = vor.u32 %v3355, %v3356
        %v3358 = vshll.u32 2131351028, %v3349
        %v3359 = vshrl.u32 2102212464, %v3350
        %v3360 = vor.u32 %v3358, %v3359
        %v3361 = vshll.u32 2102212464, %v3349
        %v3362 = vshrl.u32 920167782, %v3350
        %v3363 = vor.u32 %v3361, %v3362
        %v3364 = vshll.u32 920167782, %v3349
        %v3365 = vshrl.u32 1326507024, %v3350
        %v3366 = vor.u32 %v3364, %v3365
        %vm3367 = vcmp.lt.s32.totalorder %v3348, 1
        %vm3368 = vcmp.lt.s32.totalorder %v3348, 2
        %vm3369 = vcmp.lt.s32.totalorder %v3348, 3
        %vm3370 = vcmp.lt.s32.totalorder %v3348, 4
        %v3371 = vsel %vm3367, %v3351, %v3354
        %v3372 = vsel %vm3370, %v3360, 2102212464
        %v3373 = vsel %vm3369, %v3357, %v3372
        %v3374 = vsel %vm3368, %v3371, %v3373
        %v3375 = vsel %vm3367, %v3354, %v3357
        %v3376 = vsel %vm3370, %v3363, 920167782
        %v3377 = vsel %vm3369, %v3360, %v3376
        %v3378 = vsel %vm3368, %v3375, %v3377
        %v3379 = vsel %vm3367, %v3357, %v3360
        %v3380 = vsel %vm3370, %v3366, 1326507024
        %v3381 = vsel %vm3369, %v3363, %v3380
        %v3382 = vsel %vm3368, %v3379, %v3381
        %v3383 = vshll.u32 %v3343, 8
        %v3384 = vmul.u32.u64.compose %v3383, %v3382
        %v3385 = vextract.low.u32 %v3384
        %v3386 = vextract.high.u32 %v3384
        %v3387 = vmul.u32.u64.compose %v3383, %v3378
        %v3388 = vextract.low.u32 %v3387
        %v3389 = vextract.high.u32 %v3387
        %v3390 = vmul.u32 %v3383, %v3374
        %v3391 = vadd.s32 %v3386, %v3388
        %vm3392 = vc.u32 %v3386, %v3388
        %v3393 = vadd.s32 %v3389, 1
        %v3394 = vsel %vm3392, %v3393, %v3389
        %v3395 = vadd.s32 %v3390, %v3394
        %v3396 = vadd.s32 %v3395, 536870912
        %v3397 = vshrl.u32 %v3396, 30
        %v3398 = vshll.u32 %v3397, 30
        %v3399 = vsub.s32 %v3395, %v3398
        %vm3400 = vcmp.lt.s32.totalorder %v3399, 0
        %v3401 = vsub.s32 0, %v3399
        %v3402 = vsel %vm3400, %v3401, %v3399
        %v3403 = vclz %v3402
        %v3404 = vsub.s32 %v3403, 2
        %vm3405 = vcmp.gt.s32.totalorder 0, %v3404
        %v3406 = vsel %vm3405, 0, %v3404
        %v3407 = vsub.s32 32, %v3406
        %v3408 = vshll.u32 %v3399, %v3406
        %v3409 = vshrl.u32 %v3391, %v3407
        %v3410 = vor.u32 %v3408, %v3409
        %v3411 = vsub.s32 4294967266, %v3406
        %v3412 = vadd.s32 %v3411, 127
        %v3413 = vshll.u32 %v3412, 23
        %v3414 = vor.u32 4788187, %v3413
        %v3415 = vand.u32 2147483647, %v3414
        %v3417 = vcvt.s32.f32 %v3410
        %v3418 = vmul.f32 %v3417, %v3415
        %v3419 = vxor.u32 %v3418, 2147483648
        %v3420 = vsel %vm3337, %v3419, %v3418
        %v3421 = vsub.s32 4, %v3397
        %v3422 = vsel %vm3337, %v3421, %v3397
        %v3423 = vsel %vm3336, %v538, %v3420
        %v3424 = vsel %vm3336, 0, %v3422
        %v3425 = vcosq.f32.pop %v3423
        %v3426 = vsinq.f32.pop %v3423
        %vm3427 = vweird.f32 %v538
        %v3428 = vadd.s32 %v3424, 3
        %v3429 = vand.u32 %v3428, 3
        %vm3430 = vcmp.lt.s32.totalorder %v3429, 2
        %vm3431 = vcmp.eq.s32.totalorder %v3429, 0
        %v3432 = vxor.u32 %v3426, 2147483648
        %v3433 = vsel %vm3431, %v3425, %v3432
        %vm3434 = vcmp.eq.s32.totalorder %v3429, 2
        %v3435 = vxor.u32 %v3425, 2147483648
        %v3436 = vsel %vm3434, %v3435, %v3426
        %v3437 = vsel %vm3430, %v3433, %v3436
        %v3438 = vsel %vm3427, nan, %v3437
        %v3439 = vand.u32 2147483647, %v539
        %vm3440 = vcmp.le.f32.partialorder %v3439, 0.7853982
        %vm3441 = vcmp.lt.s32.totalorder %v539, 0
        %v3442 = vand.u32 %v539, 2139095040
        %v3443 = vshrl.u32 %v3442, 23
        %v3444 = vsub.s32 %v3443, 127
        %v3445 = vand.u32 2147483647, %v539
        %v3446 = vand.u32 %v3445, 8388607
        %v3447 = vor.u32 %v3446, 8388608
        %v3448 = vsub.s32 0, %v3447
        %v3449 = vadd.s32 %v3444, 1
        %vm3450 = vcmp.gt.s32.totalorder %v3449, 0
        %v3451 = vsel %vm3450, %v3449, 0
        %v3452 = vshrl.u32 %v3451, 5
        %v3453 = vand.u32 %v3451, 31
        %v3454 = vsub.s32 32, %v3453
        %v3455 = vshrl.u32 683565275, %v3454
        %v3456 = vshll.u32 683565275, %v3453
        %v3457 = vshrl.u32 2475754826, %v3454
        %v3458 = vor.u32 %v3456, %v3457
        %v3459 = vshll.u32 2475754826, %v3453
        %v3460 = vshrl.u32 2131351028, %v3454
        %v3461 = vor.u32 %v3459, %v3460
        %v3462 = vshll.u32 2131351028, %v3453
        %v3463 = vshrl.u32 2102212464, %v3454
        %v3464 = vor.u32 %v3462, %v3463
        %v3465 = vshll.u32 2102212464, %v3453
        %v3466 = vshrl.u32 920167782, %v3454
        %v3467 = vor.u32 %v3465, %v3466
        %v3468 = vshll.u32 920167782, %v3453
        %v3469 = vshrl.u32 1326507024, %v3454
        %v3470 = vor.u32 %v3468, %v3469
        %vm3471 = vcmp.lt.s32.totalorder %v3452, 1
        %vm3472 = vcmp.lt.s32.totalorder %v3452, 2
        %vm3473 = vcmp.lt.s32.totalorder %v3452, 3
        %vm3474 = vcmp.lt.s32.totalorder %v3452, 4
        %v3475 = vsel %vm3471, %v3455, %v3458
        %v3476 = vsel %vm3474, %v3464, 2102212464
        %v3477 = vsel %vm3473, %v3461, %v3476
        %v3478 = vsel %vm3472, %v3475, %v3477
        %v3479 = vsel %vm3471, %v3458, %v3461
        %v3480 = vsel %vm3474, %v3467, 920167782
        %v3481 = vsel %vm3473, %v3464, %v3480
        %v3482 = vsel %vm3472, %v3479, %v3481
        %v3483 = vsel %vm3471, %v3461, %v3464
        %v3484 = vsel %vm3474, %v3470, 1326507024
        %v3485 = vsel %vm3473, %v3467, %v3484
        %v3486 = vsel %vm3472, %v3483, %v3485
        %v3487 = vshll.u32 %v3447, 8
        %v3488 = vmul.u32.u64.compose %v3487, %v3486
        %v3489 = vextract.low.u32 %v3488
        %v3490 = vextract.high.u32 %v3488
        %v3491 = vmul.u32.u64.compose %v3487, %v3482
        %v3492 = vextract.low.u32 %v3491
        %v3493 = vextract.high.u32 %v3491
        %v3494 = vmul.u32 %v3487, %v3478
        %v3495 = vadd.s32 %v3490, %v3492
        %vm3496 = vc.u32 %v3490, %v3492
        %v3497 = vadd.s32 %v3493, 1
        %v3498 = vsel %vm3496, %v3497, %v3493
        %v3499 = vadd.s32 %v3494, %v3498
        %v3500 = vadd.s32 %v3499, 536870912
        %v3501 = vshrl.u32 %v3500, 30
        %v3502 = vshll.u32 %v3501, 30
        %v3503 = vsub.s32 %v3499, %v3502
        %vm3504 = vcmp.lt.s32.totalorder %v3503, 0
        %v3505 = vsub.s32 0, %v3503
        %v3506 = vsel %vm3504, %v3505, %v3503
        %v3507 = vclz %v3506
        %v3508 = vsub.s32 %v3507, 2
        %vm3509 = vcmp.gt.s32.totalorder 0, %v3508
        %v3510 = vsel %vm3509, 0, %v3508
        %v3511 = vsub.s32 32, %v3510
        %v3512 = vshll.u32 %v3503, %v3510
        %v3513 = vshrl.u32 %v3495, %v3511
        %v3514 = vor.u32 %v3512, %v3513
        %v3515 = vsub.s32 4294967266, %v3510
        %v3516 = vadd.s32 %v3515, 127
        %v3517 = vshll.u32 %v3516, 23
        %v3518 = vor.u32 4788187, %v3517
        %v3519 = vand.u32 2147483647, %v3518
        %v3521 = vcvt.s32.f32 %v3514
        %v3522 = vmul.f32 %v3521, %v3519
        %v3523 = vxor.u32 %v3522, 2147483648
        %v3524 = vsel %vm3441, %v3523, %v3522
        %v3525 = vsub.s32 4, %v3501
        %v3526 = vsel %vm3441, %v3525, %v3501
        %v3527 = vsel %vm3440, %v539, %v3524
        %v3528 = vsel %vm3440, 0, %v3526
        %v3529 = vcosq.f32.pop %v3527
        %v3530 = vsinq.f32.pop %v3527
        %vm3531 = vweird.f32 %v539
        %v3532 = vadd.s32 %v3528, 3
        %v3533 = vand.u32 %v3532, 3
        %vm3534 = vcmp.lt.s32.totalorder %v3533, 2
        %vm3535 = vcmp.eq.s32.totalorder %v3533, 0
        %v3536 = vxor.u32 %v3530, 2147483648
        %v3537 = vsel %vm3535, %v3529, %v3536
        %vm3538 = vcmp.eq.s32.totalorder %v3533, 2
        %v3539 = vxor.u32 %v3529, 2147483648
        %v3540 = vsel %vm3538, %v3539, %v3530
        %v3541 = vsel %vm3534, %v3537, %v3540
        %v3542 = vsel %vm3531, nan, %v3541
        %v3543 = vand.u32 2147483647, %v540
        %vm3544 = vcmp.le.f32.partialorder %v3543, 0.7853982
        %vm3545 = vcmp.lt.s32.totalorder %v540, 0
        %v3546 = vand.u32 %v540, 2139095040
        %v3547 = vshrl.u32 %v3546, 23
        %v3548 = vsub.s32 %v3547, 127
        %v3549 = vand.u32 2147483647, %v540
        %v3550 = vand.u32 %v3549, 8388607
        %v3551 = vor.u32 %v3550, 8388608
        %v3552 = vsub.s32 0, %v3551
        %v3553 = vadd.s32 %v3548, 1
        %vm3554 = vcmp.gt.s32.totalorder %v3553, 0
        %v3555 = vsel %vm3554, %v3553, 0
        %v3556 = vshrl.u32 %v3555, 5
        %v3557 = vand.u32 %v3555, 31
        %v3558 = vsub.s32 32, %v3557
        %v3559 = vshrl.u32 683565275, %v3558
        %v3560 = vshll.u32 683565275, %v3557
        %v3561 = vshrl.u32 2475754826, %v3558
        %v3562 = vor.u32 %v3560, %v3561
        %v3563 = vshll.u32 2475754826, %v3557
        %v3564 = vshrl.u32 2131351028, %v3558
        %v3565 = vor.u32 %v3563, %v3564
        %v3566 = vshll.u32 2131351028, %v3557
        %v3567 = vshrl.u32 2102212464, %v3558
        %v3568 = vor.u32 %v3566, %v3567
        %v3569 = vshll.u32 2102212464, %v3557
        %v3570 = vshrl.u32 920167782, %v3558
        %v3571 = vor.u32 %v3569, %v3570
        %v3572 = vshll.u32 920167782, %v3557
        %v3573 = vshrl.u32 1326507024, %v3558
        %v3574 = vor.u32 %v3572, %v3573
        %vm3575 = vcmp.lt.s32.totalorder %v3556, 1
        %vm3576 = vcmp.lt.s32.totalorder %v3556, 2
        %vm3577 = vcmp.lt.s32.totalorder %v3556, 3
        %vm3578 = vcmp.lt.s32.totalorder %v3556, 4
        %v3579 = vsel %vm3575, %v3559, %v3562
        %v3580 = vsel %vm3578, %v3568, 2102212464
        %v3581 = vsel %vm3577, %v3565, %v3580
        %v3582 = vsel %vm3576, %v3579, %v3581
        %v3583 = vsel %vm3575, %v3562, %v3565
        %v3584 = vsel %vm3578, %v3571, 920167782
        %v3585 = vsel %vm3577, %v3568, %v3584
        %v3586 = vsel %vm3576, %v3583, %v3585
        %v3587 = vsel %vm3575, %v3565, %v3568
        %v3588 = vsel %vm3578, %v3574, 1326507024
        %v3589 = vsel %vm3577, %v3571, %v3588
        %v3590 = vsel %vm3576, %v3587, %v3589
        %v3591 = vshll.u32 %v3551, 8
        %v3592 = vmul.u32.u64.compose %v3591, %v3590
        %v3593 = vextract.low.u32 %v3592
        %v3594 = vextract.high.u32 %v3592
        %v3595 = vmul.u32.u64.compose %v3591, %v3586
        %v3596 = vextract.low.u32 %v3595
        %v3597 = vextract.high.u32 %v3595
        %v3598 = vmul.u32 %v3591, %v3582
        %v3599 = vadd.s32 %v3594, %v3596
        %vm3600 = vc.u32 %v3594, %v3596
        %v3601 = vadd.s32 %v3597, 1
        %v3602 = vsel %vm3600, %v3601, %v3597
        %v3603 = vadd.s32 %v3598, %v3602
        %v3604 = vadd.s32 %v3603, 536870912
        %v3605 = vshrl.u32 %v3604, 30
        %v3606 = vshll.u32 %v3605, 30
        %v3607 = vsub.s32 %v3603, %v3606
        %vm3608 = vcmp.lt.s32.totalorder %v3607, 0
        %v3609 = vsub.s32 0, %v3607
        %v3610 = vsel %vm3608, %v3609, %v3607
        %v3611 = vclz %v3610
        %v3612 = vsub.s32 %v3611, 2
        %vm3613 = vcmp.gt.s32.totalorder 0, %v3612
        %v3614 = vsel %vm3613, 0, %v3612
        %v3615 = vsub.s32 32, %v3614
        %v3616 = vshll.u32 %v3607, %v3614
        %v3617 = vshrl.u32 %v3599, %v3615
        %v3618 = vor.u32 %v3616, %v3617
        %v3619 = vsub.s32 4294967266, %v3614
        %v3620 = vadd.s32 %v3619, 127
        %v3621 = vshll.u32 %v3620, 23
        %v3622 = vor.u32 4788187, %v3621
        %v3623 = vand.u32 2147483647, %v3622
        %v3625 = vcvt.s32.f32 %v3618
        %v3626 = vmul.f32 %v3625, %v3623
        %v3627 = vxor.u32 %v3626, 2147483648
        %v3628 = vsel %vm3545, %v3627, %v3626
        %v3629 = vsub.s32 4, %v3605
        %v3630 = vsel %vm3545, %v3629, %v3605
        %v3631 = vsel %vm3544, %v540, %v3628
        %v3632 = vsel %vm3544, 0, %v3630
        %v3633 = vcosq.f32.pop %v3631
        %v3634 = vsinq.f32.pop %v3631
        %vm3635 = vweird.f32 %v540
        %v3636 = vadd.s32 %v3632, 3
        %v3637 = vand.u32 %v3636, 3
        %vm3638 = vcmp.lt.s32.totalorder %v3637, 2
        %vm3639 = vcmp.eq.s32.totalorder %v3637, 0
        %v3640 = vxor.u32 %v3634, 2147483648
        %v3641 = vsel %vm3639, %v3633, %v3640
        %vm3642 = vcmp.eq.s32.totalorder %v3637, 2
        %v3643 = vxor.u32 %v3633, 2147483648
        %v3644 = vsel %vm3642, %v3643, %v3634
        %v3645 = vsel %vm3638, %v3641, %v3644
        %v3646 = vsel %vm3635, nan, %v3645
        %v3647 = vand.u32 2147483647, %v541
        %vm3648 = vcmp.le.f32.partialorder %v3647, 0.7853982
        %vm3649 = vcmp.lt.s32.totalorder %v541, 0
        %v3650 = vand.u32 %v541, 2139095040
        %v3651 = vshrl.u32 %v3650, 23
        %v3652 = vsub.s32 %v3651, 127
        %v3653 = vand.u32 2147483647, %v541
        %v3654 = vand.u32 %v3653, 8388607
        %v3655 = vor.u32 %v3654, 8388608
        %v3656 = vsub.s32 0, %v3655
        %v3657 = vadd.s32 %v3652, 1
        %vm3658 = vcmp.gt.s32.totalorder %v3657, 0
        %v3659 = vsel %vm3658, %v3657, 0
        %v3660 = vshrl.u32 %v3659, 5
        %v3661 = vand.u32 %v3659, 31
        %v3662 = vsub.s32 32, %v3661
        %v3663 = vshrl.u32 683565275, %v3662
        %v3664 = vshll.u32 683565275, %v3661
        %v3665 = vshrl.u32 2475754826, %v3662
        %v3666 = vor.u32 %v3664, %v3665
        %v3667 = vshll.u32 2475754826, %v3661
        %v3668 = vshrl.u32 2131351028, %v3662
        %v3669 = vor.u32 %v3667, %v3668
        %v3670 = vshll.u32 2131351028, %v3661
        %v3671 = vshrl.u32 2102212464, %v3662
        %v3672 = vor.u32 %v3670, %v3671
        %v3673 = vshll.u32 2102212464, %v3661
        %v3674 = vshrl.u32 920167782, %v3662
        %v3675 = vor.u32 %v3673, %v3674
        %v3676 = vshll.u32 920167782, %v3661
        %v3677 = vshrl.u32 1326507024, %v3662
        %v3678 = vor.u32 %v3676, %v3677
        %vm3679 = vcmp.lt.s32.totalorder %v3660, 1
        %vm3680 = vcmp.lt.s32.totalorder %v3660, 2
        %vm3681 = vcmp.lt.s32.totalorder %v3660, 3
        %vm3682 = vcmp.lt.s32.totalorder %v3660, 4
        %v3683 = vsel %vm3679, %v3663, %v3666
        %v3684 = vsel %vm3682, %v3672, 2102212464
        %v3685 = vsel %vm3681, %v3669, %v3684
        %v3686 = vsel %vm3680, %v3683, %v3685
        %v3687 = vsel %vm3679, %v3666, %v3669
        %v3688 = vsel %vm3682, %v3675, 920167782
        %v3689 = vsel %vm3681, %v3672, %v3688
        %v3690 = vsel %vm3680, %v3687, %v3689
        %v3691 = vsel %vm3679, %v3669, %v3672
        %v3692 = vsel %vm3682, %v3678, 1326507024
        %v3693 = vsel %vm3681, %v3675, %v3692
        %v3694 = vsel %vm3680, %v3691, %v3693
        %v3695 = vshll.u32 %v3655, 8
        %v3696 = vmul.u32.u64.compose %v3695, %v3694
        %v3697 = vextract.low.u32 %v3696
        %v3698 = vextract.high.u32 %v3696
        %v3699 = vmul.u32.u64.compose %v3695, %v3690
        %v3700 = vextract.low.u32 %v3699
        %v3701 = vextract.high.u32 %v3699
        %v3702 = vmul.u32 %v3695, %v3686
        %v3703 = vadd.s32 %v3698, %v3700
        %vm3704 = vc.u32 %v3698, %v3700
        %v3705 = vadd.s32 %v3701, 1
        %v3706 = vsel %vm3704, %v3705, %v3701
        %v3707 = vadd.s32 %v3702, %v3706
        %v3708 = vadd.s32 %v3707, 536870912
        %v3709 = vshrl.u32 %v3708, 30
        %v3710 = vshll.u32 %v3709, 30
        %v3711 = vsub.s32 %v3707, %v3710
        %vm3712 = vcmp.lt.s32.totalorder %v3711, 0
        %v3713 = vsub.s32 0, %v3711
        %v3714 = vsel %vm3712, %v3713, %v3711
        %v3715 = vclz %v3714
        %v3716 = vsub.s32 %v3715, 2
        %vm3717 = vcmp.gt.s32.totalorder 0, %v3716
        %v3718 = vsel %vm3717, 0, %v3716
        %v3719 = vsub.s32 32, %v3718
        %v3720 = vshll.u32 %v3711, %v3718
        %v3721 = vshrl.u32 %v3703, %v3719
        %v3722 = vor.u32 %v3720, %v3721
        %v3723 = vsub.s32 4294967266, %v3718
        %v3724 = vadd.s32 %v3723, 127
        %v3725 = vshll.u32 %v3724, 23
        %v3726 = vor.u32 4788187, %v3725
        %v3727 = vand.u32 2147483647, %v3726
        %v3729 = vcvt.s32.f32 %v3722
        %v3730 = vmul.f32 %v3729, %v3727
        %v3731 = vxor.u32 %v3730, 2147483648
        %v3732 = vsel %vm3649, %v3731, %v3730
        %v3733 = vsub.s32 4, %v3709
        %v3734 = vsel %vm3649, %v3733, %v3709
        %v3735 = vsel %vm3648, %v541, %v3732
        %v3736 = vsel %vm3648, 0, %v3734
        %v3737 = vcosq.f32.pop %v3735
        %v3738 = vsinq.f32.pop %v3735
        %vm3739 = vweird.f32 %v541
        %v3740 = vadd.s32 %v3736, 3
        %v3741 = vand.u32 %v3740, 3
        %vm3742 = vcmp.lt.s32.totalorder %v3741, 2
        %vm3743 = vcmp.eq.s32.totalorder %v3741, 0
        %v3744 = vxor.u32 %v3738, 2147483648
        %v3745 = vsel %vm3743, %v3737, %v3744
        %vm3746 = vcmp.eq.s32.totalorder %v3741, 2
        %v3747 = vxor.u32 %v3737, 2147483648
        %v3748 = vsel %vm3746, %v3747, %v3738
        %v3749 = vsel %vm3742, %v3745, %v3748
        %v3750 = vsel %vm3739, nan, %v3749
        %v3751 = vand.u32 2147483647, %v542
        %vm3752 = vcmp.le.f32.partialorder %v3751, 0.7853982
        %vm3753 = vcmp.lt.s32.totalorder %v542, 0
        %v3754 = vand.u32 %v542, 2139095040
        %v3755 = vshrl.u32 %v3754, 23
        %v3756 = vsub.s32 %v3755, 127
        %v3757 = vand.u32 2147483647, %v542
        %v3758 = vand.u32 %v3757, 8388607
        %v3759 = vor.u32 %v3758, 8388608
        %v3760 = vsub.s32 0, %v3759
        %v3761 = vadd.s32 %v3756, 1
        %vm3762 = vcmp.gt.s32.totalorder %v3761, 0
        %v3763 = vsel %vm3762, %v3761, 0
        %v3764 = vshrl.u32 %v3763, 5
        %v3765 = vand.u32 %v3763, 31
        %v3766 = vsub.s32 32, %v3765
        %v3767 = vshrl.u32 683565275, %v3766
        %v3768 = vshll.u32 683565275, %v3765
        %v3769 = vshrl.u32 2475754826, %v3766
        %v3770 = vor.u32 %v3768, %v3769
        %v3771 = vshll.u32 2475754826, %v3765
        %v3772 = vshrl.u32 2131351028, %v3766
        %v3773 = vor.u32 %v3771, %v3772
        %v3774 = vshll.u32 2131351028, %v3765
        %v3775 = vshrl.u32 2102212464, %v3766
        %v3776 = vor.u32 %v3774, %v3775
        %v3777 = vshll.u32 2102212464, %v3765
        %v3778 = vshrl.u32 920167782, %v3766
        %v3779 = vor.u32 %v3777, %v3778
        %v3780 = vshll.u32 920167782, %v3765
        %v3781 = vshrl.u32 1326507024, %v3766
        %v3782 = vor.u32 %v3780, %v3781
        %vm3783 = vcmp.lt.s32.totalorder %v3764, 1
        %vm3784 = vcmp.lt.s32.totalorder %v3764, 2
        %vm3785 = vcmp.lt.s32.totalorder %v3764, 3
        %vm3786 = vcmp.lt.s32.totalorder %v3764, 4
        %v3787 = vsel %vm3783, %v3767, %v3770
        %v3788 = vsel %vm3786, %v3776, 2102212464
        %v3789 = vsel %vm3785, %v3773, %v3788
        %v3790 = vsel %vm3784, %v3787, %v3789
        %v3791 = vsel %vm3783, %v3770, %v3773
        %v3792 = vsel %vm3786, %v3779, 920167782
        %v3793 = vsel %vm3785, %v3776, %v3792
        %v3794 = vsel %vm3784, %v3791, %v3793
        %v3795 = vsel %vm3783, %v3773, %v3776
        %v3796 = vsel %vm3786, %v3782, 1326507024
        %v3797 = vsel %vm3785, %v3779, %v3796
        %v3798 = vsel %vm3784, %v3795, %v3797
        %v3799 = vshll.u32 %v3759, 8
        %v3800 = vmul.u32.u64.compose %v3799, %v3798
        %v3801 = vextract.low.u32 %v3800
        %v3802 = vextract.high.u32 %v3800
        %v3803 = vmul.u32.u64.compose %v3799, %v3794
        %v3804 = vextract.low.u32 %v3803
        %v3805 = vextract.high.u32 %v3803
        %v3806 = vmul.u32 %v3799, %v3790
        %v3807 = vadd.s32 %v3802, %v3804
        %vm3808 = vc.u32 %v3802, %v3804
        %v3809 = vadd.s32 %v3805, 1
        %v3810 = vsel %vm3808, %v3809, %v3805
        %v3811 = vadd.s32 %v3806, %v3810
        %v3812 = vadd.s32 %v3811, 536870912
        %v3813 = vshrl.u32 %v3812, 30
        %v3814 = vshll.u32 %v3813, 30
        %v3815 = vsub.s32 %v3811, %v3814
        %vm3816 = vcmp.lt.s32.totalorder %v3815, 0
        %v3817 = vsub.s32 0, %v3815
        %v3818 = vsel %vm3816, %v3817, %v3815
        %v3819 = vclz %v3818
        %v3820 = vsub.s32 %v3819, 2
        %vm3821 = vcmp.gt.s32.totalorder 0, %v3820
        %v3822 = vsel %vm3821, 0, %v3820
        %v3823 = vsub.s32 32, %v3822
        %v3824 = vshll.u32 %v3815, %v3822
        %v3825 = vshrl.u32 %v3807, %v3823
        %v3826 = vor.u32 %v3824, %v3825
        %v3827 = vsub.s32 4294967266, %v3822
        %v3828 = vadd.s32 %v3827, 127
        %v3829 = vshll.u32 %v3828, 23
        %v3830 = vor.u32 4788187, %v3829
        %v3831 = vand.u32 2147483647, %v3830
        %v3833 = vcvt.s32.f32 %v3826
        %v3834 = vmul.f32 %v3833, %v3831
        %v3835 = vxor.u32 %v3834, 2147483648
        %v3836 = vsel %vm3753, %v3835, %v3834
        %v3837 = vsub.s32 4, %v3813
        %v3838 = vsel %vm3753, %v3837, %v3813
        %v3839 = vsel %vm3752, %v542, %v3836
        %v3840 = vsel %vm3752, 0, %v3838
        %v3841 = vcosq.f32.pop %v3839
        %v3842 = vsinq.f32.pop %v3839
        %vm3843 = vweird.f32 %v542
        %v3844 = vadd.s32 %v3840, 3
        %v3845 = vand.u32 %v3844, 3
        %vm3846 = vcmp.lt.s32.totalorder %v3845, 2
        %vm3847 = vcmp.eq.s32.totalorder %v3845, 0
        %v3848 = vxor.u32 %v3842, 2147483648
        %v3849 = vsel %vm3847, %v3841, %v3848
        %vm3850 = vcmp.eq.s32.totalorder %v3845, 2
        %v3851 = vxor.u32 %v3841, 2147483648
        %v3852 = vsel %vm3850, %v3851, %v3842
        %v3853 = vsel %vm3846, %v3849, %v3852
        %v3854 = vsel %vm3843, nan, %v3853
        %v3855 = vld [vmem:[%s420] sm:$0xff]
        %v3856 = vld [vmem:[%s420 + $0x8] sm:$0xff]
        %v3857 = vld [vmem:[%s420 + $0x10] sm:$0xff]
        %v3858 = vld [vmem:[%s420 + $0x18] sm:$0xff]
        %v3859 = vld [vmem:[%s420 + $0x20] sm:$0xff]
        %v3860 = vld [vmem:[%s420 + $0x28] sm:$0xff]
        %v3861 = vld [vmem:[%s420 + $0x30] sm:$0xff]
        %v3862 = vld [vmem:[%s420 + $0x38] sm:$0xff]
        %v3863 = vld [vmem:[%s420 + $0x40] sm:$0xff]
        %v3864 = vld [vmem:[%s420 + $0x48] sm:$0xff]
        %v3865 = vld [vmem:[%s420 + $0x50] sm:$0xff]
        %v3866 = vld [vmem:[%s420 + $0x58] sm:$0xff]
        %v3867 = vld [vmem:[%s420 + $0x60] sm:$0xff]
        %v3868 = vld [vmem:[%s420 + $0x68] sm:$0xff]
        %v3869 = vld [vmem:[%s420 + $0x70] sm:$0xff]
        %v3870 = vld [vmem:[%s420 + $0x78] sm:$0xff]
        %v3871 = vpack.c.bf16 %v3856, %v3855
        %v3872 = vpack.c.bf16 %v3858, %v3857
        %v3873 = vpack.c.bf16 %v3860, %v3859
        %v3874 = vpack.c.bf16 %v3862, %v3861
        %v3875 = vpack.c.bf16 %v3864, %v3863
        %v3876 = vpack.c.bf16 %v3866, %v3865
        %v3877 = vpack.c.bf16 %v3868, %v3867
        %v3878 = vpack.c.bf16 %v3870, %v3869
        %v3879 = vld [vmem:[%s3] sm:$0xf]
        %v3880 = vld [vmem:[%s3 + $0x4] sm:$0xf]
        %v3881 = vld [vmem:[%s3 + $0x8] sm:$0xf]
        %v3882 = vld [vmem:[%s3 + $0xc] sm:$0xf]
        %v3883 = vld [vmem:[%s3 + $0x10] sm:$0xf]
        %v3884 = vld [vmem:[%s3 + $0x14] sm:$0xf]
        %v3885 = vld [vmem:[%s3 + $0x18] sm:$0xf]
        %v3886 = vld [vmem:[%s3 + $0x1c] sm:$0xf]
        %v3887 = vld [vmem:[%s3 + $0x20] sm:$0xf]
        %v3888 = vld [vmem:[%s3 + $0x24] sm:$0xf]
        %v3889 = vld [vmem:[%s3 + $0x28] sm:$0xf]
        %v3890 = vld [vmem:[%s3 + $0x2c] sm:$0xf]
        %v3891 = vld [vmem:[%s3 + $0x30] sm:$0xf]
        %v3892 = vld [vmem:[%s3 + $0x34] sm:$0xf]
        %v3893 = vld [vmem:[%s3 + $0x38] sm:$0xf]
        %v3894 = vld [vmem:[%s3 + $0x3c] sm:$0xf]
        %v3895 = vld [vmem:[%s363] sm:$0xff]
        %v3896 = vld [vmem:[%s363 + $0x8] sm:$0xff]
        %v3897 = vld [vmem:[%s363 + $0x10] sm:$0xff]
        %v3898 = vld [vmem:[%s363 + $0x18] sm:$0xff]
        %v3899 = vld [vmem:[%s363 + $0x20] sm:$0xff]
        %v3900 = vld [vmem:[%s363 + $0x28] sm:$0xff]
        %v3901 = vld [vmem:[%s363 + $0x30] sm:$0xff]
        %v3902 = vld [vmem:[%s363 + $0x38] sm:$0xff]
        %v3903 = vld [vmem:[%s363 + $0x40] sm:$0xff]
        %v3904 = vld [vmem:[%s363 + $0x48] sm:$0xff]
        %v3905 = vld [vmem:[%s363 + $0x50] sm:$0xff]
        %v3906 = vld [vmem:[%s363 + $0x58] sm:$0xff]
        %v3907 = vld [vmem:[%s363 + $0x60] sm:$0xff]
        %v3908 = vld [vmem:[%s363 + $0x68] sm:$0xff]
        %v3909 = vld [vmem:[%s363 + $0x70] sm:$0xff]
        %v3910 = vld [vmem:[%s363 + $0x78] sm:$0xff]
        %v3911 = vpack.c.bf16 %v3896, %v3895
        %v3912 = vpack.c.bf16 %v3898, %v3897
        %v3913 = vpack.c.bf16 %v3900, %v3899
        %v3914 = vpack.c.bf16 %v3902, %v3901
        %v3915 = vpack.c.bf16 %v3904, %v3903
        %v3916 = vpack.c.bf16 %v3906, %v3905
        %v3917 = vpack.c.bf16 %v3908, %v3907
        %v3918 = vpack.c.bf16 %v3910, %v3909
        %v3919 = vld [vmem:[%s4] sm:$0xf]
        %v3920 = vld [vmem:[%s4 + $0x4] sm:$0xf]
        %v3921 = vld [vmem:[%s4 + $0x8] sm:$0xf]
        %v3922 = vld [vmem:[%s4 + $0xc] sm:$0xf]
        %v3923 = vld [vmem:[%s4 + $0x10] sm:$0xf]
        %v3924 = vld [vmem:[%s4 + $0x14] sm:$0xf]
        %v3925 = vld [vmem:[%s4 + $0x18] sm:$0xf]
        %v3926 = vld [vmem:[%s4 + $0x1c] sm:$0xf]
        %v3927 = vld [vmem:[%s4 + $0x20] sm:$0xf]
        %v3928 = vld [vmem:[%s4 + $0x24] sm:$0xf]
        %v3929 = vld [vmem:[%s4 + $0x28] sm:$0xf]
        %v3930 = vld [vmem:[%s4 + $0x2c] sm:$0xf]
        %v3931 = vld [vmem:[%s4 + $0x30] sm:$0xf]
        %v3932 = vld [vmem:[%s4 + $0x34] sm:$0xf]
        %v3933 = vld [vmem:[%s4 + $0x38] sm:$0xf]
        %v3934 = vld [vmem:[%s4 + $0x3c] sm:$0xf]
        %v3951 = vunpack.c.l.b16 %v3919
        %v3952 = vunpack.c.l.b16 %v3920
        %v3953 = vunpack.c.l.b16 %v3921
        %v3954 = vunpack.c.l.b16 %v3922
        %v3955 = vunpack.c.l.b16 %v3923
        %v3956 = vunpack.c.l.b16 %v3924
        %v3957 = vunpack.c.l.b16 %v3925
        %v3958 = vunpack.c.l.b16 %v3926
        %v3959 = vunpack.c.l.b16 %v3927
        %v3960 = vunpack.c.l.b16 %v3928
        %v3961 = vunpack.c.l.b16 %v3929
        %v3962 = vunpack.c.l.b16 %v3930
        %v3963 = vunpack.c.l.b16 %v3931
        %v3964 = vunpack.c.l.b16 %v3932
        %v3965 = vunpack.c.l.b16 %v3933
        %v3966 = vunpack.c.l.b16 %v3934
        %v3967 = vpack.c.b16 %v3952, %v3951
        %v3968 = vpack.c.b16 %v3954, %v3953
        %v3969 = vpack.c.b16 %v3956, %v3955
        %v3970 = vpack.c.b16 %v3958, %v3957
        %v3971 = vpack.c.b16 %v3960, %v3959
        %v3972 = vpack.c.b16 %v3962, %v3961
        %v3973 = vpack.c.b16 %v3964, %v3963
        %v3974 = vpack.c.b16 %v3966, %v3965
        %3983 = vmatprep.subr.bf16.mxu0 0
        %3984 = vmatpush1.bf16.msra.mxu0 %v3967
        %3985 = vmatprep.subr.bf16.mxu0 0
        %3986 = vmatpush1.bf16.msra.mxu0 %v3968
        %3987 = vmatprep.subr.bf16.mxu0 0
        %3988 = vmatpush1.bf16.msra.mxu0 %v3969
        %3989 = vmatprep.subr.bf16.mxu0 0
        %3990 = vmatpush1.bf16.msra.mxu0 %v3970
        %3991 = vmatprep.subr.bf16.mxu0 0
        %3992 = vmatpush1.bf16.msra.mxu0 %v3971
        %3993 = vmatprep.subr.bf16.mxu0 0
        %3994 = vmatpush1.bf16.msra.mxu0 %v3972
        %3995 = vmatprep.subr.bf16.mxu0 0
        %3996 = vmatpush1.bf16.msra.mxu0 %v3973
        %3997 = vmatprep.subr.bf16.mxu0 0
        %3998 = vmatpush1.bf16.msra.mxu0 %v3974
        %3999 = vmatprep.subr.bf16.mxu0 0
        %4000 = vmatpush1.bf16.msra.mxu0 0
        %4001 = vmatprep.subr.bf16.mxu0 0
        %4002 = vmatpush1.bf16.msra.mxu0 0
        %4003 = vmatprep.subr.bf16.mxu0 0
        %4004 = vmatpush1.bf16.msra.mxu0 0
        %4005 = vmatprep.subr.bf16.mxu0 0
        %4006 = vmatpush1.bf16.msra.mxu0 0
        %4007 = vmatprep.subr.bf16.mxu0 0
        %4008 = vmatpush1.bf16.msra.mxu0 0
        %4009 = vmatprep.subr.bf16.mxu0 0
        %4010 = vmatpush1.bf16.msra.mxu0 0
        %4011 = vmatprep.subr.bf16.mxu0 0
        %4012 = vmatpush1.bf16.msra.mxu0 0
        %4013 = vmatprep.subr.bf16.mxu0 0
        %4014 = vmatpush1.bf16.msra.mxu0 0
        %4015 = vmatprep.mubr.bf16.mxu0 0
        %4016 = vmatmul.mubr.bf16.gmra.mrb[0].mxu0 %v3911
        %v4017 = vpop.f32.mrb[0].mxu0
        %v4018 = vadd.f32 0.0, %v4017
        %v4019 = vpop.f32.mrb[0].mxu0
        %v4020 = vpop.f32.mrb[0].mxu0
        %v4021 = vadd.f32 0.0, %v4020
        %v4022 = vpop.f32.mrb[0].mxu0
        %4023 = vmatprep.mubr.bf16.mxu0 0
        %4024 = vmatmul.mubr.bf16.gmra.mrb[0].mxu0 %v3912
        %v4025 = vpop.f32.mrb[0].mxu0
        %v4026 = vadd.f32 0.0, %v4025
        %v4027 = vpop.f32.mrb[0].mxu0
        %v4028 = vpop.f32.mrb[0].mxu0
        %v4029 = vadd.f32 0.0, %v4028
        %v4030 = vpop.f32.mrb[0].mxu0
        %4031 = vmatprep.mubr.bf16.mxu0 0
        %4032 = vmatmul.mubr.bf16.gmra.mrb[0].mxu0 %v3913
        %v4033 = vpop.f32.mrb[0].mxu0
        %v4034 = vadd.f32 0.0, %v4033
        %v4035 = vpop.f32.mrb[0].mxu0
        %v4036 = vpop.f32.mrb[0].mxu0
        %v4037 = vadd.f32 0.0, %v4036
        %v4038 = vpop.f32.mrb[0].mxu0
        %4039 = vmatprep.mubr.bf16.mxu0 0
        %4040 = vmatmul.mubr.bf16.gmra.mrb[0].mxu0 %v3914
        %v4041 = vpop.f32.mrb[0].mxu0
        %v4042 = vadd.f32 0.0, %v4041
        %v4043 = vpop.f32.mrb[0].mxu0
        %v4044 = vpop.f32.mrb[0].mxu0
        %v4045 = vadd.f32 0.0, %v4044
        %v4046 = vpop.f32.mrb[0].mxu0
        %4047 = vmatprep.mubr.bf16.mxu0 0
        %4048 = vmatmul.mubr.bf16.gmra.mrb[0].mxu0 %v3915
        %v4049 = vpop.f32.mrb[0].mxu0
        %v4050 = vadd.f32 0.0, %v4049
        %v4051 = vpop.f32.mrb[0].mxu0
        %v4052 = vpop.f32.mrb[0].mxu0
        %v4053 = vadd.f32 0.0, %v4052
        %v4054 = vpop.f32.mrb[0].mxu0
        %4055 = vmatprep.mubr.bf16.mxu0 0
        %4056 = vmatmul.mubr.bf16.gmra.mrb[0].mxu0 %v3916
        %v4057 = vpop.f32.mrb[0].mxu0
        %v4058 = vadd.f32 0.0, %v4057
        %v4059 = vpop.f32.mrb[0].mxu0
        %v4060 = vpop.f32.mrb[0].mxu0
        %v4061 = vadd.f32 0.0, %v4060
        %v4062 = vpop.f32.mrb[0].mxu0
        %4063 = vmatprep.mubr.bf16.mxu0 0
        %4064 = vmatmul.mubr.bf16.gmra.mrb[0].mxu0 %v3917
        %v4065 = vpop.f32.mrb[0].mxu0
        %v4066 = vadd.f32 0.0, %v4065
        %v4067 = vpop.f32.mrb[0].mxu0
        %v4068 = vpop.f32.mrb[0].mxu0
        %v4069 = vadd.f32 0.0, %v4068
        %v4070 = vpop.f32.mrb[0].mxu0
        %4071 = vmatprep.mubr.bf16.mxu0 0
        %4072 = vmatmul.mubr.bf16.gmra.mrb[0].mxu0 %v3918
        %v4073 = vpop.f32.mrb[0].mxu0
        %v4074 = vadd.f32 0.0, %v4073
        %v4075 = vpop.f32.mrb[0].mxu0
        %v4076 = vpop.f32.mrb[0].mxu0
        %v4077 = vadd.f32 0.0, %v4076
        %v4078 = vpop.f32.mrb[0].mxu0
        %4079 = vdwg.mxu0
        %v4096 = vunpack.c.l.b16 %v3879
        %v4097 = vunpack.c.l.b16 %v3880
        %v4098 = vunpack.c.l.b16 %v3881
        %v4099 = vunpack.c.l.b16 %v3882
        %v4100 = vunpack.c.l.b16 %v3883
        %v4101 = vunpack.c.l.b16 %v3884
        %v4102 = vunpack.c.l.b16 %v3885
        %v4103 = vunpack.c.l.b16 %v3886
        %v4104 = vunpack.c.l.b16 %v3887
        %v4105 = vunpack.c.l.b16 %v3888
        %v4106 = vunpack.c.l.b16 %v3889
        %v4107 = vunpack.c.l.b16 %v3890
        %v4108 = vunpack.c.l.b16 %v3891
        %v4109 = vunpack.c.l.b16 %v3892
        %v4110 = vunpack.c.l.b16 %v3893
        %v4111 = vunpack.c.l.b16 %v3894
        %v4112 = vpack.c.b16 %v4097, %v4096
        %v4113 = vpack.c.b16 %v4099, %v4098
        %v4114 = vpack.c.b16 %v4101, %v4100
        %v4115 = vpack.c.b16 %v4103, %v4102
        %v4116 = vpack.c.b16 %v4105, %v4104
        %v4117 = vpack.c.b16 %v4107, %v4106
        %v4118 = vpack.c.b16 %v4109, %v4108
        %v4119 = vpack.c.b16 %v4111, %v4110
        %4128 = vmatprep.subr.bf16.mxu0 0
        %4129 = vmatpush1.bf16.msra.mxu0 %v4112
        %4130 = vmatprep.subr.bf16.mxu0 0
        %4131 = vmatpush1.bf16.msra.mxu0 %v4113
        %4132 = vmatprep.subr.bf16.mxu0 0
        %4133 = vmatpush1.bf16.msra.mxu0 %v4114
        %4134 = vmatprep.subr.bf16.mxu0 0
        %4135 = vmatpush1.bf16.msra.mxu0 %v4115
        %4136 = vmatprep.subr.bf16.mxu0 0
        %4137 = vmatpush1.bf16.msra.mxu0 %v4116
        %4138 = vmatprep.subr.bf16.mxu0 0
        %4139 = vmatpush1.bf16.msra.mxu0 %v4117
        %4140 = vmatprep.subr.bf16.mxu0 0
        %4141 = vmatpush1.bf16.msra.mxu0 %v4118
        %4142 = vmatprep.subr.bf16.mxu0 0
        %4143 = vmatpush1.bf16.msra.mxu0 %v4119
        %4144 = vmatprep.subr.bf16.mxu0 0
        %4145 = vmatpush1.bf16.msra.mxu0 0
        %4146 = vmatprep.subr.bf16.mxu0 0
        %4147 = vmatpush1.bf16.msra.mxu0 0
        %4148 = vmatprep.subr.bf16.mxu0 0
        %4149 = vmatpush1.bf16.msra.mxu0 0
        %4150 = vmatprep.subr.bf16.mxu0 0
        %4151 = vmatpush1.bf16.msra.mxu0 0
        %4152 = vmatprep.subr.bf16.mxu0 0
        %4153 = vmatpush1.bf16.msra.mxu0 0
        %4154 = vmatprep.subr.bf16.mxu0 0
        %4155 = vmatpush1.bf16.msra.mxu0 0
        %4156 = vmatprep.subr.bf16.mxu0 0
        %4157 = vmatpush1.bf16.msra.mxu0 0
        %4158 = vmatprep.subr.bf16.mxu0 0
        %4159 = vmatpush1.bf16.msra.mxu0 0
        %4160 = vmatprep.mubr.bf16.mxu0 0
        %4161 = vmatmul.mubr.bf16.gmra.mrb[0].mxu0 %v3871
        %v4162 = vpop.f32.mrb[0].mxu0
        %v4163 = vadd.f32 %v4018, %v4162
        %v4164 = vpop.f32.mrb[0].mxu0
        %v4165 = vpop.f32.mrb[0].mxu0
        %v4166 = vadd.f32 %v4021, %v4165
        %v4167 = vpop.f32.mrb[0].mxu0
        %4168 = vmatprep.mubr.bf16.mxu0 0
        %4169 = vmatmul.mubr.bf16.gmra.mrb[0].mxu0 %v3872
        %v4170 = vpop.f32.mrb[0].mxu0
        %v4171 = vadd.f32 %v4026, %v4170
        %v4172 = vpop.f32.mrb[0].mxu0
        %v4173 = vpop.f32.mrb[0].mxu0
        %v4174 = vadd.f32 %v4029, %v4173
        %v4175 = vpop.f32.mrb[0].mxu0
        %4176 = vmatprep.mubr.bf16.mxu0 0
        %4177 = vmatmul.mubr.bf16.gmra.mrb[0].mxu0 %v3873
        %v4178 = vpop.f32.mrb[0].mxu0
        %v4179 = vadd.f32 %v4034, %v4178
        %v4180 = vpop.f32.mrb[0].mxu0
        %v4181 = vpop.f32.mrb[0].mxu0
        %v4182 = vadd.f32 %v4037, %v4181
        %v4183 = vpop.f32.mrb[0].mxu0
        %4184 = vmatprep.mubr.bf16.mxu0 0
        %4185 = vmatmul.mubr.bf16.gmra.mrb[0].mxu0 %v3874
        %v4186 = vpop.f32.mrb[0].mxu0
        %v4187 = vadd.f32 %v4042, %v4186
        %v4188 = vpop.f32.mrb[0].mxu0
        %v4189 = vpop.f32.mrb[0].mxu0
        %v4190 = vadd.f32 %v4045, %v4189
        %v4191 = vpop.f32.mrb[0].mxu0
        %4192 = vmatprep.mubr.bf16.mxu0 0
        %4193 = vmatmul.mubr.bf16.gmra.mrb[0].mxu0 %v3875
        %v4194 = vpop.f32.mrb[0].mxu0
        %v4195 = vadd.f32 %v4050, %v4194
        %v4196 = vpop.f32.mrb[0].mxu0
        %v4197 = vpop.f32.mrb[0].mxu0
        %v4198 = vadd.f32 %v4053, %v4197
        %v4199 = vpop.f32.mrb[0].mxu0
        %4200 = vmatprep.mubr.bf16.mxu0 0
        %4201 = vmatmul.mubr.bf16.gmra.mrb[0].mxu0 %v3876
        %v4202 = vpop.f32.mrb[0].mxu0
        %v4203 = vadd.f32 %v4058, %v4202
        %v4204 = vpop.f32.mrb[0].mxu0
        %v4205 = vpop.f32.mrb[0].mxu0
        %v4206 = vadd.f32 %v4061, %v4205
        %v4207 = vpop.f32.mrb[0].mxu0
        %4208 = vmatprep.mubr.bf16.mxu0 0
        %4209 = vmatmul.mubr.bf16.gmra.mrb[0].mxu0 %v3877
        %v4210 = vpop.f32.mrb[0].mxu0
        %v4211 = vadd.f32 %v4066, %v4210
        %v4212 = vpop.f32.mrb[0].mxu0
        %v4213 = vpop.f32.mrb[0].mxu0
        %v4214 = vadd.f32 %v4069, %v4213
        %v4215 = vpop.f32.mrb[0].mxu0
        %4216 = vmatprep.mubr.bf16.mxu0 0
        %4217 = vmatmul.mubr.bf16.gmra.mrb[0].mxu0 %v3878
        %v4218 = vpop.f32.mrb[0].mxu0
        %v4219 = vadd.f32 %v4074, %v4218
        %v4220 = vpop.f32.mrb[0].mxu0
        %v4221 = vpop.f32.mrb[0].mxu0
        %v4222 = vadd.f32 %v4077, %v4221
        %v4223 = vpop.f32.mrb[0].mxu0
        %4224 = vdwg.mxu0
        %v4225 = vld [vmem:[%s5] sm:$0xff]
        %vm4226 = vcmask 64512
        %v4228 = vsel %vm4226, %v645, 0
        %v4231 = vsel %vm4226, %v748, 0
        %v4234 = vsel %vm4226, %v851, 0
        %v4237 = vsel %vm4226, %v954, 0
        %v4240 = vsel %vm4226, %v1057, 0
        %v4243 = vsel %vm4226, %v1160, 0
        %v4246 = vsel %vm4226, %v1263, 0
        %v4249 = vsel %vm4226, %v1366, 0
        %v4252 = vsel %vm4226, %v1469, 0
        %v4255 = vsel %vm4226, %v1572, 0
        %v4258 = vsel %vm4226, %v1675, 0
        %v4261 = vsel %vm4226, %v1778, 0
        %v4264 = vsel %vm4226, %v1881, 0
        %v4267 = vsel %vm4226, %v1984, 0
        %v4270 = vsel %vm4226, %v2087, 0
        %v4273 = vsel %vm4226, %v2190, 0
        %4275 = vmatprep.subr.mxu0 0.0
        %4276 = vmatpush1.msra.mxu0 %v4225
        %4277 = vmatprep.subr.mxu0 0.0
        %4278 = vmatpush1.msra.mxu0 0.0
        %4279 = vmatprep.subr.mxu0 0.0
        %4280 = vmatpush1.msra.mxu0 0.0
        %4281 = vmatprep.subr.mxu0 0.0
        %4282 = vmatpush1.msra.mxu0 0.0
        %4283 = vmatprep.subr.mxu0 0.0
        %4284 = vmatpush1.msra.mxu0 0.0
        %4285 = vmatprep.subr.mxu0 0.0
        %4286 = vmatpush1.msra.mxu0 0.0
        %4287 = vmatprep.subr.mxu0 0.0
        %4288 = vmatpush1.msra.mxu0 0.0
        %4289 = vmatprep.subr.mxu0 0.0
        %4290 = vmatpush1.msra.mxu0 0.0
        %4291 = vmatprep.subr.mxu0 0.0
        %4292 = vmatpush1.msra.mxu0 0.0
        %4293 = vmatprep.subr.mxu0 0.0
        %4294 = vmatpush1.msra.mxu0 0.0
        %4295 = vmatprep.subr.mxu0 0.0
        %4296 = vmatpush1.msra.mxu0 0.0
        %4297 = vmatprep.subr.mxu0 0.0
        %4298 = vmatpush1.msra.mxu0 0.0
        %4299 = vmatprep.subr.mxu0 0.0
        %4300 = vmatpush1.msra.mxu0 0.0
        %4301 = vmatprep.subr.mxu0 0.0
        %4302 = vmatpush1.msra.mxu0 0.0
        %4303 = vmatprep.subr.mxu0 0.0
        %4304 = vmatpush1.msra.mxu0 0.0
        %4305 = vmatprep.subr.mxu0 0.0
        %4306 = vmatpush1.msra.mxu0 0.0
        %4307 = vmatprep.subr.mxu0 0.0
        %4308 = vmatpush1.msra.mxu0 0.0
        %4309 = vmatprep.subr.mxu0 0.0
        %4310 = vmatpush1.msra.mxu0 0.0
        %4311 = vmatprep.subr.mxu0 0.0
        %4312 = vmatpush1.msra.mxu0 0.0
        %4313 = vmatprep.subr.mxu0 0.0
        %4314 = vmatpush1.msra.mxu0 0.0
        %4315 = vmatprep.subr.mxu0 0.0
        %4316 = vmatpush1.msra.mxu0 0.0
        %4317 = vmatprep.subr.mxu0 0.0
        %4318 = vmatpush1.msra.mxu0 0.0
        %4319 = vmatprep.subr.mxu0 0.0
        %4320 = vmatpush1.msra.mxu0 0.0
        %4321 = vmatprep.subr.mxu0 0.0
        %4322 = vmatpush1.msra.mxu0 0.0
        %4323 = vmatprep.subr.mxu0 0.0
        %4324 = vmatpush1.msra.mxu0 0.0
        %4325 = vmatprep.subr.mxu0 0.0
        %4326 = vmatpush1.msra.mxu0 0.0
        %4327 = vmatprep.subr.mxu0 0.0
        %4328 = vmatpush1.msra.mxu0 0.0
        %4329 = vmatprep.subr.mxu0 0.0
        %4330 = vmatpush1.msra.mxu0 0.0
        %4331 = vmatprep.subr.mxu0 0.0
        %4332 = vmatpush1.msra.mxu0 0.0
        %4333 = vmatprep.subr.mxu0 0.0
        %4334 = vmatpush1.msra.mxu0 0.0
        %4335 = vmatprep.subr.mxu0 0.0
        %4336 = vmatpush1.msra.mxu0 0.0
        %4337 = vmatprep.subr.mxu0 0.0
        %4338 = vmatpush1.msra.mxu0 0.0
        %4339 = vmatprep.mubr.f32.mxu0 0.0
        %4340 = vmatmul.mubr.f32.gmra.mrb[0].mxu0 %v4228
        %v4341 = vpop.f32.mrb[0].mxu0
        %v4342 = vadd.f32 0.0, %v4341
        %v4343 = vpop.f32.mrb[0].mxu0
        %4344 = vmatprep.mubr.f32.mxu0 0.0
        %4345 = vmatmul.mubr.f32.gmra.mrb[0].mxu0 %v4231
        %v4346 = vpop.f32.mrb[0].mxu0
        %v4347 = vadd.f32 0.0, %v4346
        %v4348 = vpop.f32.mrb[0].mxu0
        %4349 = vmatprep.mubr.f32.mxu0 0.0
        %4350 = vmatmul.mubr.f32.gmra.mrb[0].mxu0 %v4234
        %v4351 = vpop.f32.mrb[0].mxu0
        %v4352 = vadd.f32 0.0, %v4351
        %v4353 = vpop.f32.mrb[0].mxu0
        %4354 = vmatprep.mubr.f32.mxu0 0.0
        %4355 = vmatmul.mubr.f32.gmra.mrb[0].mxu0 %v4237
        %v4356 = vpop.f32.mrb[0].mxu0
        %v4357 = vadd.f32 0.0, %v4356
        %v4358 = vpop.f32.mrb[0].mxu0
        %4359 = vmatprep.mubr.f32.mxu0 0.0
        %4360 = vmatmul.mubr.f32.gmra.mrb[0].mxu0 %v4240
        %v4361 = vpop.f32.mrb[0].mxu0
        %v4362 = vadd.f32 0.0, %v4361
        %v4363 = vpop.f32.mrb[0].mxu0
        %4364 = vmatprep.mubr.f32.mxu0 0.0
        %4365 = vmatmul.mubr.f32.gmra.mrb[0].mxu0 %v4243
        %v4366 = vpop.f32.mrb[0].mxu0
        %v4367 = vadd.f32 0.0, %v4366
        %v4368 = vpop.f32.mrb[0].mxu0
        %4369 = vmatprep.mubr.f32.mxu0 0.0
        %4370 = vmatmul.mubr.f32.gmra.mrb[0].mxu0 %v4246
        %v4371 = vpop.f32.mrb[0].mxu0
        %v4372 = vadd.f32 0.0, %v4371
        %v4373 = vpop.f32.mrb[0].mxu0
        %4374 = vmatprep.mubr.f32.mxu0 0.0
        %4375 = vmatmul.mubr.f32.gmra.mrb[0].mxu0 %v4249
        %v4376 = vpop.f32.mrb[0].mxu0
        %v4377 = vadd.f32 0.0, %v4376
        %v4378 = vpop.f32.mrb[0].mxu0
        %4379 = vmatprep.mubr.f32.mxu0 0.0
        %4380 = vmatmul.mubr.f32.gmra.mrb[0].mxu0 %v4252
        %v4381 = vpop.f32.mrb[0].mxu0
        %v4382 = vadd.f32 0.0, %v4381
        %v4383 = vpop.f32.mrb[0].mxu0
        %4384 = vmatprep.mubr.f32.mxu0 0.0
        %4385 = vmatmul.mubr.f32.gmra.mrb[0].mxu0 %v4255
        %v4386 = vpop.f32.mrb[0].mxu0
        %v4387 = vadd.f32 0.0, %v4386
        %v4388 = vpop.f32.mrb[0].mxu0
        %4389 = vmatprep.mubr.f32.mxu0 0.0
        %4390 = vmatmul.mubr.f32.gmra.mrb[0].mxu0 %v4258
        %v4391 = vpop.f32.mrb[0].mxu0
        %v4392 = vadd.f32 0.0, %v4391
        %v4393 = vpop.f32.mrb[0].mxu0
        %4394 = vmatprep.mubr.f32.mxu0 0.0
        %4395 = vmatmul.mubr.f32.gmra.mrb[0].mxu0 %v4261
        %v4396 = vpop.f32.mrb[0].mxu0
        %v4397 = vadd.f32 0.0, %v4396
        %v4398 = vpop.f32.mrb[0].mxu0
        %4399 = vmatprep.mubr.f32.mxu0 0.0
        %4400 = vmatmul.mubr.f32.gmra.mrb[0].mxu0 %v4264
        %v4401 = vpop.f32.mrb[0].mxu0
        %v4402 = vadd.f32 0.0, %v4401
        %v4403 = vpop.f32.mrb[0].mxu0
        %4404 = vmatprep.mubr.f32.mxu0 0.0
        %4405 = vmatmul.mubr.f32.gmra.mrb[0].mxu0 %v4267
        %v4406 = vpop.f32.mrb[0].mxu0
        %v4407 = vadd.f32 0.0, %v4406
        %v4408 = vpop.f32.mrb[0].mxu0
        %4409 = vmatprep.mubr.f32.mxu0 0.0
        %4410 = vmatmul.mubr.f32.gmra.mrb[0].mxu0 %v4270
        %v4411 = vpop.f32.mrb[0].mxu0
        %v4412 = vadd.f32 0.0, %v4411
        %v4413 = vpop.f32.mrb[0].mxu0
        %4414 = vmatprep.mubr.f32.mxu0 0.0
        %4415 = vmatmul.mubr.f32.gmra.mrb[0].mxu0 %v4273
        %v4416 = vpop.f32.mrb[0].mxu0
        %v4417 = vadd.f32 0.0, %v4416
        %v4418 = vpop.f32.mrb[0].mxu0
        %4419 = vdwg.mxu0
        %v4420 = vadd.f32 %v4163, %v4342
        %v4421 = vadd.f32 %v4166, %v4347
        %v4422 = vadd.f32 %v4171, %v4352
        %v4423 = vadd.f32 %v4174, %v4357
        %v4424 = vadd.f32 %v4179, %v4362
        %v4425 = vadd.f32 %v4182, %v4367
        %v4426 = vadd.f32 %v4187, %v4372
        %v4427 = vadd.f32 %v4190, %v4377
        %v4428 = vadd.f32 %v4195, %v4382
        %v4429 = vadd.f32 %v4198, %v4387
        %v4430 = vadd.f32 %v4203, %v4392
        %v4431 = vadd.f32 %v4206, %v4397
        %v4432 = vadd.f32 %v4211, %v4402
        %v4433 = vadd.f32 %v4214, %v4407
        %v4434 = vadd.f32 %v4219, %v4412
        %v4435 = vadd.f32 %v4222, %v4417
        %v4436 = vld [vmem:[%s6] sm:$0xff]
        %v4438 = vsel %vm4226, %v2294, 0
        %v4441 = vsel %vm4226, %v2398, 0
        %v4444 = vsel %vm4226, %v2502, 0
        %v4447 = vsel %vm4226, %v2606, 0
        %v4450 = vsel %vm4226, %v2710, 0
        %v4453 = vsel %vm4226, %v2814, 0
        %v4456 = vsel %vm4226, %v2918, 0
        %v4459 = vsel %vm4226, %v3022, 0
        %v4462 = vsel %vm4226, %v3126, 0
        %v4465 = vsel %vm4226, %v3230, 0
        %v4468 = vsel %vm4226, %v3334, 0
        %v4471 = vsel %vm4226, %v3438, 0
        %v4474 = vsel %vm4226, %v3542, 0
        %v4477 = vsel %vm4226, %v3646, 0
        %v4480 = vsel %vm4226, %v3750, 0
        %v4483 = vsel %vm4226, %v3854, 0
        %4485 = vmatprep.subr.mxu0 0.0
        %4486 = vmatpush1.msra.mxu0 %v4436
        %4487 = vmatprep.subr.mxu0 0.0
        %4488 = vmatpush1.msra.mxu0 0.0
        %4489 = vmatprep.subr.mxu0 0.0
        %4490 = vmatpush1.msra.mxu0 0.0
        %4491 = vmatprep.subr.mxu0 0.0
        %4492 = vmatpush1.msra.mxu0 0.0
        %4493 = vmatprep.subr.mxu0 0.0
        %4494 = vmatpush1.msra.mxu0 0.0
        %4495 = vmatprep.subr.mxu0 0.0
        %4496 = vmatpush1.msra.mxu0 0.0
        %4497 = vmatprep.subr.mxu0 0.0
        %4498 = vmatpush1.msra.mxu0 0.0
        %4499 = vmatprep.subr.mxu0 0.0
        %4500 = vmatpush1.msra.mxu0 0.0
        %4501 = vmatprep.subr.mxu0 0.0
        %4502 = vmatpush1.msra.mxu0 0.0
        %4503 = vmatprep.subr.mxu0 0.0
        %4504 = vmatpush1.msra.mxu0 0.0
        %4505 = vmatprep.subr.mxu0 0.0
        %4506 = vmatpush1.msra.mxu0 0.0
        %4507 = vmatprep.subr.mxu0 0.0
        %4508 = vmatpush1.msra.mxu0 0.0
        %4509 = vmatprep.subr.mxu0 0.0
        %4510 = vmatpush1.msra.mxu0 0.0
        %4511 = vmatprep.subr.mxu0 0.0
        %4512 = vmatpush1.msra.mxu0 0.0
        %4513 = vmatprep.subr.mxu0 0.0
        %4514 = vmatpush1.msra.mxu0 0.0
        %4515 = vmatprep.subr.mxu0 0.0
        %4516 = vmatpush1.msra.mxu0 0.0
        %4517 = vmatprep.subr.mxu0 0.0
        %4518 = vmatpush1.msra.mxu0 0.0
        %4519 = vmatprep.subr.mxu0 0.0
        %4520 = vmatpush1.msra.mxu0 0.0
        %4521 = vmatprep.subr.mxu0 0.0
        %4522 = vmatpush1.msra.mxu0 0.0
        %4523 = vmatprep.subr.mxu0 0.0
        %4524 = vmatpush1.msra.mxu0 0.0
        %4525 = vmatprep.subr.mxu0 0.0
        %4526 = vmatpush1.msra.mxu0 0.0
        %4527 = vmatprep.subr.mxu0 0.0
        %4528 = vmatpush1.msra.mxu0 0.0
        %4529 = vmatprep.subr.mxu0 0.0
        %4530 = vmatpush1.msra.mxu0 0.0
        %4531 = vmatprep.subr.mxu0 0.0
        %4532 = vmatpush1.msra.mxu0 0.0
        %4533 = vmatprep.subr.mxu0 0.0
        %4534 = vmatpush1.msra.mxu0 0.0
        %4535 = vmatprep.subr.mxu0 0.0
        %4536 = vmatpush1.msra.mxu0 0.0
        %4537 = vmatprep.subr.mxu0 0.0
        %4538 = vmatpush1.msra.mxu0 0.0
        %4539 = vmatprep.subr.mxu0 0.0
        %4540 = vmatpush1.msra.mxu0 0.0
        %4541 = vmatprep.subr.mxu0 0.0
        %4542 = vmatpush1.msra.mxu0 0.0
        %4543 = vmatprep.subr.mxu0 0.0
        %4544 = vmatpush1.msra.mxu0 0.0
        %4545 = vmatprep.subr.mxu0 0.0
        %4546 = vmatpush1.msra.mxu0 0.0
        %4547 = vmatprep.subr.mxu0 0.0
        %4548 = vmatpush1.msra.mxu0 0.0
        %4549 = vmatprep.mubr.f32.mxu0 0.0
        %4550 = vmatmul.mubr.f32.gmra.mrb[0].mxu0 %v4438
        %v4551 = vpop.f32.mrb[0].mxu0
        %v4552 = vadd.f32 0.0, %v4551
        %v4553 = vpop.f32.mrb[0].mxu0
        %4554 = vmatprep.mubr.f32.mxu0 0.0
        %4555 = vmatmul.mubr.f32.gmra.mrb[0].mxu0 %v4441
        %v4556 = vpop.f32.mrb[0].mxu0
        %v4557 = vadd.f32 0.0, %v4556
        %v4558 = vpop.f32.mrb[0].mxu0
        %4559 = vmatprep.mubr.f32.mxu0 0.0
        %4560 = vmatmul.mubr.f32.gmra.mrb[0].mxu0 %v4444
        %v4561 = vpop.f32.mrb[0].mxu0
        %v4562 = vadd.f32 0.0, %v4561
        %v4563 = vpop.f32.mrb[0].mxu0
        %4564 = vmatprep.mubr.f32.mxu0 0.0
        %4565 = vmatmul.mubr.f32.gmra.mrb[0].mxu0 %v4447
        %v4566 = vpop.f32.mrb[0].mxu0
        %v4567 = vadd.f32 0.0, %v4566
        %v4568 = vpop.f32.mrb[0].mxu0
        %4569 = vmatprep.mubr.f32.mxu0 0.0
        %4570 = vmatmul.mubr.f32.gmra.mrb[0].mxu0 %v4450
        %v4571 = vpop.f32.mrb[0].mxu0
        %v4572 = vadd.f32 0.0, %v4571
        %v4573 = vpop.f32.mrb[0].mxu0
        %4574 = vmatprep.mubr.f32.mxu0 0.0
        %4575 = vmatmul.mubr.f32.gmra.mrb[0].mxu0 %v4453
        %v4576 = vpop.f32.mrb[0].mxu0
        %v4577 = vadd.f32 0.0, %v4576
        %v4578 = vpop.f32.mrb[0].mxu0
        %4579 = vmatprep.mubr.f32.mxu0 0.0
        %4580 = vmatmul.mubr.f32.gmra.mrb[0].mxu0 %v4456
        %v4581 = vpop.f32.mrb[0].mxu0
        %v4582 = vadd.f32 0.0, %v4581
        %v4583 = vpop.f32.mrb[0].mxu0
        %4584 = vmatprep.mubr.f32.mxu0 0.0
        %4585 = vmatmul.mubr.f32.gmra.mrb[0].mxu0 %v4459
        %v4586 = vpop.f32.mrb[0].mxu0
        %v4587 = vadd.f32 0.0, %v4586
        %v4588 = vpop.f32.mrb[0].mxu0
        %4589 = vmatprep.mubr.f32.mxu0 0.0
        %4590 = vmatmul.mubr.f32.gmra.mrb[0].mxu0 %v4462
        %v4591 = vpop.f32.mrb[0].mxu0
        %v4592 = vadd.f32 0.0, %v4591
        %v4593 = vpop.f32.mrb[0].mxu0
        %4594 = vmatprep.mubr.f32.mxu0 0.0
        %4595 = vmatmul.mubr.f32.gmra.mrb[0].mxu0 %v4465
        %v4596 = vpop.f32.mrb[0].mxu0
        %v4597 = vadd.f32 0.0, %v4596
        %v4598 = vpop.f32.mrb[0].mxu0
        %4599 = vmatprep.mubr.f32.mxu0 0.0
        %4600 = vmatmul.mubr.f32.gmra.mrb[0].mxu0 %v4468
        %v4601 = vpop.f32.mrb[0].mxu0
        %v4602 = vadd.f32 0.0, %v4601
        %v4603 = vpop.f32.mrb[0].mxu0
        %4604 = vmatprep.mubr.f32.mxu0 0.0
        %4605 = vmatmul.mubr.f32.gmra.mrb[0].mxu0 %v4471
        %v4606 = vpop.f32.mrb[0].mxu0
        %v4607 = vadd.f32 0.0, %v4606
        %v4608 = vpop.f32.mrb[0].mxu0
        %4609 = vmatprep.mubr.f32.mxu0 0.0
        %4610 = vmatmul.mubr.f32.gmra.mrb[0].mxu0 %v4474
        %v4611 = vpop.f32.mrb[0].mxu0
        %v4612 = vadd.f32 0.0, %v4611
        %v4613 = vpop.f32.mrb[0].mxu0
        %4614 = vmatprep.mubr.f32.mxu0 0.0
        %4615 = vmatmul.mubr.f32.gmra.mrb[0].mxu0 %v4477
        %v4616 = vpop.f32.mrb[0].mxu0
        %v4617 = vadd.f32 0.0, %v4616
        %v4618 = vpop.f32.mrb[0].mxu0
        %4619 = vmatprep.mubr.f32.mxu0 0.0
        %4620 = vmatmul.mubr.f32.gmra.mrb[0].mxu0 %v4480
        %v4621 = vpop.f32.mrb[0].mxu0
        %v4622 = vadd.f32 0.0, %v4621
        %v4623 = vpop.f32.mrb[0].mxu0
        %4624 = vmatprep.mubr.f32.mxu0 0.0
        %4625 = vmatmul.mubr.f32.gmra.mrb[0].mxu0 %v4483
        %v4626 = vpop.f32.mrb[0].mxu0
        %v4627 = vadd.f32 0.0, %v4626
        %v4628 = vpop.f32.mrb[0].mxu0
        %4629 = vdwg.mxu0
        %v4630 = vadd.f32 %v4420, %v4552
        %v4631 = vadd.f32 %v4421, %v4557
        %v4632 = vadd.f32 %v4422, %v4562
        %v4633 = vadd.f32 %v4423, %v4567
        %v4634 = vadd.f32 %v4424, %v4572
        %v4635 = vadd.f32 %v4425, %v4577
        %v4636 = vadd.f32 %v4426, %v4582
        %v4637 = vadd.f32 %v4427, %v4587
        %v4638 = vadd.f32 %v4428, %v4592
        %v4639 = vadd.f32 %v4429, %v4597
        %v4640 = vadd.f32 %v4430, %v4602
        %v4641 = vadd.f32 %v4431, %v4607
        %v4642 = vadd.f32 %v4432, %v4612
        %v4643 = vadd.f32 %v4433, %v4617
        %v4644 = vadd.f32 %v4434, %v4622
        %v4645 = vadd.f32 %v4435, %v4627
        %v4646 = vld [vmem:[%s7] sm:$0x1]
        %v4648 = vlaneseq
        %v4649 = vshrl.u32 %v4648, 7
        %v4650 = vsub.s32 0, %v4649
        %v4651 = vrot.slane %v4646, %v4650
        %v4653 = vadd.f32 %v4630, %v4651
        %v4654 = vadd.f32 %v4631, %v4651
        %v4655 = vadd.f32 %v4632, %v4651
        %v4656 = vadd.f32 %v4633, %v4651
        %v4657 = vadd.f32 %v4634, %v4651
        %v4658 = vadd.f32 %v4635, %v4651
        %v4659 = vadd.f32 %v4636, %v4651
        %v4660 = vadd.f32 %v4637, %v4651
        %v4661 = vadd.f32 %v4638, %v4651
        %v4662 = vadd.f32 %v4639, %v4651
        %v4663 = vadd.f32 %v4640, %v4651
        %v4664 = vadd.f32 %v4641, %v4651
        %v4665 = vadd.f32 %v4642, %v4651
        %v4666 = vadd.f32 %v4643, %v4651
        %v4667 = vadd.f32 %v4644, %v4651
        %v4668 = vadd.f32 %v4645, %v4651
        %v4669 = vtanh.pop %v4653
        %v4670 = vtanh.pop %v4654
        %v4671 = vtanh.pop %v4655
        %v4672 = vtanh.pop %v4656
        %v4673 = vtanh.pop %v4657
        %v4674 = vtanh.pop %v4658
        %v4675 = vtanh.pop %v4659
        %v4676 = vtanh.pop %v4660
        %v4677 = vtanh.pop %v4661
        %v4678 = vtanh.pop %v4662
        %v4679 = vtanh.pop %v4663
        %v4680 = vtanh.pop %v4664
        %v4681 = vtanh.pop %v4665
        %v4682 = vtanh.pop %v4666
        %v4683 = vtanh.pop %v4667
        %v4684 = vtanh.pop %v4668
        %v4685 = vpack.c.bf16 %v4670, %v4669
        %v4686 = vpack.c.bf16 %v4672, %v4671
        %v4687 = vpack.c.bf16 %v4674, %v4673
        %v4688 = vpack.c.bf16 %v4676, %v4675
        %v4689 = vpack.c.bf16 %v4678, %v4677
        %v4690 = vpack.c.bf16 %v4680, %v4679
        %v4691 = vpack.c.bf16 %v4682, %v4681
        %v4692 = vpack.c.bf16 %v4684, %v4683
        %v4693 = vld [vmem:[%s8] sm:$0xf]
        %v4694 = vld [vmem:[%s8 + $0x4] sm:$0xf]
        %v4695 = vld [vmem:[%s8 + $0x8] sm:$0xf]
        %v4696 = vld [vmem:[%s8 + $0xc] sm:$0xf]
        %v4697 = vld [vmem:[%s8 + $0x10] sm:$0xf]
        %v4698 = vld [vmem:[%s8 + $0x14] sm:$0xf]
        %v4699 = vld [vmem:[%s8 + $0x18] sm:$0xf]
        %v4700 = vld [vmem:[%s8 + $0x1c] sm:$0xf]
        %v4701 = vld [vmem:[%s9] sm:$0x1]
        %v4703 = vlaneseq
        %v4704 = vshrl.u32 %v4703, 7
        %v4705 = vsub.s32 0, %v4704
        %v4706 = vrot.slane %v4701, %v4705
        %v4716 = vunpack.c.l.b16 %v4693
        %v4717 = vunpack.c.l.b16 %v4694
        %v4718 = vunpack.c.l.b16 %v4695
        %v4719 = vunpack.c.l.b16 %v4696
        %v4720 = vunpack.c.l.b16 %v4697
        %v4721 = vunpack.c.l.b16 %v4698
        %v4722 = vunpack.c.l.b16 %v4699
        %v4723 = vunpack.c.l.b16 %v4700
        %v4724 = vpack.c.b16 %v4717, %v4716
        %v4725 = vpack.c.b16 %v4719, %v4718
        %v4726 = vpack.c.b16 %v4721, %v4720
        %v4727 = vpack.c.b16 %v4723, %v4722
        %vm4732 = vcmask 523264
        %v4734 = vsel %vm4732, %v4685, 0
        %v4737 = vsel %vm4732, %v4686, 0
        %v4740 = vsel %vm4732, %v4687, 0
        %v4743 = vsel %vm4732, %v4688, 0
        %v4746 = vsel %vm4732, %v4689, 0
        %v4749 = vsel %vm4732, %v4690, 0
        %v4752 = vsel %vm4732, %v4691, 0
        %v4755 = vsel %vm4732, %v4692, 0
        %4757 = vmatprep.subr.bf16.mxu0 0
        %4758 = vmatpush1.bf16.msra.mxu0 %v4724
        %4759 = vmatprep.subr.bf16.mxu0 0
        %4760 = vmatpush1.bf16.msra.mxu0 %v4725
        %4761 = vmatprep.subr.bf16.mxu0 0
        %4762 = vmatpush1.bf16.msra.mxu0 %v4726
        %4763 = vmatprep.subr.bf16.mxu0 0
        %4764 = vmatpush1.bf16.msra.mxu0 %v4727
        %4765 = vmatprep.subr.bf16.mxu0 0
        %4766 = vmatpush1.bf16.msra.mxu0 0
        %4767 = vmatprep.subr.bf16.mxu0 0
        %4768 = vmatpush1.bf16.msra.mxu0 0
        %4769 = vmatprep.subr.bf16.mxu0 0
        %4770 = vmatpush1.bf16.msra.mxu0 0
        %4771 = vmatprep.subr.bf16.mxu0 0
        %4772 = vmatpush1.bf16.msra.mxu0 0
        %4773 = vmatprep.subr.bf16.mxu0 0
        %4774 = vmatpush1.bf16.msra.mxu0 0
        %4775 = vmatprep.subr.bf16.mxu0 0
        %4776 = vmatpush1.bf16.msra.mxu0 0
        %4777 = vmatprep.subr.bf16.mxu0 0
        %4778 = vmatpush1.bf16.msra.mxu0 0
        %4779 = vmatprep.subr.bf16.mxu0 0
        %4780 = vmatpush1.bf16.msra.mxu0 0
        %4781 = vmatprep.subr.bf16.mxu0 0
        %4782 = vmatpush1.bf16.msra.mxu0 0
        %4783 = vmatprep.subr.bf16.mxu0 0
        %4784 = vmatpush1.bf16.msra.mxu0 0
        %4785 = vmatprep.subr.bf16.mxu0 0
        %4786 = vmatpush1.bf16.msra.mxu0 0
        %4787 = vmatprep.subr.bf16.mxu0 0
        %4788 = vmatpush1.bf16.msra.mxu0 0
        %4789 = vmatprep.mubr.bf16.mxu0 0
        %4790 = vmatmul.mubr.bf16.gmra.mrb[0].mxu0 %v4734
        %v4791 = vpop.f32.mrb[0].mxu0
        %v4792 = vadd.f32 %v4706, %v4791
        %v4793 = vpop.f32.mrb[0].mxu0
        %v4794 = vpop.f32.mrb[0].mxu0
        %v4795 = vadd.f32 %v4706, %v4794
        %v4796 = vpop.f32.mrb[0].mxu0
        %4797 = vmatprep.mubr.bf16.mxu0 0
        %4798 = vmatmul.mubr.bf16.gmra.mrb[0].mxu0 %v4737
        %v4799 = vpop.f32.mrb[0].mxu0
        %v4800 = vadd.f32 %v4706, %v4799
        %v4801 = vpop.f32.mrb[0].mxu0
        %v4802 = vpop.f32.mrb[0].mxu0
        %v4803 = vadd.f32 %v4706, %v4802
        %v4804 = vpop.f32.mrb[0].mxu0
        %4805 = vmatprep.mubr.bf16.mxu0 0
        %4806 = vmatmul.mubr.bf16.gmra.mrb[0].mxu0 %v4740
        %v4807 = vpop.f32.mrb[0].mxu0
        %v4808 = vadd.f32 %v4706, %v4807
        %v4809 = vpop.f32.mrb[0].mxu0
        %v4810 = vpop.f32.mrb[0].mxu0
        %v4811 = vadd.f32 %v4706, %v4810
        %v4812 = vpop.f32.mrb[0].mxu0
        %4813 = vmatprep.mubr.bf16.mxu0 0
        %4814 = vmatmul.mubr.bf16.gmra.mrb[0].mxu0 %v4743
        %v4815 = vpop.f32.mrb[0].mxu0
        %v4816 = vadd.f32 %v4706, %v4815
        %v4817 = vpop.f32.mrb[0].mxu0
        %v4818 = vpop.f32.mrb[0].mxu0
        %v4819 = vadd.f32 %v4706, %v4818
        %v4820 = vpop.f32.mrb[0].mxu0
        %4821 = vmatprep.mubr.bf16.mxu0 0
        %4822 = vmatmul.mubr.bf16.gmra.mrb[0].mxu0 %v4746
        %v4823 = vpop.f32.mrb[0].mxu0
        %v4824 = vadd.f32 %v4706, %v4823
        %v4825 = vpop.f32.mrb[0].mxu0
        %v4826 = vpop.f32.mrb[0].mxu0
        %v4827 = vadd.f32 %v4706, %v4826
        %v4828 = vpop.f32.mrb[0].mxu0
        %4829 = vmatprep.mubr.bf16.mxu0 0
        %4830 = vmatmul.mubr.bf16.gmra.mrb[0].mxu0 %v4749
        %v4831 = vpop.f32.mrb[0].mxu0
        %v4832 = vadd.f32 %v4706, %v4831
        %v4833 = vpop.f32.mrb[0].mxu0
        %v4834 = vpop.f32.mrb[0].mxu0
        %v4835 = vadd.f32 %v4706, %v4834
        %v4836 = vpop.f32.mrb[0].mxu0
        %4837 = vmatprep.mubr.bf16.mxu0 0
        %4838 = vmatmul.mubr.bf16.gmra.mrb[0].mxu0 %v4752
        %v4839 = vpop.f32.mrb[0].mxu0
        %v4840 = vadd.f32 %v4706, %v4839
        %v4841 = vpop.f32.mrb[0].mxu0
        %v4842 = vpop.f32.mrb[0].mxu0
        %v4843 = vadd.f32 %v4706, %v4842
        %v4844 = vpop.f32.mrb[0].mxu0
        %4845 = vmatprep.mubr.bf16.mxu0 0
        %4846 = vmatmul.mubr.bf16.gmra.mrb[0].mxu0 %v4755
        %v4847 = vpop.f32.mrb[0].mxu0
        %v4848 = vadd.f32 %v4706, %v4847
        %v4849 = vpop.f32.mrb[0].mxu0
        %v4850 = vpop.f32.mrb[0].mxu0
        %v4851 = vadd.f32 %v4706, %v4850
        %v4852 = vpop.f32.mrb[0].mxu0
        %4853 = vdwg.mxu0
        %v4854 = vpack.c.bf16 %v4795, %v4792
        %v4855 = vpack.c.bf16 %v4803, %v4800
        %v4856 = vpack.c.bf16 %v4811, %v4808
        %v4857 = vpack.c.bf16 %v4819, %v4816
        %v4858 = vpack.c.bf16 %v4827, %v4824
        %v4859 = vpack.c.bf16 %v4835, %v4832
        %v4860 = vpack.c.bf16 %v4843, %v4840
        %v4861 = vpack.c.bf16 %v4851, %v4848
        %v4870 = vunpack.c.l.b16 %v4854
        %v4871 = vunpack.c.h.b16 %v4854
        %v4872 = vunpack.c.l.b16 %v4855
        %v4873 = vunpack.c.h.b16 %v4855
        %v4874 = vunpack.c.l.b16 %v4856
        %v4875 = vunpack.c.h.b16 %v4856
        %v4876 = vunpack.c.l.b16 %v4857
        %v4877 = vunpack.c.h.b16 %v4857
        %v4878 = vunpack.c.l.b16 %v4858
        %v4879 = vunpack.c.h.b16 %v4858
        %v4880 = vunpack.c.l.b16 %v4859
        %v4881 = vunpack.c.h.b16 %v4859
        %v4882 = vunpack.c.l.b16 %v4860
        %v4883 = vunpack.c.h.b16 %v4860
        %v4884 = vunpack.c.l.b16 %v4861
        %v4885 = vunpack.c.h.b16 %v4861
        %v4886 = vpack.c.b16 %v4870, %v4870
        %v4887 = vpack.c.b16 %v4871, %v4871
        %v4888 = vpack.c.b16 %v4872, %v4872
        %v4889 = vpack.c.b16 %v4873, %v4873
        %v4890 = vpack.c.b16 %v4874, %v4874
        %v4891 = vpack.c.b16 %v4875, %v4875
        %v4892 = vpack.c.b16 %v4876, %v4876
        %v4893 = vpack.c.b16 %v4877, %v4877
        %v4894 = vpack.c.b16 %v4878, %v4878
        %v4895 = vpack.c.b16 %v4879, %v4879
        %v4896 = vpack.c.b16 %v4880, %v4880
        %v4897 = vpack.c.b16 %v4881, %v4881
        %v4898 = vpack.c.b16 %v4882, %v4882
        %v4899 = vpack.c.b16 %v4883, %v4883
        %v4900 = vpack.c.b16 %v4884, %v4884
        %v4901 = vpack.c.b16 %v4885, %v4885
        %4918 = vst [vmem:[%s409] sm:$0xf] %v4886
        %4919 = vst [vmem:[%s409 + $0x4] sm:$0xf] %v4887
        %4920 = vst [vmem:[%s409 + $0x8] sm:$0xf] %v4888
        %4921 = vst [vmem:[%s409 + $0xc] sm:$0xf] %v4889
        %4922 = vst [vmem:[%s409 + $0x10] sm:$0xf] %v4890
        %4923 = vst [vmem:[%s409 + $0x14] sm:$0xf] %v4891
        %4924 = vst [vmem:[%s409 + $0x18] sm:$0xf] %v4892
        %4925 = vst [vmem:[%s409 + $0x1c] sm:$0xf] %v4893
        %4926 = vst [vmem:[%s409 + $0x20] sm:$0xf] %v4894
        %4927 = vst [vmem:[%s409 + $0x24] sm:$0xf] %v4895
        %4928 = vst [vmem:[%s409 + $0x28] sm:$0xf] %v4896
        %4929 = vst [vmem:[%s409 + $0x2c] sm:$0xf] %v4897
        %4930 = vst [vmem:[%s409 + $0x30] sm:$0xf] %v4898
        %4931 = vst [vmem:[%s409 + $0x34] sm:$0xf] %v4899
        %4932 = vst [vmem:[%s409 + $0x38] sm:$0xf] %v4900
        %4933 = vst [vmem:[%s409 + $0x3c] sm:$0xf] %v4901
        %s4934 = sand.u32 %s260, 1
        %s4935 = scalar_lea.sflag [#allocation4], %s4934
        %s4936 = sand.u32 %s260, 1
        %s4937 = smul.addr %s4936, 64
        %s4938 = scalar_lea.vmem [#allocation5], %s4937
        // Predicated region
        $region65: #{dnn_forward.1} parent=59 // pred_check
          %p4939 = pneg %p270
        $region66: #{dnn_forward.1} parent=59 // pred_check_branch
          %4941 = sbr.rel (%p4939) target = $region68
        $region67: #{dnn_forward.1} parent=59 // pred_region
          %s4942 = smul.u32 16, %s27
          %s4944 = ssub.s32 1024, 1024
          %4945 = vsyncadd %s4935, %s4944
          %s4946 = smul.addr %s4942, 64
          %s4947 = scalar_lea.hbm %s10, %s4946
          %s4948 = sshll.u32 %s4938, 4
          %s4949 = int_to_ptr.vmem [resolvable:$true] %s4948
          %4954 = dma.vmem_to_hbm [thread:$0]  %s4949, 1024, %s4947, %s4935, 64, 64, 4
        $region68: #{dnn_forward.1} parent=59 // pred_fallthru
          _
      $region60: #{dnn_forward.1} parent=5 // pred_fallthru
        _
      %p4955 = scmp.le.s32.totalorder 2, %s22
      // Predicated region
      $region69: #{dnn_forward.1} parent=5 // pred_check
        %p4956 = pneg %p4955
      $region70: #{dnn_forward.1} parent=5 // pred_check_branch
        %4958 = sbr.rel (%p4956) target = $region72
      $region71: #{dnn_forward.1} parent=5 // pred_region
        %s4959 = ssub.s32 %s22, 2
        // Predicated region
        $region73: #{dnn_forward.1} parent=71 // pred_check
          %p4960 = pneg %p276
        $region74: #{dnn_forward.1} parent=71 // pred_check_branch
          %4962 = sbr.rel (%p4960) target = $region76
        $region75: #{dnn_forward.1} parent=71 // pred_region
          %s4963 = sand.u32 %s261, 1
          %s4964 = scalar_lea.sflag [#allocation4], %s4963
          %s4965 = sand.u32 %s261, 1
          %s4966 = smul.addr %s4965, 64
          %s4967 = scalar_lea.vmem [#allocation5], %s4966
          %4968 = dma.done %s4964, 1024
        $region76: #{dnn_forward.1} parent=71 // pred_fallthru
          _
      $region72: #{dnn_forward.1} parent=5 // pred_fallthru
        _
    $region6: #{dnn_forward.1} parent=1 // loop_footer
      %s26 = sadd.s32 1, %s22
    $region7: #{dnn_forward.1} parent=1 // loop_footer_branch
      %21 = sbr.rel target = $region3
    $region8: #{dnn_forward.1} parent=1 // loop_exit
      _
    %4969 = vsyncpa [#allocation3], 1
    %s4970 = scalar_lea.sflag [#allocation3], 1
    %4971 = vsyncpa %s4970, 1
    %4972 = vsyncpa [#allocation4], 1
    %s4973 = scalar_lea.sflag [#allocation4], 1
    %4974 = vsyncpa %s4973, 1

</llo_original>
